<compile_context>
chip_gen: v5e
topology: v5e:2x2
jax: 0.10.0
libtpu: 0.0.40
codegen_flags: <defaults>
</compile_context>

<pallas_src>
import functools

import jax
import jax.numpy as jnp
from jax.experimental import pallas as pl
from jax.experimental.pallas import tpu as pltpu


# ----------------------------------------------------------------------------
# Helpers
# ----------------------------------------------------------------------------
def _round_up(x, m):
    return (x + m - 1) // m * m


def _vmem_limit(*block_bytes):
    """Scoped-VMEM limit derived from actual block sizes (double-buffered)."""
    total = 2 * int(sum(block_bytes)) + (4 << 20)
    return int(min(max(total, 32 << 20), 98 << 20))


def _choose_th(ho):
    """Output-rows-per-grid-step for the direct conv (must divide ho)."""
    for th in (8, 4, 2, 1):
        if ho % th == 0:
            return th
    return 1


def _m_tiling(m, bytes_per_row):
    """Pick an M tile: bounded block bytes, multiple of 8, >=2 tiles if m>=16."""
    mp8 = _round_up(m, 8)
    cap = max(8, ((4 << 20) // max(1, bytes_per_row)) // 8 * 8)
    tm = min(512, cap, mp8)
    if m >= 16:                       # >=2 parallel tiles for v7x megacore
        tm = min(tm, max(8, (mp8 // 2) // 8 * 8))
    mp = _round_up(m, tm)
    return mp, tm


# ----------------------------------------------------------------------------
# Pallas kernels
# ----------------------------------------------------------------------------
def _conv3x3_kernel(*refs, n_src, th, wo, relu):
    """Direct 3x3 conv over `th` output rows of one image.

    refs layout (inputs): for each source: [body(th,Wp,C), halo0(Wp,C),
    halo1(Wp,C)]; then one weight (3,3,C,Coutp) per source; then bias
    (1,Coutp) f32.  Output: (th, Wo, Coutp) bf16.  All taps are 2-D MXU dots
    with f32 accumulation; bias + optional ReLU fused in the epilogue.
    """
    out_ref = refs[-1]
    b_ref = refs[-2]
    w_refs = refs[3 * n_src:4 * n_src]
    srcs = [refs[3 * s:3 * s + 3] for s in range(n_src)]

    for r in range(th):
        acc = None
        for s in range(n_src):
            body, halo0, halo1 = srcs[s]
            w_ref = w_refs[s]
            cin = body.shape[-1]
            for dy in range(3):
                rr = r + dy
                for dx in range(3):
                    if rr < th:
                        lhs = body[rr, pl.ds(dx, wo), :]          # (Wo, C)
                    elif rr == th:
                        lhs = halo0[pl.ds(dx, wo), :]
                    else:
                        lhs = halo1[pl.ds(dx, wo), :]
                    w_tap = w_ref[dy, dx]                          # (C, Coutp)
                    if cin == 1:
                        # degenerate K=1 contraction -> cheap VPU broadcast
                        d = lhs.astype(jnp.float32) * w_tap.astype(jnp.float32)
                    else:
                        d = jnp.dot(lhs, w_tap,
                                    preferred_element_type=jnp.float32)
                    acc = d if acc is None else acc + d
        y = acc + b_ref[...]
        if relu:
            y = jnp.maximum(y, 0.0)
        out_ref[r] = y.astype(out_ref.dtype)


def _mm_bias_kernel(a_ref, w_ref, b_ref, o_ref):
    """(tm,K)@(K,Np) + bias, bf16 in / f32 accumulate / bf16 out.

    K is a single full-extent block (weight resident, fetched once); no
    accumulator scratch and no init/finalize phases are needed.
    """
    y = jnp.dot(a_ref[...], w_ref[...], preferred_element_type=jnp.float32)
    o_ref[...] = (y + b_ref[...]).astype(o_ref.dtype)


def _pool_pair_kernel(x_ref, o_ref, *, half):
    """(tr, 2*half) -> (tr, half): lane-dense max of the two column halves."""
    v = x_ref[...]
    o_ref[...] = jnp.maximum(v[:, :half], v[:, half:])


# ----------------------------------------------------------------------------
# Pallas wrappers
# ----------------------------------------------------------------------------
def conv3x3(sources, p, *, padding, relu):
    """Fused (multi-source) 3x3 conv + folded-BN bias + optional ReLU.

    `sources` is a list of NHWC bf16 tensors with identical spatial size; the
    skip-concat is realised by passing each source as its own operand with a
    block-structured weight, so no concatenated tensor is materialized.
    """
    n, h, w, _ = sources[0].shape
    ho = h + 2 * padding - 2
    wo = w + 2 * padding - 2
    th = _choose_th(ho)
    hb = ho // th
    coutp = p["coutp"]

    padded = []
    for s in sources:
        if padding:
            s = jnp.pad(s, ((0, 0), (padding, padding),
                            (padding, padding), (0, 0)))
        padded.append(s)

    in_specs, args, blk_bytes = [], [], []
    for s in padded:
        _, hp, wp, c = s.shape
        # body rows [i*th, i*th+th) plus two single-row halos at i*th+th, +th+1
        in_specs.append(
            pl.BlockSpec((None, th, wp, c), lambda nn, ii: (nn, ii, 0, 0)))
        in_specs.append(
            pl.BlockSpec((None, None, wp, c),
                         lambda nn, ii, _t=th: (nn, (ii + 1) * _t, 0, 0)))
        in_specs.append(
            pl.BlockSpec((None, None, wp, c),
                         lambda nn, ii, _t=th: (nn, (ii + 1) * _t + 1, 0, 0)))
        args += [s, s, s]
        blk_bytes += [th * wp * c * 2, wp * c * 2, wp * c * 2]
    for wm in p["w"]:
        # weight: one full-extent block, constant index map -> DMA'd once
        in_specs.append(pl.BlockSpec(wm.shape, lambda nn, ii: (0, 0, 0, 0)))
        args.append(wm)
        blk_bytes.append(wm.size * 2)
    in_specs.append(pl.BlockSpec((1, coutp), lambda nn, ii: (0, 0)))
    args.append(p["b"])
    blk_bytes += [coutp * 4, th * wo * coutp * 2]

    out = pl.pallas_call(
        functools.partial(_conv3x3_kernel, n_src=len(sources), th=th,
                          wo=wo, relu=relu),
        out_shape=jax.ShapeDtypeStruct((n, ho, wo, coutp), jnp.bfloat16),
        grid_spec=pltpu.PrefetchScalarGridSpec(
            num_scalar_prefetch=0,
            grid=(n, hb),
            in_specs=in_specs,
            out_specs=pl.BlockSpec((None, th, wo, coutp),
                                   lambda nn, ii: (nn, ii, 0, 0)),
        ),
        compiler_params=pltpu.CompilerParams(
            dimension_semantics=("parallel", "parallel"),
            vmem_limit_bytes=_vmem_limit(*blk_bytes),
        ),
    )(*args)
    return out


def matmul_bias(a, wmat, bias):
    """(M,K)@(K,Np) + bias[1,Np] -> (M,Np) bf16; single resident-K weight."""
    m, k = a.shape
    kw, np_ = wmat.shape
    assert kw == k, (kw, k)
    if a.dtype != jnp.bfloat16:
        a = a.astype(jnp.bfloat16)
    mp, tm = _m_tiling(m, 2 * (k + np_))
    if mp != m:
        a = jnp.pad(a, ((0, mp - m), (0, 0)))
    nm = mp // tm

    out = pl.pallas_call(
        _mm_bias_kernel,
        out_shape=jax.ShapeDtypeStruct((mp, np_), jnp.bfloat16),
        grid_spec=pltpu.PrefetchScalarGridSpec(
            num_scalar_prefetch=0,
            grid=(nm,),
            in_specs=[
                pl.BlockSpec((tm, k), lambda i: (i, 0)),
                pl.BlockSpec((k, np_), lambda i: (0, 0)),   # resident weight
                pl.BlockSpec((1, np_), lambda i: (0, 0)),
            ],
            out_specs=pl.BlockSpec((tm, np_), lambda i: (i, 0)),
        ),
        compiler_params=pltpu.CompilerParams(
            dimension_semantics=("parallel",),
            vmem_limit_bytes=_vmem_limit(tm * k * 2, k * np_ * 2,
                                         np_ * 4, tm * np_ * 2),
        ),
    )(a, wmat, bias)
    return out if mp == m else out[:m]


def _pairmax(x2d):
    """(R, 2L) -> (R, L): max of the two lane-dense column halves, row-tiled."""
    r, w2 = x2d.shape
    half = w2 // 2
    row_bytes = w2 * x2d.dtype.itemsize
    tr = max(8, min(1024, ((4 << 20) // max(1, row_bytes)) // 8 * 8))
    tr = min(tr, max(8, _round_up(r, 8)))
    rp = _round_up(r, tr)
    if rp != r:
        x2d = jnp.pad(x2d, ((0, rp - r), (0, 0)))

    out = pl.pallas_call(
        functools.partial(_pool_pair_kernel, half=half),
        out_shape=jax.ShapeDtypeStruct((rp, half), x2d.dtype),
        grid_spec=pltpu.PrefetchScalarGridSpec(
            num_scalar_prefetch=0,
            grid=(rp // tr,),
            in_specs=[pl.BlockSpec((tr, w2), lambda i: (i, 0))],
            out_specs=pl.BlockSpec((tr, half), lambda i: (i, 0)),
        ),
        compiler_params=pltpu.CompilerParams(
            dimension_semantics=("parallel",),
            vmem_limit_bytes=_vmem_limit(tr * w2 * 2, tr * half * 2),
        ),
    )(x2d)
    return out[:r] if rp != r else out


def maxpool2x2(x):
    """2x2 max pool, stride 2, as two lane-dense pair-max passes."""
    n, h, w, c = x.shape
    assert h % 2 == 0 and w % 2 == 0, (h, w)
    y = _pairmax(x.reshape(n * h * (w // 2), 2 * c))          # W pairs
    y = _pairmax(y.reshape(n * (h // 2), 2 * (w // 2) * c))   # H pairs
    return y.reshape(n, h // 2, w // 2, c)


def conv_transpose2x2(x, p):
    """ConvTranspose2d(k=2, s=2): one resident-weight matmul + pixel shuffle."""
    n, h, w, cin = x.shape
    coutp = p["coutp"]
    y = matmul_bias(x.reshape(n * h * w, cin), p["w"], p["b"])
    y = y.reshape(n, h, w, 2, 2, coutp)
    # TODO(synk): the pixel-shuffle interleave could be folded into the kernel
    # epilogue stores; kept as a single XLA relayout for now.
    y = jnp.transpose(y, (0, 1, 3, 2, 4, 5)).reshape(n, 2 * h, 2 * w, coutp)
    return y


def _resize_nearest(x, ref):
    """Nearest-resize x to ref's spatial size (assumed Cat() semantics)."""
    hs, ws = ref.shape[1], ref.shape[2]
    h, w = x.shape[1], x.shape[2]
    if (h, w) == (hs, ws):
        return x
    iy = (jnp.arange(hs) * h) // hs
    ix = (jnp.arange(ws) * w) // ws
    return x[:, iy][:, :, ix]


# ----------------------------------------------------------------------------
# Parameter construction (deterministic) — BN scale folded into the weights,
# lane padding (channels -> multiple of 128) and bf16 cast done ONCE at init.
# ----------------------------------------------------------------------------
def _pack_conv_params(key, in_segs, cout, eps=1e-5):
    """in_segs: per-source (real_channels, padded_channels) of the input."""
    cin = sum(r for r, _ in in_segs)
    k = jax.random.split(key, 6)
    w = 0.08 * jax.random.normal(k[0], (cout, cin, 3, 3), jnp.float32)
    b = 0.01 * jax.random.normal(k[1], (cout,), jnp.float32)
    gamma = 1.0 + 0.05 * jax.random.normal(k[2], (cout,), jnp.float32)
    beta = 0.05 * jax.random.normal(k[3], (cout,), jnp.float32)
    mean = 0.05 * jax.random.normal(k[4], (cout,), jnp.float32)
    var = 1.0 + 0.05 * jax.random.uniform(k[5], (cout,), jnp.float32)

    scale = gamma / jnp.sqrt(var + eps)
    bias = beta - mean * scale + b * scale
    w = w * scale[:, None, None, None]          # fold BN scale into weights

    coutp = _round_up(cout, 128)
    ws, off = [], 0
    for real, tot in in_segs:
        wpart = jnp.transpose(w[:, off:off + real], (2, 3, 1, 0))  # (3,3,r,co)
        wseg = jnp.zeros((3, 3, tot, coutp), jnp.float32)
        wseg = wseg.at[:, :, :real, :cout].set(wpart)
        ws.append(wseg.astype(jnp.bfloat16))
        off += real
    brow = jnp.zeros((1, coutp), jnp.float32).at[0, :cout].set(bias)
    return {"w": ws, "b": brow, "cout": cout, "coutp": coutp}


def _pack_upsample_params(key, cin, cout):
    k = jax.random.split(key, 2)
    w = 0.08 * jax.random.normal(k[0], (cin, cout, 2, 2), jnp.float32)
    b = 0.01 * jax.random.normal(k[1], (cout,), jnp.float32)
    coutp = _round_up(cout, 128)
    wm = jnp.zeros((cin, 2, 2, coutp), jnp.float32)
    wm = wm.at[:, :, :, :cout].set(jnp.transpose(w, (0, 2, 3, 1)))
    wm = wm.reshape(cin, 4 * coutp).astype(jnp.bfloat16)
    brow = jnp.zeros((2, 2, coutp), jnp.float32).at[:, :, :cout].set(b)
    brow = brow.reshape(1, 4 * coutp)
    return {"w": wm, "b": brow, "cout": cout, "coutp": coutp}


def init_unet_params(seed=0, num_cat=2):
    keys = jax.random.split(jax.random.PRNGKey(seed), 16)
    L1, L64 = (1, 1), (64, 128)          # (real, lane-padded) channel segments
    return {
        "down1": _pack_conv_params(keys[0], [L1], 64),
        "down2": _pack_conv_params(keys[1], [L64], 128),
        "down3": _pack_conv_params(keys[2], [(128, 128)], 256),
        "down4": _pack_conv_params(keys[3], [(256, 256)], 512),
        "mid_conv": _pack_conv_params(keys[4], [(512, 512)], 1024),
        "mid_up": _pack_upsample_params(keys[5], 1024, 512),
        "up4_conv": _pack_conv_params(keys[6], [(512, 512), (512, 512)], 512),
        "up4_up": _pack_upsample_params(keys[7], 512, 256),
        "up3_conv": _pack_conv_params(keys[8], [(256, 256), (256, 256)], 256),
        "up3_up": _pack_upsample_params(keys[9], 256, 128),
        "up2_conv": _pack_conv_params(keys[10], [(128, 128), (128, 128)], 128),
        "up2_up": _pack_upsample_params(keys[11], 128, 64),
        "up1": _pack_conv_params(keys[12], [L64, L64], 64),
        "out": _pack_conv_params(keys[13], [L64], num_cat),
    }


# ----------------------------------------------------------------------------
# Forward pass
# ----------------------------------------------------------------------------
def unet_forward(x_nchw, params):
    x = jnp.transpose(x_nchw, (0, 2, 3, 1)).astype(jnp.bfloat16)   # NHWC bf16

    def convlayer(srcs, p):
        return conv3x3(srcs, p, padding=1, relu=True)

    x1d = convlayer([x], params["down1"])
    x2d = maxpool2x2(convlayer([x1d], params["down2"]))
    x3d = maxpool2x2(convlayer([x2d], params["down3"]))
    x4d = maxpool2x2(convlayer([x3d], params["down4"]))

    xm = convlayer([x4d], params["mid_conv"])
    xm = conv_transpose2x2(xm, params["mid_up"])

    # Cat() is fused into the consuming conv (separate operands + block-
    # structured weights), so the concatenated tensor is never materialized.
    xu = convlayer([_resize_nearest(xm, x4d), x4d], params["up4_conv"])
    xu = conv_transpose2x2(xu, params["up4_up"])

    xu = convlayer([_resize_nearest(xu, x3d), x3d], params["up3_conv"])
    xu = conv_transpose2x2(xu, params["up3_up"])

    xu = convlayer([_resize_nearest(xu, x2d), x2d], params["up2_conv"])
    xu = conv_transpose2x2(xu, params["up2_up"])

    xu = convlayer([_resize_nearest(xu, x1d), x1d], params["up1"])

    # output head: Conv2d(64, num_cat, 3) (no padding) + BN + ReLU
    xo = conv3x3([xu], params["out"], padding=0, relu=True)
    xo = xo[..., :params["out"]["cout"]]       # drop lane padding only here

    # F.pad(x, [5, 5, 5, 5]) -> pad last two spatial dims by 5 (constant 0)
    xo = jnp.pad(xo, ((0, 0), (5, 5), (5, 5), (0, 0)))
    return jnp.transpose(xo, (0, 3, 1, 2)).astype(jnp.float32)     # NCHW f32


# ----------------------------------------------------------------------------
if __name__ == "__main__":
    key = jax.random.PRNGKey(0)
    x = jax.random.normal(key, (2, 1, 16, 16), jnp.float32)  # NCHW, 1 in-chan
    params = init_unet_params(seed=0, num_cat=2)

    out = unet_forward(x, params)
    out = jax.block_until_ready(out)

    assert out.shape == (2, 2, 24, 24), out.shape
    assert bool(jnp.all(jnp.isfinite(out)))
    print("KERNEL_OK")
</pallas_src>

<mosaic_0001>
module attributes {stable_mosaic.version = 11 : i64} {
  func.func @_conv3x3_kernel(%arg0: i32, %arg1: i32, %arg2: memref<1x8x18x1xbf16, #tpu.memory_space<vmem>>, %arg3: memref<1x1x18x1xbf16, #tpu.memory_space<vmem>>, %arg4: memref<1x1x18x1xbf16, #tpu.memory_space<vmem>>, %arg5: memref<3x3x1x128xbf16, #tpu.memory_space<vmem>>, %arg6: memref<1x128xf32, #tpu.memory_space<vmem>>, %arg7: memref<1x8x16x128xbf16, #tpu.memory_space<vmem>>) attributes {dimension_semantics = [#tpu.dimension_semantics<parallel>, #tpu.dimension_semantics<parallel>], iteration_bounds = array<i64: 2, 2>, scalar_prefetch = 0 : i64, scratch_operands = 0 : i64, tpu.core_type = #tpu.core_type<tc>, window_params = [{transform_indices = @transform_0, window_bounds = array<i64: 1, 8, 18, 1>}, {transform_indices = @transform_1, window_bounds = array<i64: 1, 1, 18, 1>}, {transform_indices = @transform_2, window_bounds = array<i64: 1, 1, 18, 1>}, {pipeline_mode = #tpu.pipeline_mode<synchronous>, transform_indices = @transform_3, window_bounds = array<i64: 3, 3, 1, 128>}, {pipeline_mode = #tpu.pipeline_mode<synchronous>, transform_indices = @transform_4, window_bounds = array<i64: 1, 128>}, {transform_indices = @transform_5, window_bounds = array<i64: 1, 8, 16, 128>}]} {
    %c0 = arith.constant 0 : index
    %c0_0 = arith.constant 0 : index
    %c0_1 = arith.constant 0 : index
    %c0_2 = arith.constant 0 : index
    %0 = vector.load %arg2[%c0, %c0_0, %c0_1, %c0_2] : memref<1x8x18x1xbf16, #tpu.memory_space<vmem>>, vector<1x1x16x1xbf16>
    %1 = vector.shape_cast %0 : vector<1x1x16x1xbf16> to vector<16x1xbf16>
    %c0_3 = arith.constant 0 : index
    %c0_4 = arith.constant 0 : index
    %c0_5 = arith.constant 0 : index
    %c0_6 = arith.constant 0 : index
    %2 = vector.load %arg5[%c0_3, %c0_4, %c0_5, %c0_6] : memref<3x3x1x128xbf16, #tpu.memory_space<vmem>>, vector<1x1x1x128xbf16>
    %3 = vector.shape_cast %2 : vector<1x1x1x128xbf16> to vector<1x128xbf16>
    %4 = arith.extf %1 : vector<16x1xbf16> to vector<16x1xf32>
    %5 = arith.extf %3 : vector<1x128xbf16> to vector<1x128xf32>
    %6 = vector.broadcast %4 : vector<16x1xf32> to vector<16x128xf32>
    %7 = vector.broadcast %5 : vector<1x128xf32> to vector<16x128xf32>
    %8 = arith.mulf %6, %7 : vector<16x128xf32>
    %c0_7 = arith.constant 0 : index
    %c0_8 = arith.constant 0 : index
    %c1 = arith.constant 1 : index
    %c0_9 = arith.constant 0 : index
    %9 = vector.load %arg2[%c0_7, %c0_8, %c1, %c0_9] : memref<1x8x18x1xbf16, #tpu.memory_space<vmem>>, vector<1x1x16x1xbf16>
    %10 = vector.shape_cast %9 : vector<1x1x16x1xbf16> to vector<16x1xbf16>
    %c0_10 = arith.constant 0 : index
    %c1_11 = arith.constant 1 : index
    %c0_12 = arith.constant 0 : index
    %c0_13 = arith.constant 0 : index
    %11 = vector.load %arg5[%c0_10, %c1_11, %c0_12, %c0_13] : memref<3x3x1x128xbf16, #tpu.memory_space<vmem>>, vector<1x1x1x128xbf16>
    %12 = vector.shape_cast %11 : vector<1x1x1x128xbf16> to vector<1x128xbf16>
    %13 = arith.extf %10 : vector<16x1xbf16> to vector<16x1xf32>
    %14 = arith.extf %12 : vector<1x128xbf16> to vector<1x128xf32>
    %15 = vector.broadcast %13 : vector<16x1xf32> to vector<16x128xf32>
    %16 = vector.broadcast %14 : vector<1x128xf32> to vector<16x128xf32>
    %17 = arith.mulf %15, %16 : vector<16x128xf32>
    %18 = arith.addf %8, %17 : vector<16x128xf32>
    %c0_14 = arith.constant 0 : index
    %c0_15 = arith.constant 0 : index
    %c2 = arith.constant 2 : index
    %c0_16 = arith.constant 0 : index
    %19 = vector.load %arg2[%c0_14, %c0_15, %c2, %c0_16] : memref<1x8x18x1xbf16, #tpu.memory_space<vmem>>, vector<1x1x16x1xbf16>
    %20 = vector.shape_cast %19 : vector<1x1x16x1xbf16> to vector<16x1xbf16>
    %c0_17 = arith.constant 0 : index
    %c2_18 = arith.constant 2 : index
    %c0_19 = arith.constant 0 : index
    %c0_20 = arith.constant 0 : index
    %21 = vector.load %arg5[%c0_17, %c2_18, %c0_19, %c0_20] : memref<3x3x1x128xbf16, #tpu.memory_space<vmem>>, vector<1x1x1x128xbf16>
    %22 = vector.shape_cast %21 : vector<1x1x1x128xbf16> to vector<1x128xbf16>
    %23 = arith.extf %20 : vector<16x1xbf16> to vector<16x1xf32>
    %24 = arith.extf %22 : vector<1x128xbf16> to vector<1x128xf32>
    %25 = vector.broadcast %23 : vector<16x1xf32> to vector<16x128xf32>
    %26 = vector.broadcast %24 : vector<1x128xf32> to vector<16x128xf32>
    %27 = arith.mulf %25, %26 : vector<16x128xf32>
    %28 = arith.addf %18, %27 : vector<16x128xf32>
    %c0_21 = arith.constant 0 : index
    %c1_22 = arith.constant 1 : index
    %c0_23 = arith.constant 0 : index
    %c0_24 = arith.constant 0 : index
    %29 = vector.load %arg2[%c0_21, %c1_22, %c0_23, %c0_24] : memref<1x8x18x1xbf16, #tpu.memory_space<vmem>>, vector<1x1x16x1xbf16>
    %30 = vector.shape_cast %29 : vector<1x1x16x1xbf16> to vector<16x1xbf16>
    %c1_25 = arith.constant 1 : index
    %c0_26 = arith.constant 0 : index
    %c0_27 = arith.constant 0 : index
    %c0_28 = arith.constant 0 : index
    %31 = vector.load %arg5[%c1_25, %c0_26, %c0_27, %c0_28] : memref<3x3x1x128xbf16, #tpu.memory_space<vmem>>, vector<1x1x1x128xbf16>
    %32 = vector.shape_cast %31 : vector<1x1x1x128xbf16> to vector<1x128xbf16>
    %33 = arith.extf %30 : vector<16x1xbf16> to vector<16x1xf32>
    %34 = arith.extf %32 : vector<1x128xbf16> to vector<1x128xf32>
    %35 = vector.broadcast %33 : vector<16x1xf32> to vector<16x128xf32>
    %36 = vector.broadcast %34 : vector<1x128xf32> to vector<16x128xf32>
    %37 = arith.mulf %35, %36 : vector<16x128xf32>
    %38 = arith.addf %28, %37 : vector<16x128xf32>
    %c0_29 = arith.constant 0 : index
    %c1_30 = arith.constant 1 : index
    %c1_31 = arith.constant 1 : index
    %c0_32 = arith.constant 0 : index
    %39 = vector.load %arg2[%c0_29, %c1_30, %c1_31, %c0_32] : memref<1x8x18x1xbf16, #tpu.memory_space<vmem>>, vector<1x1x16x1xbf16>
    %40 = vector.shape_cast %39 : vector<1x1x16x1xbf16> to vector<16x1xbf16>
    %c1_33 = arith.constant 1 : index
    %c1_34 = arith.constant 1 : index
    %c0_35 = arith.constant 0 : index
    %c0_36 = arith.constant 0 : index
    %41 = vector.load %arg5[%c1_33, %c1_34, %c0_35, %c0_36] : memref<3x3x1x128xbf16, #tpu.memory_space<vmem>>, vector<1x1x1x128xbf16>
    %42 = vector.shape_cast %41 : vector<1x1x1x128xbf16> to vector<1x128xbf16>
    %43 = arith.extf %40 : vector<16x1xbf16> to vector<16x1xf32>
    %44 = arith.extf %42 : vector<1x128xbf16> to vector<1x128xf32>
    %45 = vector.broadcast %43 : vector<16x1xf32> to vector<16x128xf32>
    %46 = vector.broadcast %44 : vector<1x128xf32> to vector<16x128xf32>
    %47 = arith.mulf %45, %46 : vector<16x128xf32>
    %48 = arith.addf %38, %47 : vector<16x128xf32>
    %c0_37 = arith.constant 0 : index
    %c1_38 = arith.constant 1 : index
    %c2_39 = arith.constant 2 : index
    %c0_40 = arith.constant 0 : index
    %49 = vector.load %arg2[%c0_37, %c1_38, %c2_39, %c0_40] : memref<1x8x18x1xbf16, #tpu.memory_space<vmem>>, vector<1x1x16x1xbf16>
    %50 = vector.shape_cast %49 : vector<1x1x16x1xbf16> to vector<16x1xbf16>
    %c1_41 = arith.constant 1 : index
    %c2_42 = arith.constant 2 : index
    %c0_43 = arith.constant 0 : index
    %c0_44 = arith.constant 0 : index
    %51 = vector.load %arg5[%c1_41, %c2_42, %c0_43, %c0_44] : memref<3x3x1x128xbf16, #tpu.memory_space<vmem>>, vector<1x1x1x128xbf16>
    %52 = vector.shape_cast %51 : vector<1x1x1x128xbf16> to vector<1x128xbf16>
    %53 = arith.extf %50 : vector<16x1xbf16> to vector<16x1xf32>
    %54 = arith.extf %52 : vector<1x128xbf16> to vector<1x128xf32>
    %55 = vector.broadcast %53 : vector<16x1xf32> to vector<16x128xf32>
    %56 = vector.broadcast %54 : vector<1x128xf32> to vector<16x128xf32>
    %57 = arith.mulf %55, %56 : vector<16x128xf32>
    %58 = arith.addf %48, %57 : vector<16x128xf32>
    %c0_45 = arith.constant 0 : index
    %c2_46 = arith.constant 2 : index
    %c0_47 = arith.constant 0 : index
    %c0_48 = arith.constant 0 : index
    %59 = vector.load %arg2[%c0_45, %c2_46, %c0_47, %c0_48] : memref<1x8x18x1xbf16, #tpu.memory_space<vmem>>, vector<1x1x16x1xbf16>
    %60 = vector.shape_cast %59 : vector<1x1x16x1xbf16> to vector<16x1xbf16>
    %c2_49 = arith.constant 2 : index
    %c0_50 = arith.constant 0 : index
    %c0_51 = arith.constant 0 : index
    %c0_52 = arith.constant 0 : index
    %61 = vector.load %arg5[%c2_49, %c0_50, %c0_51, %c0_52] : memref<3x3x1x128xbf16, #tpu.memory_space<vmem>>, vector<1x1x1x128xbf16>
    %62 = vector.shape_cast %61 : vector<1x1x1x128xbf16> to vector<1x128xbf16>
    %63 = arith.extf %60 : vector<16x1xbf16> to vector<16x1xf32>
    %64 = arith.extf %62 : vector<1x128xbf16> to vector<1x128xf32>
    %65 = vector.broadcast %63 : vector<16x1xf32> to vector<16x128xf32>
    %66 = vector.broadcast %64 : vector<1x128xf32> to vector<16x128xf32>
    %67 = arith.mulf %65, %66 : vector<16x128xf32>
    %68 = arith.addf %58, %67 : vector<16x128xf32>
    %c0_53 = arith.constant 0 : index
    %c2_54 = arith.constant 2 : index
    %c1_55 = arith.constant 1 : index
    %c0_56 = arith.constant 0 : index
    %69 = vector.load %arg2[%c0_53, %c2_54, %c1_55, %c0_56] : memref<1x8x18x1xbf16, #tpu.memory_space<vmem>>, vector<1x1x16x1xbf16>
    %70 = vector.shape_cast %69 : vector<1x1x16x1xbf16> to vector<16x1xbf16>
    %c2_57 = arith.constant 2 : index
    %c1_58 = arith.constant 1 : index
    %c0_59 = arith.constant 0 : index
    %c0_60 = arith.constant 0 : index
    %71 = vector.load %arg5[%c2_57, %c1_58, %c0_59, %c0_60] : memref<3x3x1x128xbf16, #tpu.memory_space<vmem>>, vector<1x1x1x128xbf16>
    %72 = vector.shape_cast %71 : vector<1x1x1x128xbf16> to vector<1x128xbf16>
    %73 = arith.extf %70 : vector<16x1xbf16> to vector<16x1xf32>
    %74 = arith.extf %72 : vector<1x128xbf16> to vector<1x128xf32>
    %75 = vector.broadcast %73 : vector<16x1xf32> to vector<16x128xf32>
    %76 = vector.broadcast %74 : vector<1x128xf32> to vector<16x128xf32>
    %77 = arith.mulf %75, %76 : vector<16x128xf32>
    %78 = arith.addf %68, %77 : vector<16x128xf32>
    %c0_61 = arith.constant 0 : index
    %c2_62 = arith.constant 2 : index
    %c2_63 = arith.constant 2 : index
    %c0_64 = arith.constant 0 : index
    %79 = vector.load %arg2[%c0_61, %c2_62, %c2_63, %c0_64] : memref<1x8x18x1xbf16, #tpu.memory_space<vmem>>, vector<1x1x16x1xbf16>
    %80 = vector.shape_cast %79 : vector<1x1x16x1xbf16> to vector<16x1xbf16>
    %c2_65 = arith.constant 2 : index
    %c2_66 = arith.constant 2 : index
    %c0_67 = arith.constant 0 : index
    %c0_68 = arith.constant 0 : index
    %81 = vector.load %arg5[%c2_65, %c2_66, %c0_67, %c0_68] : memref<3x3x1x128xbf16, #tpu.memory_space<vmem>>, vector<1x1x1x128xbf16>
    %82 = vector.shape_cast %81 : vector<1x1x1x128xbf16> to vector<1x128xbf16>
    %83 = arith.extf %80 : vector<16x1xbf16> to vector<16x1xf32>
    %84 = arith.extf %82 : vector<1x128xbf16> to vector<1x128xf32>
    %85 = vector.broadcast %83 : vector<16x1xf32> to vector<16x128xf32>
    %86 = vector.broadcast %84 : vector<1x128xf32> to vector<16x128xf32>
    %87 = arith.mulf %85, %86 : vector<16x128xf32>
    %88 = arith.addf %78, %87 : vector<16x128xf32>
    %c0_69 = arith.constant 0 : index
    %c0_70 = arith.constant 0 : index
    %89 = vector.load %arg6[%c0_69, %c0_70] : memref<1x128xf32, #tpu.memory_space<vmem>>, vector<1x128xf32>
    %90 = vector.broadcast %89 : vector<1x128xf32> to vector<16x128xf32>
    %91 = arith.addf %88, %90 : vector<16x128xf32>
    %cst = arith.constant 0.000000e+00 : f32
    %92 = vector.broadcast %cst : f32 to vector<16x128xf32>
    %93 = arith.maximumf %91, %92 : vector<16x128xf32>
    %94 = arith.truncf %93 : vector<16x128xf32> to vector<16x128xbf16>
    %c0_71 = arith.constant 0 : index
    %c0_72 = arith.constant 0 : index
    %c0_73 = arith.constant 0 : index
    %c0_74 = arith.constant 0 : index
    %95 = vector.load %arg7[%c0_71, %c0_72, %c0_73, %c0_74] : memref<1x8x16x128xbf16, #tpu.memory_space<vmem>>, vector<1x1x16x128xbf16>
    %96 = vector.shape_cast %95 : vector<1x1x16x128xbf16> to vector<16x128xbf16>
    %97 = vector.shape_cast %94 : vector<16x128xbf16> to vector<1x1x16x128xbf16>
    tpu.vector_store %arg7[%c0_71, %c0_72, %c0_73, %c0_74], %97 {strides = array<i32>} : memref<1x8x16x128xbf16, #tpu.memory_space<vmem>>, vector<1x1x16x128xbf16>,
    %c0_75 = arith.constant 0 : index
    %c1_76 = arith.constant 1 : index
    %c0_77 = arith.constant 0 : index
    %c0_78 = arith.constant 0 : index
    %98 = vector.load %arg2[%c0_75, %c1_76, %c0_77, %c0_78] : memref<1x8x18x1xbf16, #tpu.memory_space<vmem>>, vector<1x1x16x1xbf16>
    %99 = vector.shape_cast %98 : vector<1x1x16x1xbf16> to vector<16x1xbf16>
    %c0_79 = arith.constant 0 : index
    %c0_80 = arith.constant 0 : index
    %c0_81 = arith.constant 0 : index
    %c0_82 = arith.constant 0 : index
    %100 = vector.load %arg5[%c0_79, %c0_80, %c0_81, %c0_82] : memref<3x3x1x128xbf16, #tpu.memory_space<vmem>>, vector<1x1x1x128xbf16>
    %101 = vector.shape_cast %100 : vector<1x1x1x128xbf16> to vector<1x128xbf16>
    %102 = arith.extf %99 : vector<16x1xbf16> to vector<16x1xf32>
    %103 = arith.extf %101 : vector<1x128xbf16> to vector<1x128xf32>
    %104 = vector.broadcast %102 : vector<16x1xf32> to vector<16x128xf32>
    %105 = vector.broadcast %103 : vector<1x128xf32> to vector<16x128xf32>
    %106 = arith.mulf %104, %105 : vector<16x128xf32>
    %c0_83 = arith.constant 0 : index
    %c1_84 = arith.constant 1 : index
    %c1_85 = arith.constant 1 : index
    %c0_86 = arith.constant 0 : index
    %107 = vector.load %arg2[%c0_83, %c1_84, %c1_85, %c0_86] : memref<1x8x18x1xbf16, #tpu.memory_space<vmem>>, vector<1x1x16x1xbf16>
    %108 = vector.shape_cast %107 : vector<1x1x16x1xbf16> to vector<16x1xbf16>
    %c0_87 = arith.constant 0 : index
    %c1_88 = arith.constant 1 : index
    %c0_89 = arith.constant 0 : index
    %c0_90 = arith.constant 0 : index
    %109 = vector.load %arg5[%c0_87, %c1_88, %c0_89, %c0_90] : memref<3x3x1x128xbf16, #tpu.memory_space<vmem>>, vector<1x1x1x128xbf16>
    %110 = vector.shape_cast %109 : vector<1x1x1x128xbf16> to vector<1x128xbf16>
    %111 = arith.extf %108 : vector<16x1xbf16> to vector<16x1xf32>
    %112 = arith.extf %110 : vector<1x128xbf16> to vector<1x128xf32>
    %113 = vector.broadcast %111 : vector<16x1xf32> to vector<16x128xf32>
    %114 = vector.broadcast %112 : vector<1x128xf32> to vector<16x128xf32>
    %115 = arith.mulf %113, %114 : vector<16x128xf32>
    %116 = arith.addf %106, %115 : vector<16x128xf32>
    %c0_91 = arith.constant 0 : index
    %c1_92 = arith.constant 1 : index
    %c2_93 = arith.constant 2 : index
    %c0_94 = arith.constant 0 : index
    %117 = vector.load %arg2[%c0_91, %c1_92, %c2_93, %c0_94] : memref<1x8x18x1xbf16, #tpu.memory_space<vmem>>, vector<1x1x16x1xbf16>
    %118 = vector.shape_cast %117 : vector<1x1x16x1xbf16> to vector<16x1xbf16>
    %c0_95 = arith.constant 0 : index
    %c2_96 = arith.constant 2 : index
    %c0_97 = arith.constant 0 : index
    %c0_98 = arith.constant 0 : index
    %119 = vector.load %arg5[%c0_95, %c2_96, %c0_97, %c0_98] : memref<3x3x1x128xbf16, #tpu.memory_space<vmem>>, vector<1x1x1x128xbf16>
    %120 = vector.shape_cast %119 : vector<1x1x1x128xbf16> to vector<1x128xbf16>
    %121 = arith.extf %118 : vector<16x1xbf16> to vector<16x1xf32>
    %122 = arith.extf %120 : vector<1x128xbf16> to vector<1x128xf32>
    %123 = vector.broadcast %121 : vector<16x1xf32> to vector<16x128xf32>
    %124 = vector.broadcast %122 : vector<1x128xf32> to vector<16x128xf32>
    %125 = arith.mulf %123, %124 : vector<16x128xf32>
    %126 = arith.addf %116, %125 : vector<16x128xf32>
    %c0_99 = arith.constant 0 : index
    %c2_100 = arith.constant 2 : index
    %c0_101 = arith.constant 0 : index
    %c0_102 = arith.constant 0 : index
    %127 = vector.load %arg2[%c0_99, %c2_100, %c0_101, %c0_102] : memref<1x8x18x1xbf16, #tpu.memory_space<vmem>>, vector<1x1x16x1xbf16>
    %128 = vector.shape_cast %127 : vector<1x1x16x1xbf16> to vector<16x1xbf16>
    %c1_103 = arith.constant 1 : index
    %c0_104 = arith.constant 0 : index
    %c0_105 = arith.constant 0 : index
    %c0_106 = arith.constant 0 : index
    %129 = vector.load %arg5[%c1_103, %c0_104, %c0_105, %c0_106] : memref<3x3x1x128xbf16, #tpu.memory_space<vmem>>, vector<1x1x1x128xbf16>
    %130 = vector.shape_cast %129 : vector<1x1x1x128xbf16> to vector<1x128xbf16>
    %131 = arith.extf %128 : vector<16x1xbf16> to vector<16x1xf32>
    %132 = arith.extf %130 : vector<1x128xbf16> to vector<1x128xf32>
    %133 = vector.broadcast %131 : vector<16x1xf32> to vector<16x128xf32>
    %134 = vector.broadcast %132 : vector<1x128xf32> to vector<16x128xf32>
    %135 = arith.mulf %133, %134 : vector<16x128xf32>
    %136 = arith.addf %126, %135 : vector<16x128xf32>
    %c0_107 = arith.constant 0 : index
    %c2_108 = arith.constant 2 : index
    %c1_109 = arith.constant 1 : index
    %c0_110 = arith.constant 0 : index
    %137 = vector.load %arg2[%c0_107, %c2_108, %c1_109, %c0_110] : memref<1x8x18x1xbf16, #tpu.memory_space<vmem>>, vector<1x1x16x1xbf16>
    %138 = vector.shape_cast %137 : vector<1x1x16x1xbf16> to vector<16x1xbf16>
    %c1_111 = arith.constant 1 : index
    %c1_112 = arith.constant 1 : index
    %c0_113 = arith.constant 0 : index
    %c0_114 = arith.constant 0 : index
    %139 = vector.load %arg5[%c1_111, %c1_112, %c0_113, %c0_114] : memref<3x3x1x128xbf16, #tpu.memory_space<vmem>>, vector<1x1x1x128xbf16>
    %140 = vector.shape_cast %139 : vector<1x1x1x128xbf16> to vector<1x128xbf16>
    %141 = arith.extf %138 : vector<16x1xbf16> to vector<16x1xf32>
    %142 = arith.extf %140 : vector<1x128xbf16> to vector<1x128xf32>
    %143 = vector.broadcast %141 : vector<16x1xf32> to vector<16x128xf32>
    %144 = vector.broadcast %142 : vector<1x128xf32> to vector<16x128xf32>
    %145 = arith.mulf %143, %144 : vector<16x128xf32>
    %146 = arith.addf %136, %145 : vector<16x128xf32>
    %c0_115 = arith.constant 0 : index
    %c2_116 = arith.constant 2 : index
    %c2_117 = arith.constant 2 : index
    %c0_118 = arith.constant 0 : index
    %147 = vector.load %arg2[%c0_115, %c2_116, %c2_117, %c0_118] : memref<1x8x18x1xbf16, #tpu.memory_space<vmem>>, vector<1x1x16x1xbf16>
    %148 = vector.shape_cast %147 : vector<1x1x16x1xbf16> to vector<16x1xbf16>
    %c1_119 = arith.constant 1 : index
    %c2_120 = arith.constant 2 : index
    %c0_121 = arith.constant 0 : index
    %c0_122 = arith.constant 0 : index
    %149 = vector.load %arg5[%c1_119, %c2_120, %c0_121, %c0_122] : memref<3x3x1x128xbf16, #tpu.memory_space<vmem>>, vector<1x1x1x128xbf16>
    %150 = vector.shape_cast %149 : vector<1x1x1x128xbf16> to vector<1x128xbf16>
    %151 = arith.extf %148 : vector<16x1xbf16> to vector<16x1xf32>
    %152 = arith.extf %150 : vector<1x128xbf16> to vector<1x128xf32>
    %153 = vector.broadcast %151 : vector<16x1xf32> to vector<16x128xf32>
    %154 = vector.broadcast %152 : vector<1x128xf32> to vector<16x128xf32>
    %155 = arith.mulf %153, %154 : vector<16x128xf32>
    %156 = arith.addf %146, %155 : vector<16x128xf32>
    %c0_123 = arith.constant 0 : index
    %c3 = arith.constant 3 : index
    %c0_124 = arith.constant 0 : index
    %c0_125 = arith.constant 0 : index
    %157 = vector.load %arg2[%c0_123, %c3, %c0_124, %c0_125] : memref<1x8x18x1xbf16, #tpu.memory_space<vmem>>, vector<1x1x16x1xbf16>
    %158 = vector.shape_cast %157 : vector<1x1x16x1xbf16> to vector<16x1xbf16>
    %c2_126 = arith.constant 2 : index
    %c0_127 = arith.constant 0 : index
    %c0_128 = arith.constant 0 : index
    %c0_129 = arith.constant 0 : index
    %159 = vector.load %arg5[%c2_126, %c0_127, %c0_128, %c0_129] : memref<3x3x1x128xbf16, #tpu.memory_space<vmem>>, vector<1x1x1x128xbf16>
    %160 = vector.shape_cast %159 : vector<1x1x1x128xbf16> to vector<1x128xbf16>
    %161 = arith.extf %158 : vector<16x1xbf16> to vector<16x1xf32>
    %162 = arith.extf %160 : vector<1x128xbf16> to vector<1x128xf32>
    %163 = vector.broadcast %161 : vector<16x1xf32> to vector<16x128xf32>
    %164 = vector.broadcast %162 : vector<1x128xf32> to vector<16x128xf32>
    %165 = arith.mulf %163, %164 : vector<16x128xf32>
    %166 = arith.addf %156, %165 : vector<16x128xf32>
    %c0_130 = arith.constant 0 : index
    %c3_131 = arith.constant 3 : index
    %c1_132 = arith.constant 1 : index
    %c0_133 = arith.constant 0 : index
    %167 = vector.load %arg2[%c0_130, %c3_131, %c1_132, %c0_133] : memref<1x8x18x1xbf16, #tpu.memory_space<vmem>>, vector<1x1x16x1xbf16>
    %168 = vector.shape_cast %167 : vector<1x1x16x1xbf16> to vector<16x1xbf16>
    %c2_134 = arith.constant 2 : index
    %c1_135 = arith.constant 1 : index
    %c0_136 = arith.constant 0 : index
    %c0_137 = arith.constant 0 : index
    %169 = vector.load %arg5[%c2_134, %c1_135, %c0_136, %c0_137] : memref<3x3x1x128xbf16, #tpu.memory_space<vmem>>, vector<1x1x1x128xbf16>
    %170 = vector.shape_cast %169 : vector<1x1x1x128xbf16> to vector<1x128xbf16>
    %171 = arith.extf %168 : vector<16x1xbf16> to vector<16x1xf32>
    %172 = arith.extf %170 : vector<1x128xbf16> to vector<1x128xf32>
    %173 = vector.broadcast %171 : vector<16x1xf32> to vector<16x128xf32>
    %174 = vector.broadcast %172 : vector<1x128xf32> to vector<16x128xf32>
    %175 = arith.mulf %173, %174 : vector<16x128xf32>
    %176 = arith.addf %166, %175 : vector<16x128xf32>
    %c0_138 = arith.constant 0 : index
    %c3_139 = arith.constant 3 : index
    %c2_140 = arith.constant 2 : index
    %c0_141 = arith.constant 0 : index
    %177 = vector.load %arg2[%c0_138, %c3_139, %c2_140, %c0_141] : memref<1x8x18x1xbf16, #tpu.memory_space<vmem>>, vector<1x1x16x1xbf16>
    %178 = vector.shape_cast %177 : vector<1x1x16x1xbf16> to vector<16x1xbf16>
    %c2_142 = arith.constant 2 : index
    %c2_143 = arith.constant 2 : index
    %c0_144 = arith.constant 0 : index
    %c0_145 = arith.constant 0 : index
    %179 = vector.load %arg5[%c2_142, %c2_143, %c0_144, %c0_145] : memref<3x3x1x128xbf16, #tpu.memory_space<vmem>>, vector<1x1x1x128xbf16>
    %180 = vector.shape_cast %179 : vector<1x1x1x128xbf16> to vector<1x128xbf16>
    %181 = arith.extf %178 : vector<16x1xbf16> to vector<16x1xf32>
    %182 = arith.extf %180 : vector<1x128xbf16> to vector<1x128xf32>
    %183 = vector.broadcast %181 : vector<16x1xf32> to vector<16x128xf32>
    %184 = vector.broadcast %182 : vector<1x128xf32> to vector<16x128xf32>
    %185 = arith.mulf %183, %184 : vector<16x128xf32>
    %186 = arith.addf %176, %185 : vector<16x128xf32>
    %c0_146 = arith.constant 0 : index
    %c0_147 = arith.constant 0 : index
    %187 = vector.load %arg6[%c0_146, %c0_147] : memref<1x128xf32, #tpu.memory_space<vmem>>, vector<1x128xf32>
    %188 = vector.broadcast %187 : vector<1x128xf32> to vector<16x128xf32>
    %189 = arith.addf %186, %188 : vector<16x128xf32>
    %cst_148 = arith.constant 0.000000e+00 : f32
    %190 = vector.broadcast %cst_148 : f32 to vector<16x128xf32>
    %191 = arith.maximumf %189, %190 : vector<16x128xf32>
    %192 = arith.truncf %191 : vector<16x128xf32> to vector<16x128xbf16>
    %c0_149 = arith.constant 0 : index
    %c1_150 = arith.constant 1 : index
    %c0_151 = arith.constant 0 : index
    %c0_152 = arith.constant 0 : index
    %193 = vector.load %arg7[%c0_149, %c1_150, %c0_151, %c0_152] : memref<1x8x16x128xbf16, #tpu.memory_space<vmem>>, vector<1x1x16x128xbf16>
    %194 = vector.shape_cast %193 : vector<1x1x16x128xbf16> to vector<16x128xbf16>
    %195 = vector.shape_cast %192 : vector<16x128xbf16> to vector<1x1x16x128xbf16>
    tpu.vector_store %arg7[%c0_149, %c1_150, %c0_151, %c0_152], %195 {strides = array<i32>} : memref<1x8x16x128xbf16, #tpu.memory_space<vmem>>, vector<1x1x16x128xbf16>,
    %c0_153 = arith.constant 0 : index
    %c2_154 = arith.constant 2 : index
    %c0_155 = arith.constant 0 : index
    %c0_156 = arith.constant 0 : index
    %196 = vector.load %arg2[%c0_153, %c2_154, %c0_155, %c0_156] : memref<1x8x18x1xbf16, #tpu.memory_space<vmem>>, vector<1x1x16x1xbf16>
    %197 = vector.shape_cast %196 : vector<1x1x16x1xbf16> to vector<16x1xbf16>
    %c0_157 = arith.constant 0 : index
    %c0_158 = arith.constant 0 : index
    %c0_159 = arith.constant 0 : index
    %c0_160 = arith.constant 0 : index
    %198 = vector.load %arg5[%c0_157, %c0_158, %c0_159, %c0_160] : memref<3x3x1x128xbf16, #tpu.memory_space<vmem>>, vector<1x1x1x128xbf16>
    %199 = vector.shape_cast %198 : vector<1x1x1x128xbf16> to vector<1x128xbf16>
    %200 = arith.extf %197 : vector<16x1xbf16> to vector<16x1xf32>
    %201 = arith.extf %199 : vector<1x128xbf16> to vector<1x128xf32>
    %202 = vector.broadcast %200 : vector<16x1xf32> to vector<16x128xf32>
    %203 = vector.broadcast %201 : vector<1x128xf32> to vector<16x128xf32>
    %204 = arith.mulf %202, %203 : vector<16x128xf32>
    %c0_161 = arith.constant 0 : index
    %c2_162 = arith.constant 2 : index
    %c1_163 = arith.constant 1 : index
    %c0_164 = arith.constant 0 : index
    %205 = vector.load %arg2[%c0_161, %c2_162, %c1_163, %c0_164] : memref<1x8x18x1xbf16, #tpu.memory_space<vmem>>, vector<1x1x16x1xbf16>
    %206 = vector.shape_cast %205 : vector<1x1x16x1xbf16> to vector<16x1xbf16>
    %c0_165 = arith.constant 0 : index
    %c1_166 = arith.constant 1 : index
    %c0_167 = arith.constant 0 : index
    %c0_168 = arith.constant 0 : index
    %207 = vector.load %arg5[%c0_165, %c1_166, %c0_167, %c0_168] : memref<3x3x1x128xbf16, #tpu.memory_space<vmem>>, vector<1x1x1x128xbf16>
    %208 = vector.shape_cast %207 : vector<1x1x1x128xbf16> to vector<1x128xbf16>
    %209 = arith.extf %206 : vector<16x1xbf16> to vector<16x1xf32>
    %210 = arith.extf %208 : vector<1x128xbf16> to vector<1x128xf32>
    %211 = vector.broadcast %209 : vector<16x1xf32> to vector<16x128xf32>
    %212 = vector.broadcast %210 : vector<1x128xf32> to vector<16x128xf32>
    %213 = arith.mulf %211, %212 : vector<16x128xf32>
    %214 = arith.addf %204, %213 : vector<16x128xf32>
    %c0_169 = arith.constant 0 : index
    %c2_170 = arith.constant 2 : index
    %c2_171 = arith.constant 2 : index
    %c0_172 = arith.constant 0 : index
    %215 = vector.load %arg2[%c0_169, %c2_170, %c2_171, %c0_172] : memref<1x8x18x1xbf16, #tpu.memory_space<vmem>>, vector<1x1x16x1xbf16>
    %216 = vector.shape_cast %215 : vector<1x1x16x1xbf16> to vector<16x1xbf16>
    %c0_173 = arith.constant 0 : index
    %c2_174 = arith.constant 2 : index
    %c0_175 = arith.constant 0 : index
    %c0_176 = arith.constant 0 : index
    %217 = vector.load %arg5[%c0_173, %c2_174, %c0_175, %c0_176] : memref<3x3x1x128xbf16, #tpu.memory_space<vmem>>, vector<1x1x1x128xbf16>
    %218 = vector.shape_cast %217 : vector<1x1x1x128xbf16> to vector<1x128xbf16>
    %219 = arith.extf %216 : vector<16x1xbf16> to vector<16x1xf32>
    %220 = arith.extf %218 : vector<1x128xbf16> to vector<1x128xf32>
    %221 = vector.broadcast %219 : vector<16x1xf32> to vector<16x128xf32>
    %222 = vector.broadcast %220 : vector<1x128xf32> to vector<16x128xf32>
    %223 = arith.mulf %221, %222 : vector<16x128xf32>
    %224 = arith.addf %214, %223 : vector<16x128xf32>
    %c0_177 = arith.constant 0 : index
    %c3_178 = arith.constant 3 : index
    %c0_179 = arith.constant 0 : index
    %c0_180 = arith.constant 0 : index
    %225 = vector.load %arg2[%c0_177, %c3_178, %c0_179, %c0_180] : memref<1x8x18x1xbf16, #tpu.memory_space<vmem>>, vector<1x1x16x1xbf16>
    %226 = vector.shape_cast %225 : vector<1x1x16x1xbf16> to vector<16x1xbf16>
    %c1_181 = arith.constant 1 : index
    %c0_182 = arith.constant 0 : index
    %c0_183 = arith.constant 0 : index
    %c0_184 = arith.constant 0 : index
    %227 = vector.load %arg5[%c1_181, %c0_182, %c0_183, %c0_184] : memref<3x3x1x128xbf16, #tpu.memory_space<vmem>>, vector<1x1x1x128xbf16>
    %228 = vector.shape_cast %227 : vector<1x1x1x128xbf16> to vector<1x128xbf16>
    %229 = arith.extf %226 : vector<16x1xbf16> to vector<16x1xf32>
    %230 = arith.extf %228 : vector<1x128xbf16> to vector<1x128xf32>
    %231 = vector.broadcast %229 : vector<16x1xf32> to vector<16x128xf32>
    %232 = vector.broadcast %230 : vector<1x128xf32> to vector<16x128xf32>
    %233 = arith.mulf %231, %232 : vector<16x128xf32>
    %234 = arith.addf %224, %233 : vector<16x128xf32>
    %c0_185 = arith.constant 0 : index
    %c3_186 = arith.constant 3 : index
    %c1_187 = arith.constant 1 : index
    %c0_188 = arith.constant 0 : index
    %235 = vector.load %arg2[%c0_185, %c3_186, %c1_187, %c0_188] : memref<1x8x18x1xbf16, #tpu.memory_space<vmem>>, vector<1x1x16x1xbf16>
    %236 = vector.shape_cast %235 : vector<1x1x16x1xbf16> to vector<16x1xbf16>
    %c1_189 = arith.constant 1 : index
    %c1_190 = arith.constant 1 : index
    %c0_191 = arith.constant 0 : index
    %c0_192 = arith.constant 0 : index
    %237 = vector.load %arg5[%c1_189, %c1_190, %c0_191, %c0_192] : memref<3x3x1x128xbf16, #tpu.memory_space<vmem>>, vector<1x1x1x128xbf16>
    %238 = vector.shape_cast %237 : vector<1x1x1x128xbf16> to vector<1x128xbf16>
    %239 = arith.extf %236 : vector<16x1xbf16> to vector<16x1xf32>
    %240 = arith.extf %238 : vector<1x128xbf16> to vector<1x128xf32>
    %241 = vector.broadcast %239 : vector<16x1xf32> to vector<16x128xf32>
    %242 = vector.broadcast %240 : vector<1x128xf32> to vector<16x128xf32>
    %243 = arith.mulf %241, %242 : vector<16x128xf32>
    %244 = arith.addf %234, %243 : vector<16x128xf32>
    %c0_193 = arith.constant 0 : index
    %c3_194 = arith.constant 3 : index
    %c2_195 = arith.constant 2 : index
    %c0_196 = arith.constant 0 : index
    %245 = vector.load %arg2[%c0_193, %c3_194, %c2_195, %c0_196] : memref<1x8x18x1xbf16, #tpu.memory_space<vmem>>, vector<1x1x16x1xbf16>
    %246 = vector.shape_cast %245 : vector<1x1x16x1xbf16> to vector<16x1xbf16>
    %c1_197 = arith.constant 1 : index
    %c2_198 = arith.constant 2 : index
    %c0_199 = arith.constant 0 : index
    %c0_200 = arith.constant 0 : index
    %247 = vector.load %arg5[%c1_197, %c2_198, %c0_199, %c0_200] : memref<3x3x1x128xbf16, #tpu.memory_space<vmem>>, vector<1x1x1x128xbf16>
    %248 = vector.shape_cast %247 : vector<1x1x1x128xbf16> to vector<1x128xbf16>
    %249 = arith.extf %246 : vector<16x1xbf16> to vector<16x1xf32>
    %250 = arith.extf %248 : vector<1x128xbf16> to vector<1x128xf32>
    %251 = vector.broadcast %249 : vector<16x1xf32> to vector<16x128xf32>
    %252 = vector.broadcast %250 : vector<1x128xf32> to vector<16x128xf32>
    %253 = arith.mulf %251, %252 : vector<16x128xf32>
    %254 = arith.addf %244, %253 : vector<16x128xf32>
    %c0_201 = arith.constant 0 : index
    %c4 = arith.constant 4 : index
    %c0_202 = arith.constant 0 : index
    %c0_203 = arith.constant 0 : index
    %255 = vector.load %arg2[%c0_201, %c4, %c0_202, %c0_203] : memref<1x8x18x1xbf16, #tpu.memory_space<vmem>>, vector<1x1x16x1xbf16>
    %256 = vector.shape_cast %255 : vector<1x1x16x1xbf16> to vector<16x1xbf16>
    %c2_204 = arith.constant 2 : index
    %c0_205 = arith.constant 0 : index
    %c0_206 = arith.constant 0 : index
    %c0_207 = arith.constant 0 : index
    %257 = vector.load %arg5[%c2_204, %c0_205, %c0_206, %c0_207] : memref<3x3x1x128xbf16, #tpu.memory_space<vmem>>, vector<1x1x1x128xbf16>
    %258 = vector.shape_cast %257 : vector<1x1x1x128xbf16> to vector<1x128xbf16>
    %259 = arith.extf %256 : vector<16x1xbf16> to vector<16x1xf32>
    %260 = arith.extf %258 : vector<1x128xbf16> to vector<1x128xf32>
    %261 = vector.broadcast %259 : vector<16x1xf32> to vector<16x128xf32>
    %262 = vector.broadcast %260 : vector<1x128xf32> to vector<16x128xf32>
    %263 = arith.mulf %261, %262 : vector<16x128xf32>
    %264 = arith.addf %254, %263 : vector<16x128xf32>
    %c0_208 = arith.constant 0 : index
    %c4_209 = arith.constant 4 : index
    %c1_210 = arith.constant 1 : index
    %c0_211 = arith.constant 0 : index
    %265 = vector.load %arg2[%c0_208, %c4_209, %c1_210, %c0_211] : memref<1x8x18x1xbf16, #tpu.memory_space<vmem>>, vector<1x1x16x1xbf16>
    %266 = vector.shape_cast %265 : vector<1x1x16x1xbf16> to vector<16x1xbf16>
    %c2_212 = arith.constant 2 : index
    %c1_213 = arith.constant 1 : index
    %c0_214 = arith.constant 0 : index
    %c0_215 = arith.constant 0 : index
    %267 = vector.load %arg5[%c2_212, %c1_213, %c0_214, %c0_215] : memref<3x3x1x128xbf16, #tpu.memory_space<vmem>>, vector<1x1x1x128xbf16>
    %268 = vector.shape_cast %267 : vector<1x1x1x128xbf16> to vector<1x128xbf16>
    %269 = arith.extf %266 : vector<16x1xbf16> to vector<16x1xf32>
    %270 = arith.extf %268 : vector<1x128xbf16> to vector<1x128xf32>
    %271 = vector.broadcast %269 : vector<16x1xf32> to vector<16x128xf32>
    %272 = vector.broadcast %270 : vector<1x128xf32> to vector<16x128xf32>
    %273 = arith.mulf %271, %272 : vector<16x128xf32>
    %274 = arith.addf %264, %273 : vector<16x128xf32>
    %c0_216 = arith.constant 0 : index
    %c4_217 = arith.constant 4 : index
    %c2_218 = arith.constant 2 : index
    %c0_219 = arith.constant 0 : index
    %275 = vector.load %arg2[%c0_216, %c4_217, %c2_218, %c0_219] : memref<1x8x18x1xbf16, #tpu.memory_space<vmem>>, vector<1x1x16x1xbf16>
    %276 = vector.shape_cast %275 : vector<1x1x16x1xbf16> to vector<16x1xbf16>
    %c2_220 = arith.constant 2 : index
    %c2_221 = arith.constant 2 : index
    %c0_222 = arith.constant 0 : index
    %c0_223 = arith.constant 0 : index
    %277 = vector.load %arg5[%c2_220, %c2_221, %c0_222, %c0_223] : memref<3x3x1x128xbf16, #tpu.memory_space<vmem>>, vector<1x1x1x128xbf16>
    %278 = vector.shape_cast %277 : vector<1x1x1x128xbf16> to vector<1x128xbf16>
    %279 = arith.extf %276 : vector<16x1xbf16> to vector<16x1xf32>
    %280 = arith.extf %278 : vector<1x128xbf16> to vector<1x128xf32>
    %281 = vector.broadcast %279 : vector<16x1xf32> to vector<16x128xf32>
    %282 = vector.broadcast %280 : vector<1x128xf32> to vector<16x128xf32>
    %283 = arith.mulf %281, %282 : vector<16x128xf32>
    %284 = arith.addf %274, %283 : vector<16x128xf32>
    %c0_224 = arith.constant 0 : index
    %c0_225 = arith.constant 0 : index
    %285 = vector.load %arg6[%c0_224, %c0_225] : memref<1x128xf32, #tpu.memory_space<vmem>>, vector<1x128xf32>
    %286 = vector.broadcast %285 : vector<1x128xf32> to vector<16x128xf32>
    %287 = arith.addf %284, %286 : vector<16x128xf32>
    %cst_226 = arith.constant 0.000000e+00 : f32
    %288 = vector.broadcast %cst_226 : f32 to vector<16x128xf32>
    %289 = arith.maximumf %287, %288 : vector<16x128xf32>
    %290 = arith.truncf %289 : vector<16x128xf32> to vector<16x128xbf16>
    %c0_227 = arith.constant 0 : index
    %c2_228 = arith.constant 2 : index
    %c0_229 = arith.constant 0 : index
    %c0_230 = arith.constant 0 : index
    %291 = vector.load %arg7[%c0_227, %c2_228, %c0_229, %c0_230] : memref<1x8x16x128xbf16, #tpu.memory_space<vmem>>, vector<1x1x16x128xbf16>
    %292 = vector.shape_cast %291 : vector<1x1x16x128xbf16> to vector<16x128xbf16>
    %293 = vector.shape_cast %290 : vector<16x128xbf16> to vector<1x1x16x128xbf16>
    tpu.vector_store %arg7[%c0_227, %c2_228, %c0_229, %c0_230], %293 {strides = array<i32>} : memref<1x8x16x128xbf16, #tpu.memory_space<vmem>>, vector<1x1x16x128xbf16>,
    %c0_231 = arith.constant 0 : index
    %c3_232 = arith.constant 3 : index
    %c0_233 = arith.constant 0 : index
    %c0_234 = arith.constant 0 : index
    %294 = vector.load %arg2[%c0_231, %c3_232, %c0_233, %c0_234] : memref<1x8x18x1xbf16, #tpu.memory_space<vmem>>, vector<1x1x16x1xbf16>
    %295 = vector.shape_cast %294 : vector<1x1x16x1xbf16> to vector<16x1xbf16>
    %c0_235 = arith.constant 0 : index
    %c0_236 = arith.constant 0 : index
    %c0_237 = arith.constant 0 : index
    %c0_238 = arith.constant 0 : index
    %296 = vector.load %arg5[%c0_235, %c0_236, %c0_237, %c0_238] : memref<3x3x1x128xbf16, #tpu.memory_space<vmem>>, vector<1x1x1x128xbf16>
    %297 = vector.shape_cast %296 : vector<1x1x1x128xbf16> to vector<1x128xbf16>
    %298 = arith.extf %295 : vector<16x1xbf16> to vector<16x1xf32>
    %299 = arith.extf %297 : vector<1x128xbf16> to vector<1x128xf32>
    %300 = vector.broadcast %298 : vector<16x1xf32> to vector<16x128xf32>
    %301 = vector.broadcast %299 : vector<1x128xf32> to vector<16x128xf32>
    %302 = arith.mulf %300, %301 : vector<16x128xf32>
    %c0_239 = arith.constant 0 : index
    %c3_240 = arith.constant 3 : index
    %c1_241 = arith.constant 1 : index
    %c0_242 = arith.constant 0 : index
    %303 = vector.load %arg2[%c0_239, %c3_240, %c1_241, %c0_242] : memref<1x8x18x1xbf16, #tpu.memory_space<vmem>>, vector<1x1x16x1xbf16>
    %304 = vector.shape_cast %303 : vector<1x1x16x1xbf16> to vector<16x1xbf16>
    %c0_243 = arith.constant 0 : index
    %c1_244 = arith.constant 1 : index
    %c0_245 = arith.constant 0 : index
    %c0_246 = arith.constant 0 : index
    %305 = vector.load %arg5[%c0_243, %c1_244, %c0_245, %c0_246] : memref<3x3x1x128xbf16, #tpu.memory_space<vmem>>, vector<1x1x1x128xbf16>
    %306 = vector.shape_cast %305 : vector<1x1x1x128xbf16> to vector<1x128xbf16>
    %307 = arith.extf %304 : vector<16x1xbf16> to vector<16x1xf32>
    %308 = arith.extf %306 : vector<1x128xbf16> to vector<1x128xf32>
    %309 = vector.broadcast %307 : vector<16x1xf32> to vector<16x128xf32>
    %310 = vector.broadcast %308 : vector<1x128xf32> to vector<16x128xf32>
    %311 = arith.mulf %309, %310 : vector<16x128xf32>
    %312 = arith.addf %302, %311 : vector<16x128xf32>
    %c0_247 = arith.constant 0 : index
    %c3_248 = arith.constant 3 : index
    %c2_249 = arith.constant 2 : index
    %c0_250 = arith.constant 0 : index
    %313 = vector.load %arg2[%c0_247, %c3_248, %c2_249, %c0_250] : memref<1x8x18x1xbf16, #tpu.memory_space<vmem>>, vector<1x1x16x1xbf16>
    %314 = vector.shape_cast %313 : vector<1x1x16x1xbf16> to vector<16x1xbf16>
    %c0_251 = arith.constant 0 : index
    %c2_252 = arith.constant 2 : index
    %c0_253 = arith.constant 0 : index
    %c0_254 = arith.constant 0 : index
    %315 = vector.load %arg5[%c0_251, %c2_252, %c0_253, %c0_254] : memref<3x3x1x128xbf16, #tpu.memory_space<vmem>>, vector<1x1x1x128xbf16>
    %316 = vector.shape_cast %315 : vector<1x1x1x128xbf16> to vector<1x128xbf16>
    %317 = arith.extf %314 : vector<16x1xbf16> to vector<16x1xf32>
    %318 = arith.extf %316 : vector<1x128xbf16> to vector<1x128xf32>
    %319 = vector.broadcast %317 : vector<16x1xf32> to vector<16x128xf32>
    %320 = vector.broadcast %318 : vector<1x128xf32> to vector<16x128xf32>
    %321 = arith.mulf %319, %320 : vector<16x128xf32>
    %322 = arith.addf %312, %321 : vector<16x128xf32>
    %c0_255 = arith.constant 0 : index
    %c4_256 = arith.constant 4 : index
    %c0_257 = arith.constant 0 : index
    %c0_258 = arith.constant 0 : index
    %323 = vector.load %arg2[%c0_255, %c4_256, %c0_257, %c0_258] : memref<1x8x18x1xbf16, #tpu.memory_space<vmem>>, vector<1x1x16x1xbf16>
    %324 = vector.shape_cast %323 : vector<1x1x16x1xbf16> to vector<16x1xbf16>
    %c1_259 = arith.constant 1 : index
    %c0_260 = arith.constant 0 : index
    %c0_261 = arith.constant 0 : index
    %c0_262 = arith.constant 0 : index
    %325 = vector.load %arg5[%c1_259, %c0_260, %c0_261, %c0_262] : memref<3x3x1x128xbf16, #tpu.memory_space<vmem>>, vector<1x1x1x128xbf16>
    %326 = vector.shape_cast %325 : vector<1x1x1x128xbf16> to vector<1x128xbf16>
    %327 = arith.extf %324 : vector<16x1xbf16> to vector<16x1xf32>
    %328 = arith.extf %326 : vector<1x128xbf16> to vector<1x128xf32>
    %329 = vector.broadcast %327 : vector<16x1xf32> to vector<16x128xf32>
    %330 = vector.broadcast %328 : vector<1x128xf32> to vector<16x128xf32>
    %331 = arith.mulf %329, %330 : vector<16x128xf32>
    %332 = arith.addf %322, %331 : vector<16x128xf32>
    %c0_263 = arith.constant 0 : index
    %c4_264 = arith.constant 4 : index
    %c1_265 = arith.constant 1 : index
    %c0_266 = arith.constant 0 : index
    %333 = vector.load %arg2[%c0_263, %c4_264, %c1_265, %c0_266] : memref<1x8x18x1xbf16, #tpu.memory_space<vmem>>, vector<1x1x16x1xbf16>
    %334 = vector.shape_cast %333 : vector<1x1x16x1xbf16> to vector<16x1xbf16>
    %c1_267 = arith.constant 1 : index
    %c1_268 = arith.constant 1 : index
    %c0_269 = arith.constant 0 : index
    %c0_270 = arith.constant 0 : index
    %335 = vector.load %arg5[%c1_267, %c1_268, %c0_269, %c0_270] : memref<3x3x1x128xbf16, #tpu.memory_space<vmem>>, vector<1x1x1x128xbf16>
    %336 = vector.shape_cast %335 : vector<1x1x1x128xbf16> to vector<1x128xbf16>
    %337 = arith.extf %334 : vector<16x1xbf16> to vector<16x1xf32>
    %338 = arith.extf %336 : vector<1x128xbf16> to vector<1x128xf32>
    %339 = vector.broadcast %337 : vector<16x1xf32> to vector<16x128xf32>
    %340 = vector.broadcast %338 : vector<1x128xf32> to vector<16x128xf32>
    %341 = arith.mulf %339, %340 : vector<16x128xf32>
    %342 = arith.addf %332, %341 : vector<16x128xf32>
    %c0_271 = arith.constant 0 : index
    %c4_272 = arith.constant 4 : index
    %c2_273 = arith.constant 2 : index
    %c0_274 = arith.constant 0 : index
    %343 = vector.load %arg2[%c0_271, %c4_272, %c2_273, %c0_274] : memref<1x8x18x1xbf16, #tpu.memory_space<vmem>>, vector<1x1x16x1xbf16>
    %344 = vector.shape_cast %343 : vector<1x1x16x1xbf16> to vector<16x1xbf16>
    %c1_275 = arith.constant 1 : index
    %c2_276 = arith.constant 2 : index
    %c0_277 = arith.constant 0 : index
    %c0_278 = arith.constant 0 : index
    %345 = vector.load %arg5[%c1_275, %c2_276, %c0_277, %c0_278] : memref<3x3x1x128xbf16, #tpu.memory_space<vmem>>, vector<1x1x1x128xbf16>
    %346 = vector.shape_cast %345 : vector<1x1x1x128xbf16> to vector<1x128xbf16>
    %347 = arith.extf %344 : vector<16x1xbf16> to vector<16x1xf32>
    %348 = arith.extf %346 : vector<1x128xbf16> to vector<1x128xf32>
    %349 = vector.broadcast %347 : vector<16x1xf32> to vector<16x128xf32>
    %350 = vector.broadcast %348 : vector<1x128xf32> to vector<16x128xf32>
    %351 = arith.mulf %349, %350 : vector<16x128xf32>
    %352 = arith.addf %342, %351 : vector<16x128xf32>
    %c0_279 = arith.constant 0 : index
    %c5 = arith.constant 5 : index
    %c0_280 = arith.constant 0 : index
    %c0_281 = arith.constant 0 : index
    %353 = vector.load %arg2[%c0_279, %c5, %c0_280, %c0_281] : memref<1x8x18x1xbf16, #tpu.memory_space<vmem>>, vector<1x1x16x1xbf16>
    %354 = vector.shape_cast %353 : vector<1x1x16x1xbf16> to vector<16x1xbf16>
    %c2_282 = arith.constant 2 : index
    %c0_283 = arith.constant 0 : index
    %c0_284 = arith.constant 0 : index
    %c0_285 = arith.constant 0 : index
    %355 = vector.load %arg5[%c2_282, %c0_283, %c0_284, %c0_285] : memref<3x3x1x128xbf16, #tpu.memory_space<vmem>>, vector<1x1x1x128xbf16>
    %356 = vector.shape_cast %355 : vector<1x1x1x128xbf16> to vector<1x128xbf16>
    %357 = arith.extf %354 : vector<16x1xbf16> to vector<16x1xf32>
    %358 = arith.extf %356 : vector<1x128xbf16> to vector<1x128xf32>
    %359 = vector.broadcast %357 : vector<16x1xf32> to vector<16x128xf32>
    %360 = vector.broadcast %358 : vector<1x128xf32> to vector<16x128xf32>
    %361 = arith.mulf %359, %360 : vector<16x128xf32>
    %362 = arith.addf %352, %361 : vector<16x128xf32>
    %c0_286 = arith.constant 0 : index
    %c5_287 = arith.constant 5 : index
    %c1_288 = arith.constant 1 : index
    %c0_289 = arith.constant 0 : index
    %363 = vector.load %arg2[%c0_286, %c5_287, %c1_288, %c0_289] : memref<1x8x18x1xbf16, #tpu.memory_space<vmem>>, vector<1x1x16x1xbf16>
    %364 = vector.shape_cast %363 : vector<1x1x16x1xbf16> to vector<16x1xbf16>
    %c2_290 = arith.constant 2 : index
    %c1_291 = arith.constant 1 : index
    %c0_292 = arith.constant 0 : index
    %c0_293 = arith.constant 0 : index
    %365 = vector.load %arg5[%c2_290, %c1_291, %c0_292, %c0_293] : memref<3x3x1x128xbf16, #tpu.memory_space<vmem>>, vector<1x1x1x128xbf16>
    %366 = vector.shape_cast %365 : vector<1x1x1x128xbf16> to vector<1x128xbf16>
    %367 = arith.extf %364 : vector<16x1xbf16> to vector<16x1xf32>
    %368 = arith.extf %366 : vector<1x128xbf16> to vector<1x128xf32>
    %369 = vector.broadcast %367 : vector<16x1xf32> to vector<16x128xf32>
    %370 = vector.broadcast %368 : vector<1x128xf32> to vector<16x128xf32>
    %371 = arith.mulf %369, %370 : vector<16x128xf32>
    %372 = arith.addf %362, %371 : vector<16x128xf32>
    %c0_294 = arith.constant 0 : index
    %c5_295 = arith.constant 5 : index
    %c2_296 = arith.constant 2 : index
    %c0_297 = arith.constant 0 : index
    %373 = vector.load %arg2[%c0_294, %c5_295, %c2_296, %c0_297] : memref<1x8x18x1xbf16, #tpu.memory_space<vmem>>, vector<1x1x16x1xbf16>
    %374 = vector.shape_cast %373 : vector<1x1x16x1xbf16> to vector<16x1xbf16>
    %c2_298 = arith.constant 2 : index
    %c2_299 = arith.constant 2 : index
    %c0_300 = arith.constant 0 : index
    %c0_301 = arith.constant 0 : index
    %375 = vector.load %arg5[%c2_298, %c2_299, %c0_300, %c0_301] : memref<3x3x1x128xbf16, #tpu.memory_space<vmem>>, vector<1x1x1x128xbf16>
    %376 = vector.shape_cast %375 : vector<1x1x1x128xbf16> to vector<1x128xbf16>
    %377 = arith.extf %374 : vector<16x1xbf16> to vector<16x1xf32>
    %378 = arith.extf %376 : vector<1x128xbf16> to vector<1x128xf32>
    %379 = vector.broadcast %377 : vector<16x1xf32> to vector<16x128xf32>
    %380 = vector.broadcast %378 : vector<1x128xf32> to vector<16x128xf32>
    %381 = arith.mulf %379, %380 : vector<16x128xf32>
    %382 = arith.addf %372, %381 : vector<16x128xf32>
    %c0_302 = arith.constant 0 : index
    %c0_303 = arith.constant 0 : index
    %383 = vector.load %arg6[%c0_302, %c0_303] : memref<1x128xf32, #tpu.memory_space<vmem>>, vector<1x128xf32>
    %384 = vector.broadcast %383 : vector<1x128xf32> to vector<16x128xf32>
    %385 = arith.addf %382, %384 : vector<16x128xf32>
    %cst_304 = arith.constant 0.000000e+00 : f32
    %386 = vector.broadcast %cst_304 : f32 to vector<16x128xf32>
    %387 = arith.maximumf %385, %386 : vector<16x128xf32>
    %388 = arith.truncf %387 : vector<16x128xf32> to vector<16x128xbf16>
    %c0_305 = arith.constant 0 : index
    %c3_306 = arith.constant 3 : index
    %c0_307 = arith.constant 0 : index
    %c0_308 = arith.constant 0 : index
    %389 = vector.load %arg7[%c0_305, %c3_306, %c0_307, %c0_308] : memref<1x8x16x128xbf16, #tpu.memory_space<vmem>>, vector<1x1x16x128xbf16>
    %390 = vector.shape_cast %389 : vector<1x1x16x128xbf16> to vector<16x128xbf16>
    %391 = vector.shape_cast %388 : vector<16x128xbf16> to vector<1x1x16x128xbf16>
    tpu.vector_store %arg7[%c0_305, %c3_306, %c0_307, %c0_308], %391 {strides = array<i32>} : memref<1x8x16x128xbf16, #tpu.memory_space<vmem>>, vector<1x1x16x128xbf16>,
    %c0_309 = arith.constant 0 : index
    %c4_310 = arith.constant 4 : index
    %c0_311 = arith.constant 0 : index
    %c0_312 = arith.constant 0 : index
    %392 = vector.load %arg2[%c0_309, %c4_310, %c0_311, %c0_312] : memref<1x8x18x1xbf16, #tpu.memory_space<vmem>>, vector<1x1x16x1xbf16>
    %393 = vector.shape_cast %392 : vector<1x1x16x1xbf16> to vector<16x1xbf16>
    %c0_313 = arith.constant 0 : index
    %c0_314 = arith.constant 0 : index
    %c0_315 = arith.constant 0 : index
    %c0_316 = arith.constant 0 : index
    %394 = vector.load %arg5[%c0_313, %c0_314, %c0_315, %c0_316] : memref<3x3x1x128xbf16, #tpu.memory_space<vmem>>, vector<1x1x1x128xbf16>
    %395 = vector.shape_cast %394 : vector<1x1x1x128xbf16> to vector<1x128xbf16>
    %396 = arith.extf %393 : vector<16x1xbf16> to vector<16x1xf32>
    %397 = arith.extf %395 : vector<1x128xbf16> to vector<1x128xf32>
    %398 = vector.broadcast %396 : vector<16x1xf32> to vector<16x128xf32>
    %399 = vector.broadcast %397 : vector<1x128xf32> to vector<16x128xf32>
    %400 = arith.mulf %398, %399 : vector<16x128xf32>
    %c0_317 = arith.constant 0 : index
    %c4_318 = arith.constant 4 : index
    %c1_319 = arith.constant 1 : index
    %c0_320 = arith.constant 0 : index
    %401 = vector.load %arg2[%c0_317, %c4_318, %c1_319, %c0_320] : memref<1x8x18x1xbf16, #tpu.memory_space<vmem>>, vector<1x1x16x1xbf16>
    %402 = vector.shape_cast %401 : vector<1x1x16x1xbf16> to vector<16x1xbf16>
    %c0_321 = arith.constant 0 : index
    %c1_322 = arith.constant 1 : index
    %c0_323 = arith.constant 0 : index
    %c0_324 = arith.constant 0 : index
    %403 = vector.load %arg5[%c0_321, %c1_322, %c0_323, %c0_324] : memref<3x3x1x128xbf16, #tpu.memory_space<vmem>>, vector<1x1x1x128xbf16>
    %404 = vector.shape_cast %403 : vector<1x1x1x128xbf16> to vector<1x128xbf16>
    %405 = arith.extf %402 : vector<16x1xbf16> to vector<16x1xf32>
    %406 = arith.extf %404 : vector<1x128xbf16> to vector<1x128xf32>
    %407 = vector.broadcast %405 : vector<16x1xf32> to vector<16x128xf32>
    %408 = vector.broadcast %406 : vector<1x128xf32> to vector<16x128xf32>
    %409 = arith.mulf %407, %408 : vector<16x128xf32>
    %410 = arith.addf %400, %409 : vector<16x128xf32>
    %c0_325 = arith.constant 0 : index
    %c4_326 = arith.constant 4 : index
    %c2_327 = arith.constant 2 : index
    %c0_328 = arith.constant 0 : index
    %411 = vector.load %arg2[%c0_325, %c4_326, %c2_327, %c0_328] : memref<1x8x18x1xbf16, #tpu.memory_space<vmem>>, vector<1x1x16x1xbf16>
    %412 = vector.shape_cast %411 : vector<1x1x16x1xbf16> to vector<16x1xbf16>
    %c0_329 = arith.constant 0 : index
    %c2_330 = arith.constant 2 : index
    %c0_331 = arith.constant 0 : index
    %c0_332 = arith.constant 0 : index
    %413 = vector.load %arg5[%c0_329, %c2_330, %c0_331, %c0_332] : memref<3x3x1x128xbf16, #tpu.memory_space<vmem>>, vector<1x1x1x128xbf16>
    %414 = vector.shape_cast %413 : vector<1x1x1x128xbf16> to vector<1x128xbf16>
    %415 = arith.extf %412 : vector<16x1xbf16> to vector<16x1xf32>
    %416 = arith.extf %414 : vector<1x128xbf16> to vector<1x128xf32>
    %417 = vector.broadcast %415 : vector<16x1xf32> to vector<16x128xf32>
    %418 = vector.broadcast %416 : vector<1x128xf32> to vector<16x128xf32>
    %419 = arith.mulf %417, %418 : vector<16x128xf32>
    %420 = arith.addf %410, %419 : vector<16x128xf32>
    %c0_333 = arith.constant 0 : index
    %c5_334 = arith.constant 5 : index
    %c0_335 = arith.constant 0 : index
    %c0_336 = arith.constant 0 : index
    %421 = vector.load %arg2[%c0_333, %c5_334, %c0_335, %c0_336] : memref<1x8x18x1xbf16, #tpu.memory_space<vmem>>, vector<1x1x16x1xbf16>
    %422 = vector.shape_cast %421 : vector<1x1x16x1xbf16> to vector<16x1xbf16>
    %c1_337 = arith.constant 1 : index
    %c0_338 = arith.constant 0 : index
    %c0_339 = arith.constant 0 : index
    %c0_340 = arith.constant 0 : index
    %423 = vector.load %arg5[%c1_337, %c0_338, %c0_339, %c0_340] : memref<3x3x1x128xbf16, #tpu.memory_space<vmem>>, vector<1x1x1x128xbf16>
    %424 = vector.shape_cast %423 : vector<1x1x1x128xbf16> to vector<1x128xbf16>
    %425 = arith.extf %422 : vector<16x1xbf16> to vector<16x1xf32>
    %426 = arith.extf %424 : vector<1x128xbf16> to vector<1x128xf32>
    %427 = vector.broadcast %425 : vector<16x1xf32> to vector<16x128xf32>
    %428 = vector.broadcast %426 : vector<1x128xf32> to vector<16x128xf32>
    %429 = arith.mulf %427, %428 : vector<16x128xf32>
    %430 = arith.addf %420, %429 : vector<16x128xf32>
    %c0_341 = arith.constant 0 : index
    %c5_342 = arith.constant 5 : index
    %c1_343 = arith.constant 1 : index
    %c0_344 = arith.constant 0 : index
    %431 = vector.load %arg2[%c0_341, %c5_342, %c1_343, %c0_344] : memref<1x8x18x1xbf16, #tpu.memory_space<vmem>>, vector<1x1x16x1xbf16>
    %432 = vector.shape_cast %431 : vector<1x1x16x1xbf16> to vector<16x1xbf16>
    %c1_345 = arith.constant 1 : index
    %c1_346 = arith.constant 1 : index
    %c0_347 = arith.constant 0 : index
    %c0_348 = arith.constant 0 : index
    %433 = vector.load %arg5[%c1_345, %c1_346, %c0_347, %c0_348] : memref<3x3x1x128xbf16, #tpu.memory_space<vmem>>, vector<1x1x1x128xbf16>
    %434 = vector.shape_cast %433 : vector<1x1x1x128xbf16> to vector<1x128xbf16>
    %435 = arith.extf %432 : vector<16x1xbf16> to vector<16x1xf32>
    %436 = arith.extf %434 : vector<1x128xbf16> to vector<1x128xf32>
    %437 = vector.broadcast %435 : vector<16x1xf32> to vector<16x128xf32>
    %438 = vector.broadcast %436 : vector<1x128xf32> to vector<16x128xf32>
    %439 = arith.mulf %437, %438 : vector<16x128xf32>
    %440 = arith.addf %430, %439 : vector<16x128xf32>
    %c0_349 = arith.constant 0 : index
    %c5_350 = arith.constant 5 : index
    %c2_351 = arith.constant 2 : index
    %c0_352 = arith.constant 0 : index
    %441 = vector.load %arg2[%c0_349, %c5_350, %c2_351, %c0_352] : memref<1x8x18x1xbf16, #tpu.memory_space<vmem>>, vector<1x1x16x1xbf16>
    %442 = vector.shape_cast %441 : vector<1x1x16x1xbf16> to vector<16x1xbf16>
    %c1_353 = arith.constant 1 : index
    %c2_354 = arith.constant 2 : index
    %c0_355 = arith.constant 0 : index
    %c0_356 = arith.constant 0 : index
    %443 = vector.load %arg5[%c1_353, %c2_354, %c0_355, %c0_356] : memref<3x3x1x128xbf16, #tpu.memory_space<vmem>>, vector<1x1x1x128xbf16>
    %444 = vector.shape_cast %443 : vector<1x1x1x128xbf16> to vector<1x128xbf16>
    %445 = arith.extf %442 : vector<16x1xbf16> to vector<16x1xf32>
    %446 = arith.extf %444 : vector<1x128xbf16> to vector<1x128xf32>
    %447 = vector.broadcast %445 : vector<16x1xf32> to vector<16x128xf32>
    %448 = vector.broadcast %446 : vector<1x128xf32> to vector<16x128xf32>
    %449 = arith.mulf %447, %448 : vector<16x128xf32>
    %450 = arith.addf %440, %449 : vector<16x128xf32>
    %c0_357 = arith.constant 0 : index
    %c6 = arith.constant 6 : index
    %c0_358 = arith.constant 0 : index
    %c0_359 = arith.constant 0 : index
    %451 = vector.load %arg2[%c0_357, %c6, %c0_358, %c0_359] : memref<1x8x18x1xbf16, #tpu.memory_space<vmem>>, vector<1x1x16x1xbf16>
    %452 = vector.shape_cast %451 : vector<1x1x16x1xbf16> to vector<16x1xbf16>
    %c2_360 = arith.constant 2 : index
    %c0_361 = arith.constant 0 : index
    %c0_362 = arith.constant 0 : index
    %c0_363 = arith.constant 0 : index
    %453 = vector.load %arg5[%c2_360, %c0_361, %c0_362, %c0_363] : memref<3x3x1x128xbf16, #tpu.memory_space<vmem>>, vector<1x1x1x128xbf16>
    %454 = vector.shape_cast %453 : vector<1x1x1x128xbf16> to vector<1x128xbf16>
    %455 = arith.extf %452 : vector<16x1xbf16> to vector<16x1xf32>
    %456 = arith.extf %454 : vector<1x128xbf16> to vector<1x128xf32>
    %457 = vector.broadcast %455 : vector<16x1xf32> to vector<16x128xf32>
    %458 = vector.broadcast %456 : vector<1x128xf32> to vector<16x128xf32>
    %459 = arith.mulf %457, %458 : vector<16x128xf32>
    %460 = arith.addf %450, %459 : vector<16x128xf32>
    %c0_364 = arith.constant 0 : index
    %c6_365 = arith.constant 6 : index
    %c1_366 = arith.constant 1 : index
    %c0_367 = arith.constant 0 : index
    %461 = vector.load %arg2[%c0_364, %c6_365, %c1_366, %c0_367] : memref<1x8x18x1xbf16, #tpu.memory_space<vmem>>, vector<1x1x16x1xbf16>
    %462 = vector.shape_cast %461 : vector<1x1x16x1xbf16> to vector<16x1xbf16>
    %c2_368 = arith.constant 2 : index
    %c1_369 = arith.constant 1 : index
    %c0_370 = arith.constant 0 : index
    %c0_371 = arith.constant 0 : index
    %463 = vector.load %arg5[%c2_368, %c1_369, %c0_370, %c0_371] : memref<3x3x1x128xbf16, #tpu.memory_space<vmem>>, vector<1x1x1x128xbf16>
    %464 = vector.shape_cast %463 : vector<1x1x1x128xbf16> to vector<1x128xbf16>
    %465 = arith.extf %462 : vector<16x1xbf16> to vector<16x1xf32>
    %466 = arith.extf %464 : vector<1x128xbf16> to vector<1x128xf32>
    %467 = vector.broadcast %465 : vector<16x1xf32> to vector<16x128xf32>
    %468 = vector.broadcast %466 : vector<1x128xf32> to vector<16x128xf32>
    %469 = arith.mulf %467, %468 : vector<16x128xf32>
    %470 = arith.addf %460, %469 : vector<16x128xf32>
    %c0_372 = arith.constant 0 : index
    %c6_373 = arith.constant 6 : index
    %c2_374 = arith.constant 2 : index
    %c0_375 = arith.constant 0 : index
    %471 = vector.load %arg2[%c0_372, %c6_373, %c2_374, %c0_375] : memref<1x8x18x1xbf16, #tpu.memory_space<vmem>>, vector<1x1x16x1xbf16>
    %472 = vector.shape_cast %471 : vector<1x1x16x1xbf16> to vector<16x1xbf16>
    %c2_376 = arith.constant 2 : index
    %c2_377 = arith.constant 2 : index
    %c0_378 = arith.constant 0 : index
    %c0_379 = arith.constant 0 : index
    %473 = vector.load %arg5[%c2_376, %c2_377, %c0_378, %c0_379] : memref<3x3x1x128xbf16, #tpu.memory_space<vmem>>, vector<1x1x1x128xbf16>
    %474 = vector.shape_cast %473 : vector<1x1x1x128xbf16> to vector<1x128xbf16>
    %475 = arith.extf %472 : vector<16x1xbf16> to vector<16x1xf32>
    %476 = arith.extf %474 : vector<1x128xbf16> to vector<1x128xf32>
    %477 = vector.broadcast %475 : vector<16x1xf32> to vector<16x128xf32>
    %478 = vector.broadcast %476 : vector<1x128xf32> to vector<16x128xf32>
    %479 = arith.mulf %477, %478 : vector<16x128xf32>
    %480 = arith.addf %470, %479 : vector<16x128xf32>
    %c0_380 = arith.constant 0 : index
    %c0_381 = arith.constant 0 : index
    %481 = vector.load %arg6[%c0_380, %c0_381] : memref<1x128xf32, #tpu.memory_space<vmem>>, vector<1x128xf32>
    %482 = vector.broadcast %481 : vector<1x128xf32> to vector<16x128xf32>
    %483 = arith.addf %480, %482 : vector<16x128xf32>
    %cst_382 = arith.constant 0.000000e+00 : f32
    %484 = vector.broadcast %cst_382 : f32 to vector<16x128xf32>
    %485 = arith.maximumf %483, %484 : vector<16x128xf32>
    %486 = arith.truncf %485 : vector<16x128xf32> to vector<16x128xbf16>
    %c0_383 = arith.constant 0 : index
    %c4_384 = arith.constant 4 : index
    %c0_385 = arith.constant 0 : index
    %c0_386 = arith.constant 0 : index
    %487 = vector.load %arg7[%c0_383, %c4_384, %c0_385, %c0_386] : memref<1x8x16x128xbf16, #tpu.memory_space<vmem>>, vector<1x1x16x128xbf16>
    %488 = vector.shape_cast %487 : vector<1x1x16x128xbf16> to vector<16x128xbf16>
    %489 = vector.shape_cast %486 : vector<16x128xbf16> to vector<1x1x16x128xbf16>
    tpu.vector_store %arg7[%c0_383, %c4_384, %c0_385, %c0_386], %489 {strides = array<i32>} : memref<1x8x16x128xbf16, #tpu.memory_space<vmem>>, vector<1x1x16x128xbf16>,
    %c0_387 = arith.constant 0 : index
    %c5_388 = arith.constant 5 : index
    %c0_389 = arith.constant 0 : index
    %c0_390 = arith.constant 0 : index
    %490 = vector.load %arg2[%c0_387, %c5_388, %c0_389, %c0_390] : memref<1x8x18x1xbf16, #tpu.memory_space<vmem>>, vector<1x1x16x1xbf16>
    %491 = vector.shape_cast %490 : vector<1x1x16x1xbf16> to vector<16x1xbf16>
    %c0_391 = arith.constant 0 : index
    %c0_392 = arith.constant 0 : index
    %c0_393 = arith.constant 0 : index
    %c0_394 = arith.constant 0 : index
    %492 = vector.load %arg5[%c0_391, %c0_392, %c0_393, %c0_394] : memref<3x3x1x128xbf16, #tpu.memory_space<vmem>>, vector<1x1x1x128xbf16>
    %493 = vector.shape_cast %492 : vector<1x1x1x128xbf16> to vector<1x128xbf16>
    %494 = arith.extf %491 : vector<16x1xbf16> to vector<16x1xf32>
    %495 = arith.extf %493 : vector<1x128xbf16> to vector<1x128xf32>
    %496 = vector.broadcast %494 : vector<16x1xf32> to vector<16x128xf32>
    %497 = vector.broadcast %495 : vector<1x128xf32> to vector<16x128xf32>
    %498 = arith.mulf %496, %497 : vector<16x128xf32>
    %c0_395 = arith.constant 0 : index
    %c5_396 = arith.constant 5 : index
    %c1_397 = arith.constant 1 : index
    %c0_398 = arith.constant 0 : index
    %499 = vector.load %arg2[%c0_395, %c5_396, %c1_397, %c0_398] : memref<1x8x18x1xbf16, #tpu.memory_space<vmem>>, vector<1x1x16x1xbf16>
    %500 = vector.shape_cast %499 : vector<1x1x16x1xbf16> to vector<16x1xbf16>
    %c0_399 = arith.constant 0 : index
    %c1_400 = arith.constant 1 : index
    %c0_401 = arith.constant 0 : index
    %c0_402 = arith.constant 0 : index
    %501 = vector.load %arg5[%c0_399, %c1_400, %c0_401, %c0_402] : memref<3x3x1x128xbf16, #tpu.memory_space<vmem>>, vector<1x1x1x128xbf16>
    %502 = vector.shape_cast %501 : vector<1x1x1x128xbf16> to vector<1x128xbf16>
    %503 = arith.extf %500 : vector<16x1xbf16> to vector<16x1xf32>
    %504 = arith.extf %502 : vector<1x128xbf16> to vector<1x128xf32>
    %505 = vector.broadcast %503 : vector<16x1xf32> to vector<16x128xf32>
    %506 = vector.broadcast %504 : vector<1x128xf32> to vector<16x128xf32>
    %507 = arith.mulf %505, %506 : vector<16x128xf32>
    %508 = arith.addf %498, %507 : vector<16x128xf32>
    %c0_403 = arith.constant 0 : index
    %c5_404 = arith.constant 5 : index
    %c2_405 = arith.constant 2 : index
    %c0_406 = arith.constant 0 : index
    %509 = vector.load %arg2[%c0_403, %c5_404, %c2_405, %c0_406] : memref<1x8x18x1xbf16, #tpu.memory_space<vmem>>, vector<1x1x16x1xbf16>
    %510 = vector.shape_cast %509 : vector<1x1x16x1xbf16> to vector<16x1xbf16>
    %c0_407 = arith.constant 0 : index
    %c2_408 = arith.constant 2 : index
    %c0_409 = arith.constant 0 : index
    %c0_410 = arith.constant 0 : index
    %511 = vector.load %arg5[%c0_407, %c2_408, %c0_409, %c0_410] : memref<3x3x1x128xbf16, #tpu.memory_space<vmem>>, vector<1x1x1x128xbf16>
    %512 = vector.shape_cast %511 : vector<1x1x1x128xbf16> to vector<1x128xbf16>
    %513 = arith.extf %510 : vector<16x1xbf16> to vector<16x1xf32>
    %514 = arith.extf %512 : vector<1x128xbf16> to vector<1x128xf32>
    %515 = vector.broadcast %513 : vector<16x1xf32> to vector<16x128xf32>
    %516 = vector.broadcast %514 : vector<1x128xf32> to vector<16x128xf32>
    %517 = arith.mulf %515, %516 : vector<16x128xf32>
    %518 = arith.addf %508, %517 : vector<16x128xf32>
    %c0_411 = arith.constant 0 : index
    %c6_412 = arith.constant 6 : index
    %c0_413 = arith.constant 0 : index
    %c0_414 = arith.constant 0 : index
    %519 = vector.load %arg2[%c0_411, %c6_412, %c0_413, %c0_414] : memref<1x8x18x1xbf16, #tpu.memory_space<vmem>>, vector<1x1x16x1xbf16>
    %520 = vector.shape_cast %519 : vector<1x1x16x1xbf16> to vector<16x1xbf16>
    %c1_415 = arith.constant 1 : index
    %c0_416 = arith.constant 0 : index
    %c0_417 = arith.constant 0 : index
    %c0_418 = arith.constant 0 : index
    %521 = vector.load %arg5[%c1_415, %c0_416, %c0_417, %c0_418] : memref<3x3x1x128xbf16, #tpu.memory_space<vmem>>, vector<1x1x1x128xbf16>
    %522 = vector.shape_cast %521 : vector<1x1x1x128xbf16> to vector<1x128xbf16>
    %523 = arith.extf %520 : vector<16x1xbf16> to vector<16x1xf32>
    %524 = arith.extf %522 : vector<1x128xbf16> to vector<1x128xf32>
    %525 = vector.broadcast %523 : vector<16x1xf32> to vector<16x128xf32>
    %526 = vector.broadcast %524 : vector<1x128xf32> to vector<16x128xf32>
    %527 = arith.mulf %525, %526 : vector<16x128xf32>
    %528 = arith.addf %518, %527 : vector<16x128xf32>
    %c0_419 = arith.constant 0 : index
    %c6_420 = arith.constant 6 : index
    %c1_421 = arith.constant 1 : index
    %c0_422 = arith.constant 0 : index
    %529 = vector.load %arg2[%c0_419, %c6_420, %c1_421, %c0_422] : memref<1x8x18x1xbf16, #tpu.memory_space<vmem>>, vector<1x1x16x1xbf16>
    %530 = vector.shape_cast %529 : vector<1x1x16x1xbf16> to vector<16x1xbf16>
    %c1_423 = arith.constant 1 : index
    %c1_424 = arith.constant 1 : index
    %c0_425 = arith.constant 0 : index
    %c0_426 = arith.constant 0 : index
    %531 = vector.load %arg5[%c1_423, %c1_424, %c0_425, %c0_426] : memref<3x3x1x128xbf16, #tpu.memory_space<vmem>>, vector<1x1x1x128xbf16>
    %532 = vector.shape_cast %531 : vector<1x1x1x128xbf16> to vector<1x128xbf16>
    %533 = arith.extf %530 : vector<16x1xbf16> to vector<16x1xf32>
    %534 = arith.extf %532 : vector<1x128xbf16> to vector<1x128xf32>
    %535 = vector.broadcast %533 : vector<16x1xf32> to vector<16x128xf32>
    %536 = vector.broadcast %534 : vector<1x128xf32> to vector<16x128xf32>
    %537 = arith.mulf %535, %536 : vector<16x128xf32>
    %538 = arith.addf %528, %537 : vector<16x128xf32>
    %c0_427 = arith.constant 0 : index
    %c6_428 = arith.constant 6 : index
    %c2_429 = arith.constant 2 : index
    %c0_430 = arith.constant 0 : index
    %539 = vector.load %arg2[%c0_427, %c6_428, %c2_429, %c0_430] : memref<1x8x18x1xbf16, #tpu.memory_space<vmem>>, vector<1x1x16x1xbf16>
    %540 = vector.shape_cast %539 : vector<1x1x16x1xbf16> to vector<16x1xbf16>
    %c1_431 = arith.constant 1 : index
    %c2_432 = arith.constant 2 : index
    %c0_433 = arith.constant 0 : index
    %c0_434 = arith.constant 0 : index
    %541 = vector.load %arg5[%c1_431, %c2_432, %c0_433, %c0_434] : memref<3x3x1x128xbf16, #tpu.memory_space<vmem>>, vector<1x1x1x128xbf16>
    %542 = vector.shape_cast %541 : vector<1x1x1x128xbf16> to vector<1x128xbf16>
    %543 = arith.extf %540 : vector<16x1xbf16> to vector<16x1xf32>
    %544 = arith.extf %542 : vector<1x128xbf16> to vector<1x128xf32>
    %545 = vector.broadcast %543 : vector<16x1xf32> to vector<16x128xf32>
    %546 = vector.broadcast %544 : vector<1x128xf32> to vector<16x128xf32>
    %547 = arith.mulf %545, %546 : vector<16x128xf32>
    %548 = arith.addf %538, %547 : vector<16x128xf32>
    %c0_435 = arith.constant 0 : index
    %c7 = arith.constant 7 : index
    %c0_436 = arith.constant 0 : index
    %c0_437 = arith.constant 0 : index
    %549 = vector.load %arg2[%c0_435, %c7, %c0_436, %c0_437] : memref<1x8x18x1xbf16, #tpu.memory_space<vmem>>, vector<1x1x16x1xbf16>
    %550 = vector.shape_cast %549 : vector<1x1x16x1xbf16> to vector<16x1xbf16>
    %c2_438 = arith.constant 2 : index
    %c0_439 = arith.constant 0 : index
    %c0_440 = arith.constant 0 : index
    %c0_441 = arith.constant 0 : index
    %551 = vector.load %arg5[%c2_438, %c0_439, %c0_440, %c0_441] : memref<3x3x1x128xbf16, #tpu.memory_space<vmem>>, vector<1x1x1x128xbf16>
    %552 = vector.shape_cast %551 : vector<1x1x1x128xbf16> to vector<1x128xbf16>
    %553 = arith.extf %550 : vector<16x1xbf16> to vector<16x1xf32>
    %554 = arith.extf %552 : vector<1x128xbf16> to vector<1x128xf32>
    %555 = vector.broadcast %553 : vector<16x1xf32> to vector<16x128xf32>
    %556 = vector.broadcast %554 : vector<1x128xf32> to vector<16x128xf32>
    %557 = arith.mulf %555, %556 : vector<16x128xf32>
    %558 = arith.addf %548, %557 : vector<16x128xf32>
    %c0_442 = arith.constant 0 : index
    %c7_443 = arith.constant 7 : index
    %c1_444 = arith.constant 1 : index
    %c0_445 = arith.constant 0 : index
    %559 = vector.load %arg2[%c0_442, %c7_443, %c1_444, %c0_445] : memref<1x8x18x1xbf16, #tpu.memory_space<vmem>>, vector<1x1x16x1xbf16>
    %560 = vector.shape_cast %559 : vector<1x1x16x1xbf16> to vector<16x1xbf16>
    %c2_446 = arith.constant 2 : index
    %c1_447 = arith.constant 1 : index
    %c0_448 = arith.constant 0 : index
    %c0_449 = arith.constant 0 : index
    %561 = vector.load %arg5[%c2_446, %c1_447, %c0_448, %c0_449] : memref<3x3x1x128xbf16, #tpu.memory_space<vmem>>, vector<1x1x1x128xbf16>
    %562 = vector.shape_cast %561 : vector<1x1x1x128xbf16> to vector<1x128xbf16>
    %563 = arith.extf %560 : vector<16x1xbf16> to vector<16x1xf32>
    %564 = arith.extf %562 : vector<1x128xbf16> to vector<1x128xf32>
    %565 = vector.broadcast %563 : vector<16x1xf32> to vector<16x128xf32>
    %566 = vector.broadcast %564 : vector<1x128xf32> to vector<16x128xf32>
    %567 = arith.mulf %565, %566 : vector<16x128xf32>
    %568 = arith.addf %558, %567 : vector<16x128xf32>
    %c0_450 = arith.constant 0 : index
    %c7_451 = arith.constant 7 : index
    %c2_452 = arith.constant 2 : index
    %c0_453 = arith.constant 0 : index
    %569 = vector.load %arg2[%c0_450, %c7_451, %c2_452, %c0_453] : memref<1x8x18x1xbf16, #tpu.memory_space<vmem>>, vector<1x1x16x1xbf16>
    %570 = vector.shape_cast %569 : vector<1x1x16x1xbf16> to vector<16x1xbf16>
    %c2_454 = arith.constant 2 : index
    %c2_455 = arith.constant 2 : index
    %c0_456 = arith.constant 0 : index
    %c0_457 = arith.constant 0 : index
    %571 = vector.load %arg5[%c2_454, %c2_455, %c0_456, %c0_457] : memref<3x3x1x128xbf16, #tpu.memory_space<vmem>>, vector<1x1x1x128xbf16>
    %572 = vector.shape_cast %571 : vector<1x1x1x128xbf16> to vector<1x128xbf16>
    %573 = arith.extf %570 : vector<16x1xbf16> to vector<16x1xf32>
    %574 = arith.extf %572 : vector<1x128xbf16> to vector<1x128xf32>
    %575 = vector.broadcast %573 : vector<16x1xf32> to vector<16x128xf32>
    %576 = vector.broadcast %574 : vector<1x128xf32> to vector<16x128xf32>
    %577 = arith.mulf %575, %576 : vector<16x128xf32>
    %578 = arith.addf %568, %577 : vector<16x128xf32>
    %c0_458 = arith.constant 0 : index
    %c0_459 = arith.constant 0 : index
    %579 = vector.load %arg6[%c0_458, %c0_459] : memref<1x128xf32, #tpu.memory_space<vmem>>, vector<1x128xf32>
    %580 = vector.broadcast %579 : vector<1x128xf32> to vector<16x128xf32>
    %581 = arith.addf %578, %580 : vector<16x128xf32>
    %cst_460 = arith.constant 0.000000e+00 : f32
    %582 = vector.broadcast %cst_460 : f32 to vector<16x128xf32>
    %583 = arith.maximumf %581, %582 : vector<16x128xf32>
    %584 = arith.truncf %583 : vector<16x128xf32> to vector<16x128xbf16>
    %c0_461 = arith.constant 0 : index
    %c5_462 = arith.constant 5 : index
    %c0_463 = arith.constant 0 : index
    %c0_464 = arith.constant 0 : index
    %585 = vector.load %arg7[%c0_461, %c5_462, %c0_463, %c0_464] : memref<1x8x16x128xbf16, #tpu.memory_space<vmem>>, vector<1x1x16x128xbf16>
    %586 = vector.shape_cast %585 : vector<1x1x16x128xbf16> to vector<16x128xbf16>
    %587 = vector.shape_cast %584 : vector<16x128xbf16> to vector<1x1x16x128xbf16>
    tpu.vector_store %arg7[%c0_461, %c5_462, %c0_463, %c0_464], %587 {strides = array<i32>} : memref<1x8x16x128xbf16, #tpu.memory_space<vmem>>, vector<1x1x16x128xbf16>,
    %c0_465 = arith.constant 0 : index
    %c6_466 = arith.constant 6 : index
    %c0_467 = arith.constant 0 : index
    %c0_468 = arith.constant 0 : index
    %588 = vector.load %arg2[%c0_465, %c6_466, %c0_467, %c0_468] : memref<1x8x18x1xbf16, #tpu.memory_space<vmem>>, vector<1x1x16x1xbf16>
    %589 = vector.shape_cast %588 : vector<1x1x16x1xbf16> to vector<16x1xbf16>
    %c0_469 = arith.constant 0 : index
    %c0_470 = arith.constant 0 : index
    %c0_471 = arith.constant 0 : index
    %c0_472 = arith.constant 0 : index
    %590 = vector.load %arg5[%c0_469, %c0_470, %c0_471, %c0_472] : memref<3x3x1x128xbf16, #tpu.memory_space<vmem>>, vector<1x1x1x128xbf16>
    %591 = vector.shape_cast %590 : vector<1x1x1x128xbf16> to vector<1x128xbf16>
    %592 = arith.extf %589 : vector<16x1xbf16> to vector<16x1xf32>
    %593 = arith.extf %591 : vector<1x128xbf16> to vector<1x128xf32>
    %594 = vector.broadcast %592 : vector<16x1xf32> to vector<16x128xf32>
    %595 = vector.broadcast %593 : vector<1x128xf32> to vector<16x128xf32>
    %596 = arith.mulf %594, %595 : vector<16x128xf32>
    %c0_473 = arith.constant 0 : index
    %c6_474 = arith.constant 6 : index
    %c1_475 = arith.constant 1 : index
    %c0_476 = arith.constant 0 : index
    %597 = vector.load %arg2[%c0_473, %c6_474, %c1_475, %c0_476] : memref<1x8x18x1xbf16, #tpu.memory_space<vmem>>, vector<1x1x16x1xbf16>
    %598 = vector.shape_cast %597 : vector<1x1x16x1xbf16> to vector<16x1xbf16>
    %c0_477 = arith.constant 0 : index
    %c1_478 = arith.constant 1 : index
    %c0_479 = arith.constant 0 : index
    %c0_480 = arith.constant 0 : index
    %599 = vector.load %arg5[%c0_477, %c1_478, %c0_479, %c0_480] : memref<3x3x1x128xbf16, #tpu.memory_space<vmem>>, vector<1x1x1x128xbf16>
    %600 = vector.shape_cast %599 : vector<1x1x1x128xbf16> to vector<1x128xbf16>
    %601 = arith.extf %598 : vector<16x1xbf16> to vector<16x1xf32>
    %602 = arith.extf %600 : vector<1x128xbf16> to vector<1x128xf32>
    %603 = vector.broadcast %601 : vector<16x1xf32> to vector<16x128xf32>
    %604 = vector.broadcast %602 : vector<1x128xf32> to vector<16x128xf32>
    %605 = arith.mulf %603, %604 : vector<16x128xf32>
    %606 = arith.addf %596, %605 : vector<16x128xf32>
    %c0_481 = arith.constant 0 : index
    %c6_482 = arith.constant 6 : index
    %c2_483 = arith.constant 2 : index
    %c0_484 = arith.constant 0 : index
    %607 = vector.load %arg2[%c0_481, %c6_482, %c2_483, %c0_484] : memref<1x8x18x1xbf16, #tpu.memory_space<vmem>>, vector<1x1x16x1xbf16>
    %608 = vector.shape_cast %607 : vector<1x1x16x1xbf16> to vector<16x1xbf16>
    %c0_485 = arith.constant 0 : index
    %c2_486 = arith.constant 2 : index
    %c0_487 = arith.constant 0 : index
    %c0_488 = arith.constant 0 : index
    %609 = vector.load %arg5[%c0_485, %c2_486, %c0_487, %c0_488] : memref<3x3x1x128xbf16, #tpu.memory_space<vmem>>, vector<1x1x1x128xbf16>
    %610 = vector.shape_cast %609 : vector<1x1x1x128xbf16> to vector<1x128xbf16>
    %611 = arith.extf %608 : vector<16x1xbf16> to vector<16x1xf32>
    %612 = arith.extf %610 : vector<1x128xbf16> to vector<1x128xf32>
    %613 = vector.broadcast %611 : vector<16x1xf32> to vector<16x128xf32>
    %614 = vector.broadcast %612 : vector<1x128xf32> to vector<16x128xf32>
    %615 = arith.mulf %613, %614 : vector<16x128xf32>
    %616 = arith.addf %606, %615 : vector<16x128xf32>
    %c0_489 = arith.constant 0 : index
    %c7_490 = arith.constant 7 : index
    %c0_491 = arith.constant 0 : index
    %c0_492 = arith.constant 0 : index
    %617 = vector.load %arg2[%c0_489, %c7_490, %c0_491, %c0_492] : memref<1x8x18x1xbf16, #tpu.memory_space<vmem>>, vector<1x1x16x1xbf16>
    %618 = vector.shape_cast %617 : vector<1x1x16x1xbf16> to vector<16x1xbf16>
    %c1_493 = arith.constant 1 : index
    %c0_494 = arith.constant 0 : index
    %c0_495 = arith.constant 0 : index
    %c0_496 = arith.constant 0 : index
    %619 = vector.load %arg5[%c1_493, %c0_494, %c0_495, %c0_496] : memref<3x3x1x128xbf16, #tpu.memory_space<vmem>>, vector<1x1x1x128xbf16>
    %620 = vector.shape_cast %619 : vector<1x1x1x128xbf16> to vector<1x128xbf16>
    %621 = arith.extf %618 : vector<16x1xbf16> to vector<16x1xf32>
    %622 = arith.extf %620 : vector<1x128xbf16> to vector<1x128xf32>
    %623 = vector.broadcast %621 : vector<16x1xf32> to vector<16x128xf32>
    %624 = vector.broadcast %622 : vector<1x128xf32> to vector<16x128xf32>
    %625 = arith.mulf %623, %624 : vector<16x128xf32>
    %626 = arith.addf %616, %625 : vector<16x128xf32>
    %c0_497 = arith.constant 0 : index
    %c7_498 = arith.constant 7 : index
    %c1_499 = arith.constant 1 : index
    %c0_500 = arith.constant 0 : index
    %627 = vector.load %arg2[%c0_497, %c7_498, %c1_499, %c0_500] : memref<1x8x18x1xbf16, #tpu.memory_space<vmem>>, vector<1x1x16x1xbf16>
    %628 = vector.shape_cast %627 : vector<1x1x16x1xbf16> to vector<16x1xbf16>
    %c1_501 = arith.constant 1 : index
    %c1_502 = arith.constant 1 : index
    %c0_503 = arith.constant 0 : index
    %c0_504 = arith.constant 0 : index
    %629 = vector.load %arg5[%c1_501, %c1_502, %c0_503, %c0_504] : memref<3x3x1x128xbf16, #tpu.memory_space<vmem>>, vector<1x1x1x128xbf16>
    %630 = vector.shape_cast %629 : vector<1x1x1x128xbf16> to vector<1x128xbf16>
    %631 = arith.extf %628 : vector<16x1xbf16> to vector<16x1xf32>
    %632 = arith.extf %630 : vector<1x128xbf16> to vector<1x128xf32>
    %633 = vector.broadcast %631 : vector<16x1xf32> to vector<16x128xf32>
    %634 = vector.broadcast %632 : vector<1x128xf32> to vector<16x128xf32>
    %635 = arith.mulf %633, %634 : vector<16x128xf32>
    %636 = arith.addf %626, %635 : vector<16x128xf32>
    %c0_505 = arith.constant 0 : index
    %c7_506 = arith.constant 7 : index
    %c2_507 = arith.constant 2 : index
    %c0_508 = arith.constant 0 : index
    %637 = vector.load %arg2[%c0_505, %c7_506, %c2_507, %c0_508] : memref<1x8x18x1xbf16, #tpu.memory_space<vmem>>, vector<1x1x16x1xbf16>
    %638 = vector.shape_cast %637 : vector<1x1x16x1xbf16> to vector<16x1xbf16>
    %c1_509 = arith.constant 1 : index
    %c2_510 = arith.constant 2 : index
    %c0_511 = arith.constant 0 : index
    %c0_512 = arith.constant 0 : index
    %639 = vector.load %arg5[%c1_509, %c2_510, %c0_511, %c0_512] : memref<3x3x1x128xbf16, #tpu.memory_space<vmem>>, vector<1x1x1x128xbf16>
    %640 = vector.shape_cast %639 : vector<1x1x1x128xbf16> to vector<1x128xbf16>
    %641 = arith.extf %638 : vector<16x1xbf16> to vector<16x1xf32>
    %642 = arith.extf %640 : vector<1x128xbf16> to vector<1x128xf32>
    %643 = vector.broadcast %641 : vector<16x1xf32> to vector<16x128xf32>
    %644 = vector.broadcast %642 : vector<1x128xf32> to vector<16x128xf32>
    %645 = arith.mulf %643, %644 : vector<16x128xf32>
    %646 = arith.addf %636, %645 : vector<16x128xf32>
    %c0_513 = arith.constant 0 : index
    %c0_514 = arith.constant 0 : index
    %c0_515 = arith.constant 0 : index
    %c0_516 = arith.constant 0 : index
    %647 = vector.load %arg3[%c0_513, %c0_514, %c0_515, %c0_516] : memref<1x1x18x1xbf16, #tpu.memory_space<vmem>>, vector<1x1x16x1xbf16>
    %648 = vector.shape_cast %647 : vector<1x1x16x1xbf16> to vector<16x1xbf16>
    %c2_517 = arith.constant 2 : index
    %c0_518 = arith.constant 0 : index
    %c0_519 = arith.constant 0 : index
    %c0_520 = arith.constant 0 : index
    %649 = vector.load %arg5[%c2_517, %c0_518, %c0_519, %c0_520] : memref<3x3x1x128xbf16, #tpu.memory_space<vmem>>, vector<1x1x1x128xbf16>
    %650 = vector.shape_cast %649 : vector<1x1x1x128xbf16> to vector<1x128xbf16>
    %651 = arith.extf %648 : vector<16x1xbf16> to vector<16x1xf32>
    %652 = arith.extf %650 : vector<1x128xbf16> to vector<1x128xf32>
    %653 = vector.broadcast %651 : vector<16x1xf32> to vector<16x128xf32>
    %654 = vector.broadcast %652 : vector<1x128xf32> to vector<16x128xf32>
    %655 = arith.mulf %653, %654 : vector<16x128xf32>
    %656 = arith.addf %646, %655 : vector<16x128xf32>
    %c0_521 = arith.constant 0 : index
    %c0_522 = arith.constant 0 : index
    %c1_523 = arith.constant 1 : index
    %c0_524 = arith.constant 0 : index
    %657 = vector.load %arg3[%c0_521, %c0_522, %c1_523, %c0_524] : memref<1x1x18x1xbf16, #tpu.memory_space<vmem>>, vector<1x1x16x1xbf16>
    %658 = vector.shape_cast %657 : vector<1x1x16x1xbf16> to vector<16x1xbf16>
    %c2_525 = arith.constant 2 : index
    %c1_526 = arith.constant 1 : index
    %c0_527 = arith.constant 0 : index
    %c0_528 = arith.constant 0 : index
    %659 = vector.load %arg5[%c2_525, %c1_526, %c0_527, %c0_528] : memref<3x3x1x128xbf16, #tpu.memory_space<vmem>>, vector<1x1x1x128xbf16>
    %660 = vector.shape_cast %659 : vector<1x1x1x128xbf16> to vector<1x128xbf16>
    %661 = arith.extf %658 : vector<16x1xbf16> to vector<16x1xf32>
    %662 = arith.extf %660 : vector<1x128xbf16> to vector<1x128xf32>
    %663 = vector.broadcast %661 : vector<16x1xf32> to vector<16x128xf32>
    %664 = vector.broadcast %662 : vector<1x128xf32> to vector<16x128xf32>
    %665 = arith.mulf %663, %664 : vector<16x128xf32>
    %666 = arith.addf %656, %665 : vector<16x128xf32>
    %c0_529 = arith.constant 0 : index
    %c0_530 = arith.constant 0 : index
    %c2_531 = arith.constant 2 : index
    %c0_532 = arith.constant 0 : index
    %667 = vector.load %arg3[%c0_529, %c0_530, %c2_531, %c0_532] : memref<1x1x18x1xbf16, #tpu.memory_space<vmem>>, vector<1x1x16x1xbf16>
    %668 = vector.shape_cast %667 : vector<1x1x16x1xbf16> to vector<16x1xbf16>
    %c2_533 = arith.constant 2 : index
    %c2_534 = arith.constant 2 : index
    %c0_535 = arith.constant 0 : index
    %c0_536 = arith.constant 0 : index
    %669 = vector.load %arg5[%c2_533, %c2_534, %c0_535, %c0_536] : memref<3x3x1x128xbf16, #tpu.memory_space<vmem>>, vector<1x1x1x128xbf16>
    %670 = vector.shape_cast %669 : vector<1x1x1x128xbf16> to vector<1x128xbf16>
    %671 = arith.extf %668 : vector<16x1xbf16> to vector<16x1xf32>
    %672 = arith.extf %670 : vector<1x128xbf16> to vector<1x128xf32>
    %673 = vector.broadcast %671 : vector<16x1xf32> to vector<16x128xf32>
    %674 = vector.broadcast %672 : vector<1x128xf32> to vector<16x128xf32>
    %675 = arith.mulf %673, %674 : vector<16x128xf32>
    %676 = arith.addf %666, %675 : vector<16x128xf32>
    %c0_537 = arith.constant 0 : index
    %c0_538 = arith.constant 0 : index
    %677 = vector.load %arg6[%c0_537, %c0_538] : memref<1x128xf32, #tpu.memory_space<vmem>>, vector<1x128xf32>
    %678 = vector.broadcast %677 : vector<1x128xf32> to vector<16x128xf32>
    %679 = arith.addf %676, %678 : vector<16x128xf32>
    %cst_539 = arith.constant 0.000000e+00 : f32
    %680 = vector.broadcast %cst_539 : f32 to vector<16x128xf32>
    %681 = arith.maximumf %679, %680 : vector<16x128xf32>
    %682 = arith.truncf %681 : vector<16x128xf32> to vector<16x128xbf16>
    %c0_540 = arith.constant 0 : index
    %c6_541 = arith.constant 6 : index
    %c0_542 = arith.constant 0 : index
    %c0_543 = arith.constant 0 : index
    %683 = vector.load %arg7[%c0_540, %c6_541, %c0_542, %c0_543] : memref<1x8x16x128xbf16, #tpu.memory_space<vmem>>, vector<1x1x16x128xbf16>
    %684 = vector.shape_cast %683 : vector<1x1x16x128xbf16> to vector<16x128xbf16>
    %685 = vector.shape_cast %682 : vector<16x128xbf16> to vector<1x1x16x128xbf16>
    tpu.vector_store %arg7[%c0_540, %c6_541, %c0_542, %c0_543], %685 {strides = array<i32>} : memref<1x8x16x128xbf16, #tpu.memory_space<vmem>>, vector<1x1x16x128xbf16>,
    %c0_544 = arith.constant 0 : index
    %c7_545 = arith.constant 7 : index
    %c0_546 = arith.constant 0 : index
    %c0_547 = arith.constant 0 : index
    %686 = vector.load %arg2[%c0_544, %c7_545, %c0_546, %c0_547] : memref<1x8x18x1xbf16, #tpu.memory_space<vmem>>, vector<1x1x16x1xbf16>
    %687 = vector.shape_cast %686 : vector<1x1x16x1xbf16> to vector<16x1xbf16>
    %c0_548 = arith.constant 0 : index
    %c0_549 = arith.constant 0 : index
    %c0_550 = arith.constant 0 : index
    %c0_551 = arith.constant 0 : index
    %688 = vector.load %arg5[%c0_548, %c0_549, %c0_550, %c0_551] : memref<3x3x1x128xbf16, #tpu.memory_space<vmem>>, vector<1x1x1x128xbf16>
    %689 = vector.shape_cast %688 : vector<1x1x1x128xbf16> to vector<1x128xbf16>
    %690 = arith.extf %687 : vector<16x1xbf16> to vector<16x1xf32>
    %691 = arith.extf %689 : vector<1x128xbf16> to vector<1x128xf32>
    %692 = vector.broadcast %690 : vector<16x1xf32> to vector<16x128xf32>
    %693 = vector.broadcast %691 : vector<1x128xf32> to vector<16x128xf32>
    %694 = arith.mulf %692, %693 : vector<16x128xf32>
    %c0_552 = arith.constant 0 : index
    %c7_553 = arith.constant 7 : index
    %c1_554 = arith.constant 1 : index
    %c0_555 = arith.constant 0 : index
    %695 = vector.load %arg2[%c0_552, %c7_553, %c1_554, %c0_555] : memref<1x8x18x1xbf16, #tpu.memory_space<vmem>>, vector<1x1x16x1xbf16>
    %696 = vector.shape_cast %695 : vector<1x1x16x1xbf16> to vector<16x1xbf16>
    %c0_556 = arith.constant 0 : index
    %c1_557 = arith.constant 1 : index
    %c0_558 = arith.constant 0 : index
    %c0_559 = arith.constant 0 : index
    %697 = vector.load %arg5[%c0_556, %c1_557, %c0_558, %c0_559] : memref<3x3x1x128xbf16, #tpu.memory_space<vmem>>, vector<1x1x1x128xbf16>
    %698 = vector.shape_cast %697 : vector<1x1x1x128xbf16> to vector<1x128xbf16>
    %699 = arith.extf %696 : vector<16x1xbf16> to vector<16x1xf32>
    %700 = arith.extf %698 : vector<1x128xbf16> to vector<1x128xf32>
    %701 = vector.broadcast %699 : vector<16x1xf32> to vector<16x128xf32>
    %702 = vector.broadcast %700 : vector<1x128xf32> to vector<16x128xf32>
    %703 = arith.mulf %701, %702 : vector<16x128xf32>
    %704 = arith.addf %694, %703 : vector<16x128xf32>
    %c0_560 = arith.constant 0 : index
    %c7_561 = arith.constant 7 : index
    %c2_562 = arith.constant 2 : index
    %c0_563 = arith.constant 0 : index
    %705 = vector.load %arg2[%c0_560, %c7_561, %c2_562, %c0_563] : memref<1x8x18x1xbf16, #tpu.memory_space<vmem>>, vector<1x1x16x1xbf16>
    %706 = vector.shape_cast %705 : vector<1x1x16x1xbf16> to vector<16x1xbf16>
    %c0_564 = arith.constant 0 : index
    %c2_565 = arith.constant 2 : index
    %c0_566 = arith.constant 0 : index
    %c0_567 = arith.constant 0 : index
    %707 = vector.load %arg5[%c0_564, %c2_565, %c0_566, %c0_567] : memref<3x3x1x128xbf16, #tpu.memory_space<vmem>>, vector<1x1x1x128xbf16>
    %708 = vector.shape_cast %707 : vector<1x1x1x128xbf16> to vector<1x128xbf16>
    %709 = arith.extf %706 : vector<16x1xbf16> to vector<16x1xf32>
    %710 = arith.extf %708 : vector<1x128xbf16> to vector<1x128xf32>
    %711 = vector.broadcast %709 : vector<16x1xf32> to vector<16x128xf32>
    %712 = vector.broadcast %710 : vector<1x128xf32> to vector<16x128xf32>
    %713 = arith.mulf %711, %712 : vector<16x128xf32>
    %714 = arith.addf %704, %713 : vector<16x128xf32>
    %c0_568 = arith.constant 0 : index
    %c0_569 = arith.constant 0 : index
    %c0_570 = arith.constant 0 : index
    %c0_571 = arith.constant 0 : index
    %715 = vector.load %arg3[%c0_568, %c0_569, %c0_570, %c0_571] : memref<1x1x18x1xbf16, #tpu.memory_space<vmem>>, vector<1x1x16x1xbf16>
    %716 = vector.shape_cast %715 : vector<1x1x16x1xbf16> to vector<16x1xbf16>
    %c1_572 = arith.constant 1 : index
    %c0_573 = arith.constant 0 : index
    %c0_574 = arith.constant 0 : index
    %c0_575 = arith.constant 0 : index
    %717 = vector.load %arg5[%c1_572, %c0_573, %c0_574, %c0_575] : memref<3x3x1x128xbf16, #tpu.memory_space<vmem>>, vector<1x1x1x128xbf16>
    %718 = vector.shape_cast %717 : vector<1x1x1x128xbf16> to vector<1x128xbf16>
    %719 = arith.extf %716 : vector<16x1xbf16> to vector<16x1xf32>
    %720 = arith.extf %718 : vector<1x128xbf16> to vector<1x128xf32>
    %721 = vector.broadcast %719 : vector<16x1xf32> to vector<16x128xf32>
    %722 = vector.broadcast %720 : vector<1x128xf32> to vector<16x128xf32>
    %723 = arith.mulf %721, %722 : vector<16x128xf32>
    %724 = arith.addf %714, %723 : vector<16x128xf32>
    %c0_576 = arith.constant 0 : index
    %c0_577 = arith.constant 0 : index
    %c1_578 = arith.constant 1 : index
    %c0_579 = arith.constant 0 : index
    %725 = vector.load %arg3[%c0_576, %c0_577, %c1_578, %c0_579] : memref<1x1x18x1xbf16, #tpu.memory_space<vmem>>, vector<1x1x16x1xbf16>
    %726 = vector.shape_cast %725 : vector<1x1x16x1xbf16> to vector<16x1xbf16>
    %c1_580 = arith.constant 1 : index
    %c1_581 = arith.constant 1 : index
    %c0_582 = arith.constant 0 : index
    %c0_583 = arith.constant 0 : index
    %727 = vector.load %arg5[%c1_580, %c1_581, %c0_582, %c0_583] : memref<3x3x1x128xbf16, #tpu.memory_space<vmem>>, vector<1x1x1x128xbf16>
    %728 = vector.shape_cast %727 : vector<1x1x1x128xbf16> to vector<1x128xbf16>
    %729 = arith.extf %726 : vector<16x1xbf16> to vector<16x1xf32>
    %730 = arith.extf %728 : vector<1x128xbf16> to vector<1x128xf32>
    %731 = vector.broadcast %729 : vector<16x1xf32> to vector<16x128xf32>
    %732 = vector.broadcast %730 : vector<1x128xf32> to vector<16x128xf32>
    %733 = arith.mulf %731, %732 : vector<16x128xf32>
    %734 = arith.addf %724, %733 : vector<16x128xf32>
    %c0_584 = arith.constant 0 : index
    %c0_585 = arith.constant 0 : index
    %c2_586 = arith.constant 2 : index
    %c0_587 = arith.constant 0 : index
    %735 = vector.load %arg3[%c0_584, %c0_585, %c2_586, %c0_587] : memref<1x1x18x1xbf16, #tpu.memory_space<vmem>>, vector<1x1x16x1xbf16>
    %736 = vector.shape_cast %735 : vector<1x1x16x1xbf16> to vector<16x1xbf16>
    %c1_588 = arith.constant 1 : index
    %c2_589 = arith.constant 2 : index
    %c0_590 = arith.constant 0 : index
    %c0_591 = arith.constant 0 : index
    %737 = vector.load %arg5[%c1_588, %c2_589, %c0_590, %c0_591] : memref<3x3x1x128xbf16, #tpu.memory_space<vmem>>, vector<1x1x1x128xbf16>
    %738 = vector.shape_cast %737 : vector<1x1x1x128xbf16> to vector<1x128xbf16>
    %739 = arith.extf %736 : vector<16x1xbf16> to vector<16x1xf32>
    %740 = arith.extf %738 : vector<1x128xbf16> to vector<1x128xf32>
    %741 = vector.broadcast %739 : vector<16x1xf32> to vector<16x128xf32>
    %742 = vector.broadcast %740 : vector<1x128xf32> to vector<16x128xf32>
    %743 = arith.mulf %741, %742 : vector<16x128xf32>
    %744 = arith.addf %734, %743 : vector<16x128xf32>
    %c0_592 = arith.constant 0 : index
    %c0_593 = arith.constant 0 : index
    %c0_594 = arith.constant 0 : index
    %c0_595 = arith.constant 0 : index
    %745 = vector.load %arg4[%c0_592, %c0_593, %c0_594, %c0_595] : memref<1x1x18x1xbf16, #tpu.memory_space<vmem>>, vector<1x1x16x1xbf16>
    %746 = vector.shape_cast %745 : vector<1x1x16x1xbf16> to vector<16x1xbf16>
    %c2_596 = arith.constant 2 : index
    %c0_597 = arith.constant 0 : index
    %c0_598 = arith.constant 0 : index
    %c0_599 = arith.constant 0 : index
    %747 = vector.load %arg5[%c2_596, %c0_597, %c0_598, %c0_599] : memref<3x3x1x128xbf16, #tpu.memory_space<vmem>>, vector<1x1x1x128xbf16>
    %748 = vector.shape_cast %747 : vector<1x1x1x128xbf16> to vector<1x128xbf16>
    %749 = arith.extf %746 : vector<16x1xbf16> to vector<16x1xf32>
    %750 = arith.extf %748 : vector<1x128xbf16> to vector<1x128xf32>
    %751 = vector.broadcast %749 : vector<16x1xf32> to vector<16x128xf32>
    %752 = vector.broadcast %750 : vector<1x128xf32> to vector<16x128xf32>
    %753 = arith.mulf %751, %752 : vector<16x128xf32>
    %754 = arith.addf %744, %753 : vector<16x128xf32>
    %c0_600 = arith.constant 0 : index
    %c0_601 = arith.constant 0 : index
    %c1_602 = arith.constant 1 : index
    %c0_603 = arith.constant 0 : index
    %755 = vector.load %arg4[%c0_600, %c0_601, %c1_602, %c0_603] : memref<1x1x18x1xbf16, #tpu.memory_space<vmem>>, vector<1x1x16x1xbf16>
    %756 = vector.shape_cast %755 : vector<1x1x16x1xbf16> to vector<16x1xbf16>
    %c2_604 = arith.constant 2 : index
    %c1_605 = arith.constant 1 : index
    %c0_606 = arith.constant 0 : index
    %c0_607 = arith.constant 0 : index
    %757 = vector.load %arg5[%c2_604, %c1_605, %c0_606, %c0_607] : memref<3x3x1x128xbf16, #tpu.memory_space<vmem>>, vector<1x1x1x128xbf16>
    %758 = vector.shape_cast %757 : vector<1x1x1x128xbf16> to vector<1x128xbf16>
    %759 = arith.extf %756 : vector<16x1xbf16> to vector<16x1xf32>
    %760 = arith.extf %758 : vector<1x128xbf16> to vector<1x128xf32>
    %761 = vector.broadcast %759 : vector<16x1xf32> to vector<16x128xf32>
    %762 = vector.broadcast %760 : vector<1x128xf32> to vector<16x128xf32>
    %763 = arith.mulf %761, %762 : vector<16x128xf32>
    %764 = arith.addf %754, %763 : vector<16x128xf32>
    %c0_608 = arith.constant 0 : index
    %c0_609 = arith.constant 0 : index
    %c2_610 = arith.constant 2 : index
    %c0_611 = arith.constant 0 : index
    %765 = vector.load %arg4[%c0_608, %c0_609, %c2_610, %c0_611] : memref<1x1x18x1xbf16, #tpu.memory_space<vmem>>, vector<1x1x16x1xbf16>
    %766 = vector.shape_cast %765 : vector<1x1x16x1xbf16> to vector<16x1xbf16>
    %c2_612 = arith.constant 2 : index
    %c2_613 = arith.constant 2 : index
    %c0_614 = arith.constant 0 : index
    %c0_615 = arith.constant 0 : index
    %767 = vector.load %arg5[%c2_612, %c2_613, %c0_614, %c0_615] : memref<3x3x1x128xbf16, #tpu.memory_space<vmem>>, vector<1x1x1x128xbf16>
    %768 = vector.shape_cast %767 : vector<1x1x1x128xbf16> to vector<1x128xbf16>
    %769 = arith.extf %766 : vector<16x1xbf16> to vector<16x1xf32>
    %770 = arith.extf %768 : vector<1x128xbf16> to vector<1x128xf32>
    %771 = vector.broadcast %769 : vector<16x1xf32> to vector<16x128xf32>
    %772 = vector.broadcast %770 : vector<1x128xf32> to vector<16x128xf32>
    %773 = arith.mulf %771, %772 : vector<16x128xf32>
    %774 = arith.addf %764, %773 : vector<16x128xf32>
    %c0_616 = arith.constant 0 : index
    %c0_617 = arith.constant 0 : index
    %775 = vector.load %arg6[%c0_616, %c0_617] : memref<1x128xf32, #tpu.memory_space<vmem>>, vector<1x128xf32>
    %776 = vector.broadcast %775 : vector<1x128xf32> to vector<16x128xf32>
    %777 = arith.addf %774, %776 : vector<16x128xf32>
    %cst_618 = arith.constant 0.000000e+00 : f32
    %778 = vector.broadcast %cst_618 : f32 to vector<16x128xf32>
    %779 = arith.maximumf %777, %778 : vector<16x128xf32>
    %780 = arith.truncf %779 : vector<16x128xf32> to vector<16x128xbf16>
    %c0_619 = arith.constant 0 : index
    %c7_620 = arith.constant 7 : index
    %c0_621 = arith.constant 0 : index
    %c0_622 = arith.constant 0 : index
    %781 = vector.load %arg7[%c0_619, %c7_620, %c0_621, %c0_622] : memref<1x8x16x128xbf16, #tpu.memory_space<vmem>>, vector<1x1x16x128xbf16>
    %782 = vector.shape_cast %781 : vector<1x1x16x128xbf16> to vector<16x128xbf16>
    %783 = vector.shape_cast %780 : vector<16x128xbf16> to vector<1x1x16x128xbf16>
    tpu.vector_store %arg7[%c0_619, %c7_620, %c0_621, %c0_622], %783 {strides = array<i32>} : memref<1x8x16x128xbf16, #tpu.memory_space<vmem>>, vector<1x1x16x128xbf16>,
    return
  }
  func.func @transform_0(%arg0: i32, %arg1: i32) -> (i32, i32, i32, i32) {
    %c0_i32 = arith.constant 0 : i32
    %c0_i32_0 = arith.constant 0 : i32
    %c0_i32_1 = arith.constant 0 : i32
    return %arg0, %arg1, %c0_i32, %c0_i32_0 : i32, i32, i32, i32
  }
  func.func @transform_1(%arg0: i32, %arg1: i32) -> (i32, i32, i32, i32) {
    %c1_i32 = arith.constant 1 : i32
    %0 = arith.addi %arg1, %c1_i32 : i32
    %c8_i32 = arith.constant 8 : i32
    %1 = arith.muli %0, %c8_i32 : i32
    %c0_i32 = arith.constant 0 : i32
    %c0_i32_0 = arith.constant 0 : i32
    %c0_i32_1 = arith.constant 0 : i32
    return %arg0, %1, %c0_i32, %c0_i32_0 : i32, i32, i32, i32
  }
  func.func @transform_2(%arg0: i32, %arg1: i32) -> (i32, i32, i32, i32) {
    %c1_i32 = arith.constant 1 : i32
    %0 = arith.addi %arg1, %c1_i32 : i32
    %c8_i32 = arith.constant 8 : i32
    %1 = arith.muli %0, %c8_i32 : i32
    %c1_i32_0 = arith.constant 1 : i32
    %2 = arith.addi %1, %c1_i32_0 : i32
    %c0_i32 = arith.constant 0 : i32
    %c0_i32_1 = arith.constant 0 : i32
    %c0_i32_2 = arith.constant 0 : i32
    return %arg0, %2, %c0_i32, %c0_i32_1 : i32, i32, i32, i32
  }
  func.func @transform_3(%arg0: i32, %arg1: i32) -> (i32, i32, i32, i32) {
    %c0_i32 = arith.constant 0 : i32
    %c0_i32_0 = arith.constant 0 : i32
    %c0_i32_1 = arith.constant 0 : i32
    %c0_i32_2 = arith.constant 0 : i32
    %c0_i32_3 = arith.constant 0 : i32
    return %c0_i32, %c0_i32_0, %c0_i32_1, %c0_i32_2 : i32, i32, i32, i32
  }
  func.func @transform_4(%arg0: i32, %arg1: i32) -> (i32, i32) {
    %c0_i32 = arith.constant 0 : i32
    %c0_i32_0 = arith.constant 0 : i32
    %c0_i32_1 = arith.constant 0 : i32
    return %c0_i32, %c0_i32_0 : i32, i32
  }
  func.func @transform_5(%arg0: i32, %arg1: i32) -> (i32, i32, i32, i32) {
    %c0_i32 = arith.constant 0 : i32
    %c0_i32_0 = arith.constant 0 : i32
    %c0_i32_1 = arith.constant 0 : i32
    return %arg0, %arg1, %c0_i32, %c0_i32_0 : i32, i32, i32, i32
  }
}

</mosaic_0001>

<llo_original>
// kernel: tpu_custom_call.1
$region0: #{tpu_custom_call.1}
  #allocation0 [shape = 'u32[]', space=smem, size = 0x4, offset = 0x4, fixed_abs, tag = 'smem constant byte address 0x4 - core index']
  #allocation1 [shape = 'u32[72,128]{1,0:T(1,128)}', space=vmem, size = 0x9000, scoped, tag = 'internal scratch']
  %s0 = inlined_call_operand.vmem [shape: bf16[2,18,18,1], index: 0, kind: input, shape index: {}]
  %s1 = inlined_call_operand.vmem [shape: bf16[2,18,18,1], index: 1, kind: input, shape index: {}]
  %s2 = inlined_call_operand.vmem [shape: bf16[2,18,18,1], index: 2, kind: input, shape index: {}]
  %s3 = inlined_call_operand.vmem [shape: bf16[3,3,1,128], index: 3, kind: input, shape index: {}]
  %s4 = inlined_call_operand.vmem [shape: f32[1,128], index: 4, kind: input, shape index: {}]
  %s5 = inlined_call_operand.hbm [shape: bf16[2,16,16,128], index: 5, kind: output, shape index: {}]
  %s6 = sld [smem:[#allocation0]]
  $region53: #{tpu_custom_call.1} parent=0
    _
  %s8 = ssub.s32 1, %s6
  %s9 = scalar_select 0, %s8, %s6
  $region1: #{tpu_custom_call.1} parent=0
    #allocation2 [shape = 'u8[65536]{0}', space=vmem, size = 0x10000, scoped, tag = 'output window, operand 0']
    #allocation3 [shape = 's32[2]{0}', space=sflag, size = 0x8, scoped, tag = 'scoped memory for tpu_custom_call.1']
    %10 = vsyncpa [#allocation3], 0
    %s11 = scalar_lea.sflag [#allocation3], 1
    %12 = vsyncpa %s11, 0
    loop: start=0, step=1, limit=6
    $region2: #{tpu_custom_call.1} parent=1 // loop_pre_header
      _
    $region3: #{tpu_custom_call.1} parent=1 // loop_header
      %s14 = sphi 0, %s18
      %p15 = scmp.ge.s32.totalorder %s14, 6
      %s21 = sphi 0, %s33
      %s22 = sphi 0, %s29
      %s23 = sphi 0, %s21
      %s24 = sphi 0, %s22
      %s25 = sphi 0, %s23
      %s26 = sphi 0, %s24
      %s38 = sphi 0, %s40
      %s41 = sphi 0, %s38
      %s42 = sphi 0, %s41
      %s58 = sphi 0, %s42
      %s70 = sphi 0, %s72
      %s73 = sphi 0, %s70
      %s74 = sphi 0, %s73
      %s90 = sphi 0, %s74
      %s104 = sphi 0, %s106
      %s107 = sphi 0, %s104
      %s108 = sphi 0, %s107
      %s124 = sphi 0, %s108
      %s128 = sphi 0, %s128
      %s130 = sphi 0, %s128
      %s131 = sphi 0, %s130
      %s145 = sphi 0, %s131
      %s149 = sphi 0, %s149
      %s151 = sphi 0, %s149
      %s152 = sphi 0, %s151
      %s166 = sphi 0, %s152
      %s174 = sphi 0, %s176
      %s177 = sphi 0, %s174
      %s178 = sphi 0, %s177
      %s194 = sphi 0, %s178
    $region4: #{tpu_custom_call.1} parent=1 // loop_header_branch
      %17 = sbr.rel (%p15) target = $region8
    $region5: #{tpu_custom_call.1} parent=1 // loop_body
      %s19 = ssub.s32 %s14, 1
      %s20 = ssub.s32 %s14, 2
      %s27 = sadd.s32 1, %s22
      %p28 = scmp.ge.s32.totalorder %s27, 2
      %s29 = scalar_select %p28, 0, %s27
      %s30 = sadd.s32 1, %s21
      %s31 = scalar_select %p28, %s30, %s21
      %p32 = scmp.ge.s32.totalorder %s31, 2
      %s33 = scalar_select %p32, 0, %s31
      %s34 = ssub.s32 %s21, %s33
      %s35 = ssub.s32 %s22, %s29
      %s36 = sor.u32 %s34, %s35
      %p37 = scmp.eq.s32.totalorder %s36, 0
      %s39 = sadd.s32 %s38, 1
      %s40 = scalar_select %p37, %s38, %s39
      %p43 = pneg %p37
      %p44 = scmp.eq.s32.totalorder %s14, 3
      %p45 = por %p43, %p44
      %p46 = scmp.ne.s32.totalorder %s38, %s41
      %p47 = scmp.eq.s32.totalorder %s14, 0
      %p48 = por %p46, %p47
      %p49 = scmp.ne.s32.totalorder %s38, %s41
      %p50 = scmp.eq.s32.totalorder %s19, 3
      %p51 = por %p49, %p50
      %p52 = scmp.ne.s32.totalorder %s41, %s42
      %p53 = scmp.eq.s32.totalorder %s19, 0
      %p54 = por %p52, %p53
      %p55 = scmp.ne.s32.totalorder %s41, %s42
      %p56 = scmp.eq.s32.totalorder %s20, 3
      %p57 = por %p55, %p56
      %p59 = scmp.ne.s32.totalorder %s42, %s58
      %p60 = scmp.eq.s32.totalorder %s20, 0
      %p61 = por %p59, %p60
      %s62 = sadd.s32 %s22, 1
      %s63 = smul.u32 %s62, 8
      %s64 = sadd.s32 %s29, 1
      %s65 = smul.u32 %s64, 8
      %s66 = ssub.s32 %s21, %s33
      %s67 = ssub.s32 %s63, %s65
      %s68 = sor.u32 %s66, %s67
      %p69 = scmp.eq.s32.totalorder %s68, 0
      %s71 = sadd.s32 %s70, 1
      %s72 = scalar_select %p69, %s70, %s71
      %p75 = pneg %p69
      %p76 = scmp.eq.s32.totalorder %s14, 3
      %p77 = por %p75, %p76
      %p78 = scmp.ne.s32.totalorder %s70, %s73
      %p79 = scmp.eq.s32.totalorder %s14, 0
      %p80 = por %p78, %p79
      %p81 = scmp.ne.s32.totalorder %s70, %s73
      %p82 = scmp.eq.s32.totalorder %s19, 3
      %p83 = por %p81, %p82
      %p84 = scmp.ne.s32.totalorder %s73, %s74
      %p85 = scmp.eq.s32.totalorder %s19, 0
      %p86 = por %p84, %p85
      %p87 = scmp.ne.s32.totalorder %s73, %s74
      %p88 = scmp.eq.s32.totalorder %s20, 3
      %p89 = por %p87, %p88
      %p91 = scmp.ne.s32.totalorder %s74, %s90
      %p92 = scmp.eq.s32.totalorder %s20, 0
      %p93 = por %p91, %p92
      %s94 = sadd.s32 %s22, 1
      %s95 = smul.u32 %s94, 8
      %s96 = sadd.s32 %s95, 1
      %s97 = sadd.s32 %s29, 1
      %s98 = smul.u32 %s97, 8
      %s99 = sadd.s32 %s98, 1
      %s100 = ssub.s32 %s21, %s33
      %s101 = ssub.s32 %s96, %s99
      %s102 = sor.u32 %s100, %s101
      %p103 = scmp.eq.s32.totalorder %s102, 0
      %s105 = sadd.s32 %s104, 1
      %s106 = scalar_select %p103, %s104, %s105
      %p109 = pneg %p103
      %p110 = scmp.eq.s32.totalorder %s14, 3
      %p111 = por %p109, %p110
      %p112 = scmp.ne.s32.totalorder %s104, %s107
      %p113 = scmp.eq.s32.totalorder %s14, 0
      %p114 = por %p112, %p113
      %p115 = scmp.ne.s32.totalorder %s104, %s107
      %p116 = scmp.eq.s32.totalorder %s19, 3
      %p117 = por %p115, %p116
      %p118 = scmp.ne.s32.totalorder %s107, %s108
      %p119 = scmp.eq.s32.totalorder %s19, 0
      %p120 = por %p118, %p119
      %p121 = scmp.ne.s32.totalorder %s107, %s108
      %p122 = scmp.eq.s32.totalorder %s20, 3
      %p123 = por %p121, %p122
      %p125 = scmp.ne.s32.totalorder %s108, %s124
      %p126 = scmp.eq.s32.totalorder %s20, 0
      %p127 = por %p125, %p126
      %s129 = sadd.s32 %s128, 1
      %p132 = scmp.eq.s32.totalorder %s14, 3
      %p133 = scmp.ne.s32.totalorder %s128, %s130
      %p134 = scmp.eq.s32.totalorder %s14, 0
      %p135 = por %p133, %p134
      %p136 = scmp.ne.s32.totalorder %s128, %s130
      %p137 = scmp.eq.s32.totalorder %s19, 3
      %p138 = por %p136, %p137
      %p139 = scmp.ne.s32.totalorder %s130, %s131
      %p140 = scmp.eq.s32.totalorder %s19, 0
      %p141 = por %p139, %p140
      %p142 = scmp.ne.s32.totalorder %s130, %s131
      %p143 = scmp.eq.s32.totalorder %s20, 3
      %p144 = por %p142, %p143
      %p146 = scmp.ne.s32.totalorder %s131, %s145
      %p147 = scmp.eq.s32.totalorder %s20, 0
      %p148 = por %p146, %p147
      %s150 = sadd.s32 %s149, 1
      %p153 = scmp.eq.s32.totalorder %s14, 3
      %p154 = scmp.ne.s32.totalorder %s149, %s151
      %p155 = scmp.eq.s32.totalorder %s14, 0
      %p156 = por %p154, %p155
      %p157 = scmp.ne.s32.totalorder %s149, %s151
      %p158 = scmp.eq.s32.totalorder %s19, 3
      %p159 = por %p157, %p158
      %p160 = scmp.ne.s32.totalorder %s151, %s152
      %p161 = scmp.eq.s32.totalorder %s19, 0
      %p162 = por %p160, %p161
      %p163 = scmp.ne.s32.totalorder %s151, %s152
      %p164 = scmp.eq.s32.totalorder %s20, 3
      %p165 = por %p163, %p164
      %p167 = scmp.ne.s32.totalorder %s152, %s166
      %p168 = scmp.eq.s32.totalorder %s20, 0
      %p169 = por %p167, %p168
      %s170 = ssub.s32 %s21, %s33
      %s171 = ssub.s32 %s22, %s29
      %s172 = sor.u32 %s170, %s171
      %p173 = scmp.eq.s32.totalorder %s172, 0
      %s175 = sadd.s32 %s174, 1
      %s176 = scalar_select %p173, %s174, %s175
      %p179 = pneg %p173
      %p180 = scmp.eq.s32.totalorder %s14, 3
      %p181 = por %p179, %p180
      %p182 = scmp.ne.s32.totalorder %s174, %s177
      %p183 = scmp.eq.s32.totalorder %s14, 0
      %p184 = por %p182, %p183
      %p185 = scmp.ne.s32.totalorder %s174, %s177
      %p186 = scmp.eq.s32.totalorder %s19, 3
      %p187 = por %p185, %p186
      %p188 = scmp.ne.s32.totalorder %s177, %s178
      %p189 = scmp.eq.s32.totalorder %s19, 0
      %p190 = por %p188, %p189
      %p191 = scmp.ne.s32.totalorder %s177, %s178
      %p192 = scmp.eq.s32.totalorder %s20, 3
      %p193 = por %p191, %p192
      %p195 = scmp.ne.s32.totalorder %s178, %s194
      %p196 = scmp.eq.s32.totalorder %s20, 0
      %p197 = por %p195, %p196
      %p198 = scmp.le.s32.totalorder 1, %s14
      %p199 = scmp.lt.s32.totalorder %s14, 5
      %p200 = pnand %p198, %p199
      %p201 = pneg %p200
      // Predicated region
      $region9: #{tpu_custom_call.1} parent=5 // pred_check
        _
      $region10: #{tpu_custom_call.1} parent=5 // pred_check_branch
        %203 = sbr.rel (%p200) target = $region12
      $region11: #{tpu_custom_call.1} parent=5 // pred_region
        %s204 = ssub.s32 %s14, 1
        // Predicated region
        $region13: #{tpu_custom_call.1} parent=11 // pred_check
          %p205 = pneg %p141
        $region14: #{tpu_custom_call.1} parent=11 // pred_check_branch
          %207 = sbr.rel (%p205) target = $region16
        $region15: #{tpu_custom_call.1} parent=11 // pred_region
          _
        $region16: #{tpu_custom_call.1} parent=11 // pred_fallthru
          _
        // Predicated region
        $region17: #{tpu_custom_call.1} parent=11 // pred_check
          %p208 = pneg %p162
        $region18: #{tpu_custom_call.1} parent=11 // pred_check_branch
          %210 = sbr.rel (%p208) target = $region20
        $region19: #{tpu_custom_call.1} parent=11 // pred_region
          _
        $region20: #{tpu_custom_call.1} parent=11 // pred_fallthru
          _
      $region12: #{tpu_custom_call.1} parent=5 // pred_fallthru
        _
      %p211 = scmp.lt.s32.totalorder %s14, 4
      // Predicated region
      $region21: #{tpu_custom_call.1} parent=5 // pred_check
        %p212 = pneg %p211
      $region22: #{tpu_custom_call.1} parent=5 // pred_check_branch
        %214 = sbr.rel (%p212) target = $region24
      $region23: #{tpu_custom_call.1} parent=5 // pred_region
        // Predicated region
        $region25: #{tpu_custom_call.1} parent=23 // pred_check
          %p215 = pneg %p48
        $region26: #{tpu_custom_call.1} parent=23 // pred_check_branch
          %217 = sbr.rel (%p215) target = $region28
        $region27: #{tpu_custom_call.1} parent=23 // pred_region
          %s218 = smul.u32 8, %s22
          %s219 = ssub.s32 18, %s218
          %p220 = scmp.lt.s32.totalorder %s219, 8
          %s221 = scalar_select %p220, %s219, 8
          %s222 = smul.u32 4, %s221
          %s223 = smul.u32 %s222, 3
          %p224 = scmp.lt.s32.totalorder %s21, 1
          %s225 = scalar_select %p224, %s21, 1
          %p226 = scmp.lt.s32.totalorder %s218, 17
          %s227 = scalar_select %p226, %s218, 17
          %s228 = smul.addr %s227, 3
          %s229 = smul.addr %s225, 54
          %s230 = sadd.s32 %s228, %s229
          %s231 = smul.addr %s230, 4
          %s232 = scalar_lea.vmem %s0, %s231
          %s233 = smul.u32 8, %s22
          %s234 = ssub.s32 18, %s233
          %p235 = scmp.lt.s32.totalorder %s234, 8
          %s236 = scalar_select %p235, %s234, 8
          %s237 = smul.u32 4, %s236
          %s238 = smul.u32 %s237, 3
        $region28: #{tpu_custom_call.1} parent=23 // pred_fallthru
          _
        // Predicated region
        $region29: #{tpu_custom_call.1} parent=23 // pred_check
          %p239 = pneg %p80
        $region30: #{tpu_custom_call.1} parent=23 // pred_check_branch
          %241 = sbr.rel (%p239) target = $region32
        $region31: #{tpu_custom_call.1} parent=23 // pred_region
          %s242 = sadd.s32 %s22, 1
          %s243 = smul.u32 %s242, 8
          %p244 = scmp.lt.s32.totalorder %s21, 1
          %s245 = scalar_select %p244, %s21, 1
          %p246 = scmp.lt.s32.totalorder %s243, 17
          %s247 = scalar_select %p246, %s243, 17
          %s248 = smul.addr %s247, 3
          %s249 = smul.addr %s245, 54
          %s250 = sadd.s32 %s248, %s249
          %s251 = smul.addr %s250, 4
          %s252 = scalar_lea.vmem %s1, %s251
          %s253 = sadd.s32 %s22, 1
          %s254 = smul.u32 %s253, 8
        $region32: #{tpu_custom_call.1} parent=23 // pred_fallthru
          _
        // Predicated region
        $region33: #{tpu_custom_call.1} parent=23 // pred_check
          %p255 = pneg %p114
        $region34: #{tpu_custom_call.1} parent=23 // pred_check_branch
          %257 = sbr.rel (%p255) target = $region36
        $region35: #{tpu_custom_call.1} parent=23 // pred_region
          %s258 = sadd.s32 %s22, 1
          %s259 = smul.u32 %s258, 8
          %s260 = sadd.s32 %s259, 1
          %p261 = scmp.lt.s32.totalorder %s21, 1
          %s262 = scalar_select %p261, %s21, 1
          %p263 = scmp.lt.s32.totalorder %s260, 17
          %s264 = scalar_select %p263, %s260, 17
          %s265 = smul.addr %s264, 3
          %s266 = smul.addr %s262, 54
          %s267 = sadd.s32 %s265, %s266
          %s268 = smul.addr %s267, 4
          %s269 = scalar_lea.vmem %s2, %s268
          %s270 = sadd.s32 %s22, 1
          %s271 = smul.u32 %s270, 8
          %s272 = sadd.s32 %s271, 1
        $region36: #{tpu_custom_call.1} parent=23 // pred_fallthru
          _
      $region24: #{tpu_custom_call.1} parent=5 // pred_fallthru
        _
      %p273 = scmp.le.s32.totalorder 1, %s14
      %p274 = scmp.lt.s32.totalorder %s14, 5
      %p275 = pnand %p273, %p274
      %p276 = pneg %p275
      // Predicated region
      $region37: #{tpu_custom_call.1} parent=5 // pred_check
        _
      $region38: #{tpu_custom_call.1} parent=5 // pred_check_branch
        %278 = sbr.rel (%p275) target = $region40
      $region39: #{tpu_custom_call.1} parent=5 // pred_region
        %s279 = ssub.s32 %s14, 1
        %s280 = smul.u32 8, %s24
        %s281 = ssub.s32 18, %s280
        %p282 = scmp.lt.s32.totalorder %s281, 8
        %s283 = scalar_select %p282, %s281, 8
        %s284 = smul.u32 4, %s283
        %s285 = smul.u32 %s284, 3
        %p286 = scmp.lt.s32.totalorder %s23, 1
        %s287 = scalar_select %p286, %s23, 1
        %p288 = scmp.lt.s32.totalorder %s280, 17
        %s289 = scalar_select %p288, %s280, 17
        %s290 = smul.addr %s289, 3
        %s291 = smul.addr %s287, 54
        %s292 = sadd.s32 %s290, %s291
        %s293 = smul.addr %s292, 4
        %s294 = scalar_lea.vmem %s0, %s293
        %p295 = pneg %p54
        %p296 = pneg %p51
        %s297 = sadd.s32 %s24, 1
        %s298 = smul.u32 %s297, 8
        %p299 = scmp.lt.s32.totalorder %s23, 1
        %s300 = scalar_select %p299, %s23, 1
        %p301 = scmp.lt.s32.totalorder %s298, 17
        %s302 = scalar_select %p301, %s298, 17
        %s303 = smul.addr %s302, 3
        %s304 = smul.addr %s300, 54
        %s305 = sadd.s32 %s303, %s304
        %s306 = smul.addr %s305, 4
        %s307 = scalar_lea.vmem %s1, %s306
        %p308 = pneg %p86
        %p309 = pneg %p83
        %s310 = sadd.s32 %s24, 1
        %s311 = smul.u32 %s310, 8
        %s312 = sadd.s32 %s311, 1
        %p313 = scmp.lt.s32.totalorder %s23, 1
        %s314 = scalar_select %p313, %s23, 1
        %p315 = scmp.lt.s32.totalorder %s312, 17
        %s316 = scalar_select %p315, %s312, 17
        %s317 = smul.addr %s316, 3
        %s318 = smul.addr %s314, 54
        %s319 = sadd.s32 %s317, %s318
        %s320 = smul.addr %s319, 4
        %s321 = scalar_lea.vmem %s2, %s320
        %p322 = pneg %p120
        %p323 = pneg %p117
        %p324 = pneg %p141
        %p325 = pneg %p138
        %p326 = pneg %p162
        %p327 = pneg %p159
        %p328 = pneg %p190
        %p329 = pneg %p187
        %s330 = sand.u32 %s177, 1
        %s331 = scalar_lea.sflag [#allocation3], %s330
        %s332 = sand.u32 %s177, 1
        %s333 = smul.addr %s332, 64
        %s334 = scalar_lea.vmem [#allocation2], %s333
        %s335 = smul.u32 8, %s24
        %s336 = ssub.s32 18, %s335
        %p337 = scmp.lt.s32.totalorder %s336, 8
        %s338 = scalar_select %p337, %s336, 8
        %s339 = smul.u32 4, %s338
        %s340 = smul.u32 %s339, 3
        %p341 = scmp.lt.s32.totalorder %s23, 1
        %s342 = scalar_select %p341, %s23, 1
        %p343 = scmp.lt.s32.totalorder %s335, 17
        %s344 = scalar_select %p343, %s335, 17
        %s345 = smul.addr %s344, 3
        %s346 = smul.addr %s342, 54
        %s347 = sadd.s32 %s345, %s346
        %s348 = smul.addr %s347, 4
        %s349 = scalar_lea.vmem %s0, %s348
        %s350 = smul.u32 8, %s24
        %s351 = ssub.s32 18, %s350
        %p352 = scmp.lt.s32.totalorder %s351, 8
        %s353 = scalar_select %p352, %s351, 8
        %s354 = smul.u32 4, %s353
        %s355 = smul.u32 %s354, 3
        %s356 = sadd.s32 %s24, 1
        %s357 = smul.u32 %s356, 8
        %p358 = scmp.lt.s32.totalorder %s23, 1
        %s359 = scalar_select %p358, %s23, 1
        %p360 = scmp.lt.s32.totalorder %s357, 17
        %s361 = scalar_select %p360, %s357, 17
        %s362 = smul.addr %s361, 3
        %s363 = smul.addr %s359, 54
        %s364 = sadd.s32 %s362, %s363
        %s365 = smul.addr %s364, 4
        %s366 = scalar_lea.vmem %s1, %s365
        %s367 = sadd.s32 %s24, 1
        %s368 = smul.u32 %s367, 8
        %s369 = sadd.s32 %s24, 1
        %s370 = smul.u32 %s369, 8
        %s371 = sadd.s32 %s370, 1
        %p372 = scmp.lt.s32.totalorder %s23, 1
        %s373 = scalar_select %p372, %s23, 1
        %p374 = scmp.lt.s32.totalorder %s371, 17
        %s375 = scalar_select %p374, %s371, 17
        %s376 = smul.addr %s375, 3
        %s377 = smul.addr %s373, 54
        %s378 = sadd.s32 %s376, %s377
        %s379 = smul.addr %s378, 4
        %s380 = scalar_lea.vmem %s2, %s379
        %s381 = sadd.s32 %s24, 1
        %s382 = smul.u32 %s381, 8
        %s383 = sadd.s32 %s382, 1
        %s384 = smul.u32 8, %s24
        %v385 = vld [vmem:[%s349] sm:$0xf]
        %v386 = vld [vmem:[%s349 + $0x4] sm:$0xf]
        %v387 = vld [vmem:[%s3] sm:$0x1]
        %v388 = vunpack.c.l.bf16 %v385
        %v389 = vunpack.c.l.bf16 %v386
        %v390 = vunpack.c.l.bf16 %v387
        %392 = vset.pattern.permute.xlu0 0
        %393 = vperm.xlu0 %392, %v388
        %v394 = vpop.permute.xlu0 %393
        %397 = vset.pattern.permute.xlu0 0
        %398 = vperm.xlu0 %397, %v389
        %v399 = vpop.permute.xlu0 %398
        %v401 = vperm.slane %v390, 0
        %v402 = vmul.f32 %v394, %v401
        %v403 = vmul.f32 %v399, %v401
        %v404 = vld [vmem:[%s349] sm:$0xf]
        %v405 = vld [vmem:[%s349 + $0x4] sm:$0xf]
        %v406 = vld [vmem:[%s349 + $0x8] sm:$0x1]
        %s407 = scalar_lea.vmem %s3, 1
        %v408 = vld [vmem:[%s407] sm:$0x1]
        %v409 = vunpack.c.l.bf16 %v404
        %v410 = vunpack.c.l.bf16 %v405
        %v411 = vunpack.c.l.bf16 %v406
        %v412 = vunpack.c.l.bf16 %v408
        %414 = vset.pattern.permute.xlu0 0
        %415 = vperm.xlu0 %414, %v409
        %v416 = vpop.permute.xlu0 %415
        %419 = vset.pattern.permute.xlu0 0
        %420 = vperm.xlu0 %419, %v410
        %v421 = vpop.permute.xlu0 %420
        %424 = vset.pattern.permute.xlu0 0
        %425 = vperm.xlu0 %424, %v411
        %v426 = vpop.permute.xlu0 %425
        %v428 = vperm.slane %v412, 0
        %v429 = vmul.f32 %v416, %v428
        %v430 = vmul.f32 %v421, %v428
        %v431 = vmul.f32 %v426, %v428
        %vm435 = vcmask 1046528
        %v436 = vrot.slane %v429, 1
        %v437 = vrot.slane %v430, 1
        %v438 = vsel %vm435, %v436, %v437
        %v439 = vrot.slane %v431, 1
        %v440 = vsel %vm435, %v437, %v439
        %v443 = vadd.f32 %v402, %v438
        %v444 = vadd.f32 %v403, %v440
        %v445 = vld [vmem:[%s349] sm:$0xe]
        %s446 = scalar_lea.vmem %s3, 2
        %v447 = vld [vmem:[%s446] sm:$0x1]
        %v448 = vunpack.c.l.bf16 %v445
        %v449 = vunpack.c.l.bf16 %v447
        %451 = vset.pattern.permute.xlu0 0
        %452 = vperm.xlu0 %451, %v448
        %v453 = vpop.permute.xlu0 %452
        %v455 = vperm.slane %v449, 0
        %v456 = vmul.f32 %v453, %v455
        %v457 = vmul.f32 %v421, %v455
        %v458 = vmul.f32 %v426, %v455
        %vm462 = vcmask 1045504
        %v463 = vrot.slane %v456, 2
        %v464 = vrot.slane %v457, 2
        %v465 = vsel %vm462, %v463, %v464
        %v466 = vrot.slane %v458, 2
        %v467 = vsel %vm462, %v464, %v466
        %v470 = vadd.f32 %v443, %v465
        %v471 = vadd.f32 %v444, %v467
        %s472 = scalar_lea.vmem %s349, 12
        %v473 = vld [vmem:[%s472] sm:$0xf]
        %v474 = vld [vmem:[%s472 + $0x4] sm:$0xf]
        %s475 = scalar_lea.vmem %s3, 3
        %v476 = vld [vmem:[%s475] sm:$0x1]
        %v477 = vunpack.c.l.bf16 %v473
        %v478 = vunpack.c.l.bf16 %v474
        %v479 = vunpack.c.l.bf16 %v476
        %481 = vset.pattern.permute.xlu0 0
        %482 = vperm.xlu0 %481, %v477
        %v483 = vpop.permute.xlu0 %482
        %486 = vset.pattern.permute.xlu0 0
        %487 = vperm.xlu0 %486, %v478
        %v488 = vpop.permute.xlu0 %487
        %v490 = vperm.slane %v479, 0
        %v491 = vmul.f32 %v483, %v490
        %v492 = vmul.f32 %v488, %v490
        %v493 = vadd.f32 %v470, %v491
        %v494 = vadd.f32 %v471, %v492
        %v495 = vld [vmem:[%s472] sm:$0xf]
        %v496 = vld [vmem:[%s472 + $0x4] sm:$0xf]
        %v497 = vld [vmem:[%s472 + $0x8] sm:$0x1]
        %s498 = scalar_lea.vmem %s3, 4
        %v499 = vld [vmem:[%s498] sm:$0x1]
        %v500 = vunpack.c.l.bf16 %v495
        %v501 = vunpack.c.l.bf16 %v496
        %v502 = vunpack.c.l.bf16 %v497
        %v503 = vunpack.c.l.bf16 %v499
        %505 = vset.pattern.permute.xlu0 0
        %506 = vperm.xlu0 %505, %v500
        %v507 = vpop.permute.xlu0 %506
        %510 = vset.pattern.permute.xlu0 0
        %511 = vperm.xlu0 %510, %v501
        %v512 = vpop.permute.xlu0 %511
        %515 = vset.pattern.permute.xlu0 0
        %516 = vperm.xlu0 %515, %v502
        %v517 = vpop.permute.xlu0 %516
        %v519 = vperm.slane %v503, 0
        %v520 = vmul.f32 %v507, %v519
        %v521 = vmul.f32 %v512, %v519
        %v522 = vmul.f32 %v517, %v519
        %v526 = vrot.slane %v520, 1
        %v527 = vrot.slane %v521, 1
        %v528 = vsel %vm435, %v526, %v527
        %v529 = vrot.slane %v522, 1
        %v530 = vsel %vm435, %v527, %v529
        %v533 = vadd.f32 %v493, %v528
        %v534 = vadd.f32 %v494, %v530
        %v535 = vld [vmem:[%s472] sm:$0xe]
        %s536 = scalar_lea.vmem %s3, 5
        %v537 = vld [vmem:[%s536] sm:$0x1]
        %v538 = vunpack.c.l.bf16 %v535
        %v539 = vunpack.c.l.bf16 %v537
        %541 = vset.pattern.permute.xlu0 0
        %542 = vperm.xlu0 %541, %v538
        %v543 = vpop.permute.xlu0 %542
        %v545 = vperm.slane %v539, 0
        %v546 = vmul.f32 %v543, %v545
        %v547 = vmul.f32 %v512, %v545
        %v548 = vmul.f32 %v517, %v545
        %v552 = vrot.slane %v546, 2
        %v553 = vrot.slane %v547, 2
        %v554 = vsel %vm462, %v552, %v553
        %v555 = vrot.slane %v548, 2
        %v556 = vsel %vm462, %v553, %v555
        %v559 = vadd.f32 %v533, %v554
        %v560 = vadd.f32 %v534, %v556
        %s561 = scalar_lea.vmem %s349, 24
        %v562 = vld [vmem:[%s561] sm:$0xf]
        %v563 = vld [vmem:[%s561 + $0x4] sm:$0xf]
        %s564 = scalar_lea.vmem %s3, 6
        %v565 = vld [vmem:[%s564] sm:$0x1]
        %v566 = vunpack.c.l.bf16 %v562
        %v567 = vunpack.c.l.bf16 %v563
        %v568 = vunpack.c.l.bf16 %v565
        %570 = vset.pattern.permute.xlu0 0
        %571 = vperm.xlu0 %570, %v566
        %v572 = vpop.permute.xlu0 %571
        %575 = vset.pattern.permute.xlu0 0
        %576 = vperm.xlu0 %575, %v567
        %v577 = vpop.permute.xlu0 %576
        %v579 = vperm.slane %v568, 0
        %v580 = vmul.f32 %v572, %v579
        %v581 = vmul.f32 %v577, %v579
        %v582 = vadd.f32 %v559, %v580
        %v583 = vadd.f32 %v560, %v581
        %v584 = vld [vmem:[%s561] sm:$0xf]
        %v585 = vld [vmem:[%s561 + $0x4] sm:$0xf]
        %v586 = vld [vmem:[%s561 + $0x8] sm:$0x1]
        %s587 = scalar_lea.vmem %s3, 7
        %v588 = vld [vmem:[%s587] sm:$0x1]
        %v589 = vunpack.c.l.bf16 %v584
        %v590 = vunpack.c.l.bf16 %v585
        %v591 = vunpack.c.l.bf16 %v586
        %v592 = vunpack.c.l.bf16 %v588
        %594 = vset.pattern.permute.xlu0 0
        %595 = vperm.xlu0 %594, %v589
        %v596 = vpop.permute.xlu0 %595
        %599 = vset.pattern.permute.xlu0 0
        %600 = vperm.xlu0 %599, %v590
        %v601 = vpop.permute.xlu0 %600
        %604 = vset.pattern.permute.xlu0 0
        %605 = vperm.xlu0 %604, %v591
        %v606 = vpop.permute.xlu0 %605
        %v608 = vperm.slane %v592, 0
        %v609 = vmul.f32 %v596, %v608
        %v610 = vmul.f32 %v601, %v608
        %v611 = vmul.f32 %v606, %v608
        %v615 = vrot.slane %v609, 1
        %v616 = vrot.slane %v610, 1
        %v617 = vsel %vm435, %v615, %v616
        %v618 = vrot.slane %v611, 1
        %v619 = vsel %vm435, %v616, %v618
        %v622 = vadd.f32 %v582, %v617
        %v623 = vadd.f32 %v583, %v619
        %v624 = vld [vmem:[%s561] sm:$0xe]
        %s625 = scalar_lea.vmem %s3, 8
        %v626 = vld [vmem:[%s625] sm:$0x1]
        %v627 = vunpack.c.l.bf16 %v624
        %v628 = vunpack.c.l.bf16 %v626
        %630 = vset.pattern.permute.xlu0 0
        %631 = vperm.xlu0 %630, %v627
        %v632 = vpop.permute.xlu0 %631
        %v634 = vperm.slane %v628, 0
        %v635 = vmul.f32 %v632, %v634
        %v636 = vmul.f32 %v601, %v634
        %v637 = vmul.f32 %v606, %v634
        %v641 = vrot.slane %v635, 2
        %v642 = vrot.slane %v636, 2
        %v643 = vsel %vm462, %v641, %v642
        %v644 = vrot.slane %v637, 2
        %v645 = vsel %vm462, %v642, %v644
        %v648 = vadd.f32 %v622, %v643
        %v649 = vadd.f32 %v623, %v645
        %v650 = vld [vmem:[%s4] sm:$0x1]
        %v652 = vperm.slane %v650, 0
        %v654 = vadd.f32 %v648, %v652
        %v655 = vadd.f32 %v649, %v652
        %v656 = vmax.f32 %v654, 0.0
        %v657 = vmax.f32 %v655, 0.0
        %v658 = vpack.c.bf16 %v656, %v656
        %v659 = vpack.c.bf16 %v657, %v657
        %660 = vst [vmem:[%s334] sm:$0xf] %v658
        %661 = vst [vmem:[%s334 + $0x4] sm:$0xf] %v659
        %v662 = vld [vmem:[%s472] sm:$0xf]
        %v663 = vld [vmem:[%s472 + $0x4] sm:$0xf]
        %v664 = vld [vmem:[%s3] sm:$0x1]
        %v665 = vunpack.c.l.bf16 %v662
        %v666 = vunpack.c.l.bf16 %v663
        %v667 = vunpack.c.l.bf16 %v664
        %669 = vset.pattern.permute.xlu0 0
        %670 = vperm.xlu0 %669, %v665
        %v671 = vpop.permute.xlu0 %670
        %674 = vset.pattern.permute.xlu0 0
        %675 = vperm.xlu0 %674, %v666
        %v676 = vpop.permute.xlu0 %675
        %v678 = vperm.slane %v667, 0
        %v679 = vmul.f32 %v671, %v678
        %v680 = vmul.f32 %v676, %v678
        %v681 = vld [vmem:[%s472] sm:$0xf]
        %v682 = vld [vmem:[%s472 + $0x4] sm:$0xf]
        %v683 = vld [vmem:[%s472 + $0x8] sm:$0x1]
        %v684 = vld [vmem:[%s407] sm:$0x1]
        %v685 = vunpack.c.l.bf16 %v681
        %v686 = vunpack.c.l.bf16 %v682
        %v687 = vunpack.c.l.bf16 %v683
        %v688 = vunpack.c.l.bf16 %v684
        %690 = vset.pattern.permute.xlu0 0
        %691 = vperm.xlu0 %690, %v685
        %v692 = vpop.permute.xlu0 %691
        %695 = vset.pattern.permute.xlu0 0
        %696 = vperm.xlu0 %695, %v686
        %v697 = vpop.permute.xlu0 %696
        %700 = vset.pattern.permute.xlu0 0
        %701 = vperm.xlu0 %700, %v687
        %v702 = vpop.permute.xlu0 %701
        %v704 = vperm.slane %v688, 0
        %v705 = vmul.f32 %v692, %v704
        %v706 = vmul.f32 %v697, %v704
        %v707 = vmul.f32 %v702, %v704
        %v711 = vrot.slane %v705, 1
        %v712 = vrot.slane %v706, 1
        %v713 = vsel %vm435, %v711, %v712
        %v714 = vrot.slane %v707, 1
        %v715 = vsel %vm435, %v712, %v714
        %v718 = vadd.f32 %v679, %v713
        %v719 = vadd.f32 %v680, %v715
        %v720 = vld [vmem:[%s472] sm:$0xe]
        %v721 = vld [vmem:[%s446] sm:$0x1]
        %v722 = vunpack.c.l.bf16 %v720
        %v723 = vunpack.c.l.bf16 %v721
        %725 = vset.pattern.permute.xlu0 0
        %726 = vperm.xlu0 %725, %v722
        %v727 = vpop.permute.xlu0 %726
        %v729 = vperm.slane %v723, 0
        %v730 = vmul.f32 %v727, %v729
        %v731 = vmul.f32 %v697, %v729
        %v732 = vmul.f32 %v702, %v729
        %v736 = vrot.slane %v730, 2
        %v737 = vrot.slane %v731, 2
        %v738 = vsel %vm462, %v736, %v737
        %v739 = vrot.slane %v732, 2
        %v740 = vsel %vm462, %v737, %v739
        %v743 = vadd.f32 %v718, %v738
        %v744 = vadd.f32 %v719, %v740
        %v745 = vld [vmem:[%s561] sm:$0xf]
        %v746 = vld [vmem:[%s561 + $0x4] sm:$0xf]
        %v747 = vld [vmem:[%s475] sm:$0x1]
        %v748 = vunpack.c.l.bf16 %v745
        %v749 = vunpack.c.l.bf16 %v746
        %v750 = vunpack.c.l.bf16 %v747
        %752 = vset.pattern.permute.xlu0 0
        %753 = vperm.xlu0 %752, %v748
        %v754 = vpop.permute.xlu0 %753
        %757 = vset.pattern.permute.xlu0 0
        %758 = vperm.xlu0 %757, %v749
        %v759 = vpop.permute.xlu0 %758
        %v761 = vperm.slane %v750, 0
        %v762 = vmul.f32 %v754, %v761
        %v763 = vmul.f32 %v759, %v761
        %v764 = vadd.f32 %v743, %v762
        %v765 = vadd.f32 %v744, %v763
        %v766 = vld [vmem:[%s561] sm:$0xf]
        %v767 = vld [vmem:[%s561 + $0x4] sm:$0xf]
        %v768 = vld [vmem:[%s561 + $0x8] sm:$0x1]
        %v769 = vld [vmem:[%s498] sm:$0x1]
        %v770 = vunpack.c.l.bf16 %v766
        %v771 = vunpack.c.l.bf16 %v767
        %v772 = vunpack.c.l.bf16 %v768
        %v773 = vunpack.c.l.bf16 %v769
        %775 = vset.pattern.permute.xlu0 0
        %776 = vperm.xlu0 %775, %v770
        %v777 = vpop.permute.xlu0 %776
        %780 = vset.pattern.permute.xlu0 0
        %781 = vperm.xlu0 %780, %v771
        %v782 = vpop.permute.xlu0 %781
        %785 = vset.pattern.permute.xlu0 0
        %786 = vperm.xlu0 %785, %v772
        %v787 = vpop.permute.xlu0 %786
        %v789 = vperm.slane %v773, 0
        %v790 = vmul.f32 %v777, %v789
        %v791 = vmul.f32 %v782, %v789
        %v792 = vmul.f32 %v787, %v789
        %v796 = vrot.slane %v790, 1
        %v797 = vrot.slane %v791, 1
        %v798 = vsel %vm435, %v796, %v797
        %v799 = vrot.slane %v792, 1
        %v800 = vsel %vm435, %v797, %v799
        %v803 = vadd.f32 %v764, %v798
        %v804 = vadd.f32 %v765, %v800
        %v805 = vld [vmem:[%s561] sm:$0xe]
        %v806 = vld [vmem:[%s536] sm:$0x1]
        %v807 = vunpack.c.l.bf16 %v805
        %v808 = vunpack.c.l.bf16 %v806
        %810 = vset.pattern.permute.xlu0 0
        %811 = vperm.xlu0 %810, %v807
        %v812 = vpop.permute.xlu0 %811
        %v814 = vperm.slane %v808, 0
        %v815 = vmul.f32 %v812, %v814
        %v816 = vmul.f32 %v782, %v814
        %v817 = vmul.f32 %v787, %v814
        %v821 = vrot.slane %v815, 2
        %v822 = vrot.slane %v816, 2
        %v823 = vsel %vm462, %v821, %v822
        %v824 = vrot.slane %v817, 2
        %v825 = vsel %vm462, %v822, %v824
        %v828 = vadd.f32 %v803, %v823
        %v829 = vadd.f32 %v804, %v825
        %s830 = scalar_lea.vmem %s349, 36
        %v831 = vld [vmem:[%s830] sm:$0xf]
        %v832 = vld [vmem:[%s830 + $0x4] sm:$0xf]
        %v833 = vld [vmem:[%s564] sm:$0x1]
        %v834 = vunpack.c.l.bf16 %v831
        %v835 = vunpack.c.l.bf16 %v832
        %v836 = vunpack.c.l.bf16 %v833
        %838 = vset.pattern.permute.xlu0 0
        %839 = vperm.xlu0 %838, %v834
        %v840 = vpop.permute.xlu0 %839
        %843 = vset.pattern.permute.xlu0 0
        %844 = vperm.xlu0 %843, %v835
        %v845 = vpop.permute.xlu0 %844
        %v847 = vperm.slane %v836, 0
        %v848 = vmul.f32 %v840, %v847
        %v849 = vmul.f32 %v845, %v847
        %v850 = vadd.f32 %v828, %v848
        %v851 = vadd.f32 %v829, %v849
        %v852 = vld [vmem:[%s830] sm:$0xf]
        %v853 = vld [vmem:[%s830 + $0x4] sm:$0xf]
        %v854 = vld [vmem:[%s830 + $0x8] sm:$0x1]
        %v855 = vld [vmem:[%s587] sm:$0x1]
        %v856 = vunpack.c.l.bf16 %v852
        %v857 = vunpack.c.l.bf16 %v853
        %v858 = vunpack.c.l.bf16 %v854
        %v859 = vunpack.c.l.bf16 %v855
        %861 = vset.pattern.permute.xlu0 0
        %862 = vperm.xlu0 %861, %v856
        %v863 = vpop.permute.xlu0 %862
        %866 = vset.pattern.permute.xlu0 0
        %867 = vperm.xlu0 %866, %v857
        %v868 = vpop.permute.xlu0 %867
        %871 = vset.pattern.permute.xlu0 0
        %872 = vperm.xlu0 %871, %v858
        %v873 = vpop.permute.xlu0 %872
        %v875 = vperm.slane %v859, 0
        %v876 = vmul.f32 %v863, %v875
        %v877 = vmul.f32 %v868, %v875
        %v878 = vmul.f32 %v873, %v875
        %v882 = vrot.slane %v876, 1
        %v883 = vrot.slane %v877, 1
        %v884 = vsel %vm435, %v882, %v883
        %v885 = vrot.slane %v878, 1
        %v886 = vsel %vm435, %v883, %v885
        %v889 = vadd.f32 %v850, %v884
        %v890 = vadd.f32 %v851, %v886
        %v891 = vld [vmem:[%s830] sm:$0xe]
        %v892 = vld [vmem:[%s625] sm:$0x1]
        %v893 = vunpack.c.l.bf16 %v891
        %v894 = vunpack.c.l.bf16 %v892
        %896 = vset.pattern.permute.xlu0 0
        %897 = vperm.xlu0 %896, %v893
        %v898 = vpop.permute.xlu0 %897
        %v900 = vperm.slane %v894, 0
        %v901 = vmul.f32 %v898, %v900
        %v902 = vmul.f32 %v868, %v900
        %v903 = vmul.f32 %v873, %v900
        %v907 = vrot.slane %v901, 2
        %v908 = vrot.slane %v902, 2
        %v909 = vsel %vm462, %v907, %v908
        %v910 = vrot.slane %v903, 2
        %v911 = vsel %vm462, %v908, %v910
        %v914 = vadd.f32 %v889, %v909
        %v915 = vadd.f32 %v890, %v911
        %v916 = vld [vmem:[%s4] sm:$0x1]
        %v918 = vperm.slane %v916, 0
        %v920 = vadd.f32 %v914, %v918
        %v921 = vadd.f32 %v915, %v918
        %v922 = vmax.f32 %v920, 0.0
        %v923 = vmax.f32 %v921, 0.0
        %v924 = vpack.c.bf16 %v922, %v922
        %v925 = vpack.c.bf16 %v923, %v923
        %s926 = scalar_lea.vmem %s334, 8 [#allocation2]
        %927 = vst [vmem:[%s926] sm:$0xf] %v924
        %928 = vst [vmem:[%s926 + $0x4] sm:$0xf] %v925
        %v929 = vld [vmem:[%s561] sm:$0xf]
        %v930 = vld [vmem:[%s561 + $0x4] sm:$0xf]
        %v931 = vld [vmem:[%s3] sm:$0x1]
        %v932 = vunpack.c.l.bf16 %v929
        %v933 = vunpack.c.l.bf16 %v930
        %v934 = vunpack.c.l.bf16 %v931
        %936 = vset.pattern.permute.xlu0 0
        %937 = vperm.xlu0 %936, %v932
        %v938 = vpop.permute.xlu0 %937
        %941 = vset.pattern.permute.xlu0 0
        %942 = vperm.xlu0 %941, %v933
        %v943 = vpop.permute.xlu0 %942
        %v945 = vperm.slane %v934, 0
        %v946 = vmul.f32 %v938, %v945
        %v947 = vmul.f32 %v943, %v945
        %v948 = vld [vmem:[%s561] sm:$0xf]
        %v949 = vld [vmem:[%s561 + $0x4] sm:$0xf]
        %v950 = vld [vmem:[%s561 + $0x8] sm:$0x1]
        %v951 = vld [vmem:[%s407] sm:$0x1]
        %v952 = vunpack.c.l.bf16 %v948
        %v953 = vunpack.c.l.bf16 %v949
        %v954 = vunpack.c.l.bf16 %v950
        %v955 = vunpack.c.l.bf16 %v951
        %957 = vset.pattern.permute.xlu0 0
        %958 = vperm.xlu0 %957, %v952
        %v959 = vpop.permute.xlu0 %958
        %962 = vset.pattern.permute.xlu0 0
        %963 = vperm.xlu0 %962, %v953
        %v964 = vpop.permute.xlu0 %963
        %967 = vset.pattern.permute.xlu0 0
        %968 = vperm.xlu0 %967, %v954
        %v969 = vpop.permute.xlu0 %968
        %v971 = vperm.slane %v955, 0
        %v972 = vmul.f32 %v959, %v971
        %v973 = vmul.f32 %v964, %v971
        %v974 = vmul.f32 %v969, %v971
        %v978 = vrot.slane %v972, 1
        %v979 = vrot.slane %v973, 1
        %v980 = vsel %vm435, %v978, %v979
        %v981 = vrot.slane %v974, 1
        %v982 = vsel %vm435, %v979, %v981
        %v985 = vadd.f32 %v946, %v980
        %v986 = vadd.f32 %v947, %v982
        %v987 = vld [vmem:[%s561] sm:$0xe]
        %v988 = vld [vmem:[%s446] sm:$0x1]
        %v989 = vunpack.c.l.bf16 %v987
        %v990 = vunpack.c.l.bf16 %v988
        %992 = vset.pattern.permute.xlu0 0
        %993 = vperm.xlu0 %992, %v989
        %v994 = vpop.permute.xlu0 %993
        %v996 = vperm.slane %v990, 0
        %v997 = vmul.f32 %v994, %v996
        %v998 = vmul.f32 %v964, %v996
        %v999 = vmul.f32 %v969, %v996
        %v1003 = vrot.slane %v997, 2
        %v1004 = vrot.slane %v998, 2
        %v1005 = vsel %vm462, %v1003, %v1004
        %v1006 = vrot.slane %v999, 2
        %v1007 = vsel %vm462, %v1004, %v1006
        %v1010 = vadd.f32 %v985, %v1005
        %v1011 = vadd.f32 %v986, %v1007
        %v1012 = vld [vmem:[%s830] sm:$0xf]
        %v1013 = vld [vmem:[%s830 + $0x4] sm:$0xf]
        %v1014 = vld [vmem:[%s475] sm:$0x1]
        %v1015 = vunpack.c.l.bf16 %v1012
        %v1016 = vunpack.c.l.bf16 %v1013
        %v1017 = vunpack.c.l.bf16 %v1014
        %1019 = vset.pattern.permute.xlu0 0
        %1020 = vperm.xlu0 %1019, %v1015
        %v1021 = vpop.permute.xlu0 %1020
        %1024 = vset.pattern.permute.xlu0 0
        %1025 = vperm.xlu0 %1024, %v1016
        %v1026 = vpop.permute.xlu0 %1025
        %v1028 = vperm.slane %v1017, 0
        %v1029 = vmul.f32 %v1021, %v1028
        %v1030 = vmul.f32 %v1026, %v1028
        %v1031 = vadd.f32 %v1010, %v1029
        %v1032 = vadd.f32 %v1011, %v1030
        %v1033 = vld [vmem:[%s830] sm:$0xf]
        %v1034 = vld [vmem:[%s830 + $0x4] sm:$0xf]
        %v1035 = vld [vmem:[%s830 + $0x8] sm:$0x1]
        %v1036 = vld [vmem:[%s498] sm:$0x1]
        %v1037 = vunpack.c.l.bf16 %v1033
        %v1038 = vunpack.c.l.bf16 %v1034
        %v1039 = vunpack.c.l.bf16 %v1035
        %v1040 = vunpack.c.l.bf16 %v1036
        %1042 = vset.pattern.permute.xlu0 0
        %1043 = vperm.xlu0 %1042, %v1037
        %v1044 = vpop.permute.xlu0 %1043
        %1047 = vset.pattern.permute.xlu0 0
        %1048 = vperm.xlu0 %1047, %v1038
        %v1049 = vpop.permute.xlu0 %1048
        %1052 = vset.pattern.permute.xlu0 0
        %1053 = vperm.xlu0 %1052, %v1039
        %v1054 = vpop.permute.xlu0 %1053
        %v1056 = vperm.slane %v1040, 0
        %v1057 = vmul.f32 %v1044, %v1056
        %v1058 = vmul.f32 %v1049, %v1056
        %v1059 = vmul.f32 %v1054, %v1056
        %v1063 = vrot.slane %v1057, 1
        %v1064 = vrot.slane %v1058, 1
        %v1065 = vsel %vm435, %v1063, %v1064
        %v1066 = vrot.slane %v1059, 1
        %v1067 = vsel %vm435, %v1064, %v1066
        %v1070 = vadd.f32 %v1031, %v1065
        %v1071 = vadd.f32 %v1032, %v1067
        %v1072 = vld [vmem:[%s830] sm:$0xe]
        %v1073 = vld [vmem:[%s536] sm:$0x1]
        %v1074 = vunpack.c.l.bf16 %v1072
        %v1075 = vunpack.c.l.bf16 %v1073
        %1077 = vset.pattern.permute.xlu0 0
        %1078 = vperm.xlu0 %1077, %v1074
        %v1079 = vpop.permute.xlu0 %1078
        %v1081 = vperm.slane %v1075, 0
        %v1082 = vmul.f32 %v1079, %v1081
        %v1083 = vmul.f32 %v1049, %v1081
        %v1084 = vmul.f32 %v1054, %v1081
        %v1088 = vrot.slane %v1082, 2
        %v1089 = vrot.slane %v1083, 2
        %v1090 = vsel %vm462, %v1088, %v1089
        %v1091 = vrot.slane %v1084, 2
        %v1092 = vsel %vm462, %v1089, %v1091
        %v1095 = vadd.f32 %v1070, %v1090
        %v1096 = vadd.f32 %v1071, %v1092
        %s1097 = scalar_lea.vmem %s349, 48
        %v1098 = vld [vmem:[%s1097] sm:$0xf]
        %v1099 = vld [vmem:[%s1097 + $0x4] sm:$0xf]
        %v1100 = vld [vmem:[%s564] sm:$0x1]
        %v1101 = vunpack.c.l.bf16 %v1098
        %v1102 = vunpack.c.l.bf16 %v1099
        %v1103 = vunpack.c.l.bf16 %v1100
        %1105 = vset.pattern.permute.xlu0 0
        %1106 = vperm.xlu0 %1105, %v1101
        %v1107 = vpop.permute.xlu0 %1106
        %1110 = vset.pattern.permute.xlu0 0
        %1111 = vperm.xlu0 %1110, %v1102
        %v1112 = vpop.permute.xlu0 %1111
        %v1114 = vperm.slane %v1103, 0
        %v1115 = vmul.f32 %v1107, %v1114
        %v1116 = vmul.f32 %v1112, %v1114
        %v1117 = vadd.f32 %v1095, %v1115
        %v1118 = vadd.f32 %v1096, %v1116
        %v1119 = vld [vmem:[%s1097] sm:$0xf]
        %v1120 = vld [vmem:[%s1097 + $0x4] sm:$0xf]
        %v1121 = vld [vmem:[%s1097 + $0x8] sm:$0x1]
        %v1122 = vld [vmem:[%s587] sm:$0x1]
        %v1123 = vunpack.c.l.bf16 %v1119
        %v1124 = vunpack.c.l.bf16 %v1120
        %v1125 = vunpack.c.l.bf16 %v1121
        %v1126 = vunpack.c.l.bf16 %v1122
        %1128 = vset.pattern.permute.xlu0 0
        %1129 = vperm.xlu0 %1128, %v1123
        %v1130 = vpop.permute.xlu0 %1129
        %1133 = vset.pattern.permute.xlu0 0
        %1134 = vperm.xlu0 %1133, %v1124
        %v1135 = vpop.permute.xlu0 %1134
        %1138 = vset.pattern.permute.xlu0 0
        %1139 = vperm.xlu0 %1138, %v1125
        %v1140 = vpop.permute.xlu0 %1139
        %v1142 = vperm.slane %v1126, 0
        %v1143 = vmul.f32 %v1130, %v1142
        %v1144 = vmul.f32 %v1135, %v1142
        %v1145 = vmul.f32 %v1140, %v1142
        %v1149 = vrot.slane %v1143, 1
        %v1150 = vrot.slane %v1144, 1
        %v1151 = vsel %vm435, %v1149, %v1150
        %v1152 = vrot.slane %v1145, 1
        %v1153 = vsel %vm435, %v1150, %v1152
        %v1156 = vadd.f32 %v1117, %v1151
        %v1157 = vadd.f32 %v1118, %v1153
        %v1158 = vld [vmem:[%s1097] sm:$0xe]
        %v1159 = vld [vmem:[%s625] sm:$0x1]
        %v1160 = vunpack.c.l.bf16 %v1158
        %v1161 = vunpack.c.l.bf16 %v1159
        %1163 = vset.pattern.permute.xlu0 0
        %1164 = vperm.xlu0 %1163, %v1160
        %v1165 = vpop.permute.xlu0 %1164
        %v1167 = vperm.slane %v1161, 0
        %v1168 = vmul.f32 %v1165, %v1167
        %v1169 = vmul.f32 %v1135, %v1167
        %v1170 = vmul.f32 %v1140, %v1167
        %v1174 = vrot.slane %v1168, 2
        %v1175 = vrot.slane %v1169, 2
        %v1176 = vsel %vm462, %v1174, %v1175
        %v1177 = vrot.slane %v1170, 2
        %v1178 = vsel %vm462, %v1175, %v1177
        %v1181 = vadd.f32 %v1156, %v1176
        %v1182 = vadd.f32 %v1157, %v1178
        %v1183 = vld [vmem:[%s4] sm:$0x1]
        %v1185 = vperm.slane %v1183, 0
        %v1187 = vadd.f32 %v1181, %v1185
        %v1188 = vadd.f32 %v1182, %v1185
        %v1189 = vmax.f32 %v1187, 0.0
        %v1190 = vmax.f32 %v1188, 0.0
        %v1191 = vpack.c.bf16 %v1189, %v1189
        %v1192 = vpack.c.bf16 %v1190, %v1190
        %s1193 = scalar_lea.vmem %s334, 16 [#allocation2]
        %1194 = vst [vmem:[%s1193] sm:$0xf] %v1191
        %1195 = vst [vmem:[%s1193 + $0x4] sm:$0xf] %v1192
        %v1196 = vld [vmem:[%s830] sm:$0xf]
        %v1197 = vld [vmem:[%s830 + $0x4] sm:$0xf]
        %v1198 = vld [vmem:[%s3] sm:$0x1]
        %v1199 = vunpack.c.l.bf16 %v1196
        %v1200 = vunpack.c.l.bf16 %v1197
        %v1201 = vunpack.c.l.bf16 %v1198
        %1203 = vset.pattern.permute.xlu0 0
        %1204 = vperm.xlu0 %1203, %v1199
        %v1205 = vpop.permute.xlu0 %1204
        %1208 = vset.pattern.permute.xlu0 0
        %1209 = vperm.xlu0 %1208, %v1200
        %v1210 = vpop.permute.xlu0 %1209
        %v1212 = vperm.slane %v1201, 0
        %v1213 = vmul.f32 %v1205, %v1212
        %v1214 = vmul.f32 %v1210, %v1212
        %v1215 = vld [vmem:[%s830] sm:$0xf]
        %v1216 = vld [vmem:[%s830 + $0x4] sm:$0xf]
        %v1217 = vld [vmem:[%s830 + $0x8] sm:$0x1]
        %v1218 = vld [vmem:[%s407] sm:$0x1]
        %v1219 = vunpack.c.l.bf16 %v1215
        %v1220 = vunpack.c.l.bf16 %v1216
        %v1221 = vunpack.c.l.bf16 %v1217
        %v1222 = vunpack.c.l.bf16 %v1218
        %1224 = vset.pattern.permute.xlu0 0
        %1225 = vperm.xlu0 %1224, %v1219
        %v1226 = vpop.permute.xlu0 %1225
        %1229 = vset.pattern.permute.xlu0 0
        %1230 = vperm.xlu0 %1229, %v1220
        %v1231 = vpop.permute.xlu0 %1230
        %1234 = vset.pattern.permute.xlu0 0
        %1235 = vperm.xlu0 %1234, %v1221
        %v1236 = vpop.permute.xlu0 %1235
        %v1238 = vperm.slane %v1222, 0
        %v1239 = vmul.f32 %v1226, %v1238
        %v1240 = vmul.f32 %v1231, %v1238
        %v1241 = vmul.f32 %v1236, %v1238
        %v1245 = vrot.slane %v1239, 1
        %v1246 = vrot.slane %v1240, 1
        %v1247 = vsel %vm435, %v1245, %v1246
        %v1248 = vrot.slane %v1241, 1
        %v1249 = vsel %vm435, %v1246, %v1248
        %v1252 = vadd.f32 %v1213, %v1247
        %v1253 = vadd.f32 %v1214, %v1249
        %v1254 = vld [vmem:[%s830] sm:$0xe]
        %v1255 = vld [vmem:[%s446] sm:$0x1]
        %v1256 = vunpack.c.l.bf16 %v1254
        %v1257 = vunpack.c.l.bf16 %v1255
        %1259 = vset.pattern.permute.xlu0 0
        %1260 = vperm.xlu0 %1259, %v1256
        %v1261 = vpop.permute.xlu0 %1260
        %v1263 = vperm.slane %v1257, 0
        %v1264 = vmul.f32 %v1261, %v1263
        %v1265 = vmul.f32 %v1231, %v1263
        %v1266 = vmul.f32 %v1236, %v1263
        %v1270 = vrot.slane %v1264, 2
        %v1271 = vrot.slane %v1265, 2
        %v1272 = vsel %vm462, %v1270, %v1271
        %v1273 = vrot.slane %v1266, 2
        %v1274 = vsel %vm462, %v1271, %v1273
        %v1277 = vadd.f32 %v1252, %v1272
        %v1278 = vadd.f32 %v1253, %v1274
        %v1279 = vld [vmem:[%s1097] sm:$0xf]
        %v1280 = vld [vmem:[%s1097 + $0x4] sm:$0xf]
        %v1281 = vld [vmem:[%s475] sm:$0x1]
        %v1282 = vunpack.c.l.bf16 %v1279
        %v1283 = vunpack.c.l.bf16 %v1280
        %v1284 = vunpack.c.l.bf16 %v1281
        %1286 = vset.pattern.permute.xlu0 0
        %1287 = vperm.xlu0 %1286, %v1282
        %v1288 = vpop.permute.xlu0 %1287
        %1291 = vset.pattern.permute.xlu0 0
        %1292 = vperm.xlu0 %1291, %v1283
        %v1293 = vpop.permute.xlu0 %1292
        %v1295 = vperm.slane %v1284, 0
        %v1296 = vmul.f32 %v1288, %v1295
        %v1297 = vmul.f32 %v1293, %v1295
        %v1298 = vadd.f32 %v1277, %v1296
        %v1299 = vadd.f32 %v1278, %v1297
        %v1300 = vld [vmem:[%s1097] sm:$0xf]
        %v1301 = vld [vmem:[%s1097 + $0x4] sm:$0xf]
        %v1302 = vld [vmem:[%s1097 + $0x8] sm:$0x1]
        %v1303 = vld [vmem:[%s498] sm:$0x1]
        %v1304 = vunpack.c.l.bf16 %v1300
        %v1305 = vunpack.c.l.bf16 %v1301
        %v1306 = vunpack.c.l.bf16 %v1302
        %v1307 = vunpack.c.l.bf16 %v1303
        %1309 = vset.pattern.permute.xlu0 0
        %1310 = vperm.xlu0 %1309, %v1304
        %v1311 = vpop.permute.xlu0 %1310
        %1314 = vset.pattern.permute.xlu0 0
        %1315 = vperm.xlu0 %1314, %v1305
        %v1316 = vpop.permute.xlu0 %1315
        %1319 = vset.pattern.permute.xlu0 0
        %1320 = vperm.xlu0 %1319, %v1306
        %v1321 = vpop.permute.xlu0 %1320
        %v1323 = vperm.slane %v1307, 0
        %v1324 = vmul.f32 %v1311, %v1323
        %v1325 = vmul.f32 %v1316, %v1323
        %v1326 = vmul.f32 %v1321, %v1323
        %v1330 = vrot.slane %v1324, 1
        %v1331 = vrot.slane %v1325, 1
        %v1332 = vsel %vm435, %v1330, %v1331
        %v1333 = vrot.slane %v1326, 1
        %v1334 = vsel %vm435, %v1331, %v1333
        %v1337 = vadd.f32 %v1298, %v1332
        %v1338 = vadd.f32 %v1299, %v1334
        %v1339 = vld [vmem:[%s1097] sm:$0xe]
        %v1340 = vld [vmem:[%s536] sm:$0x1]
        %v1341 = vunpack.c.l.bf16 %v1339
        %v1342 = vunpack.c.l.bf16 %v1340
        %1344 = vset.pattern.permute.xlu0 0
        %1345 = vperm.xlu0 %1344, %v1341
        %v1346 = vpop.permute.xlu0 %1345
        %v1348 = vperm.slane %v1342, 0
        %v1349 = vmul.f32 %v1346, %v1348
        %v1350 = vmul.f32 %v1316, %v1348
        %v1351 = vmul.f32 %v1321, %v1348
        %v1355 = vrot.slane %v1349, 2
        %v1356 = vrot.slane %v1350, 2
        %v1357 = vsel %vm462, %v1355, %v1356
        %v1358 = vrot.slane %v1351, 2
        %v1359 = vsel %vm462, %v1356, %v1358
        %v1362 = vadd.f32 %v1337, %v1357
        %v1363 = vadd.f32 %v1338, %v1359
        %s1364 = scalar_lea.vmem %s349, 60
        %v1365 = vld [vmem:[%s1364] sm:$0xf]
        %v1366 = vld [vmem:[%s1364 + $0x4] sm:$0xf]
        %v1367 = vld [vmem:[%s564] sm:$0x1]
        %v1368 = vunpack.c.l.bf16 %v1365
        %v1369 = vunpack.c.l.bf16 %v1366
        %v1370 = vunpack.c.l.bf16 %v1367
        %1372 = vset.pattern.permute.xlu0 0
        %1373 = vperm.xlu0 %1372, %v1368
        %v1374 = vpop.permute.xlu0 %1373
        %1377 = vset.pattern.permute.xlu0 0
        %1378 = vperm.xlu0 %1377, %v1369
        %v1379 = vpop.permute.xlu0 %1378
        %v1381 = vperm.slane %v1370, 0
        %v1382 = vmul.f32 %v1374, %v1381
        %v1383 = vmul.f32 %v1379, %v1381
        %v1384 = vadd.f32 %v1362, %v1382
        %v1385 = vadd.f32 %v1363, %v1383
        %v1386 = vld [vmem:[%s1364] sm:$0xf]
        %v1387 = vld [vmem:[%s1364 + $0x4] sm:$0xf]
        %v1388 = vld [vmem:[%s1364 + $0x8] sm:$0x1]
        %v1389 = vld [vmem:[%s587] sm:$0x1]
        %v1390 = vunpack.c.l.bf16 %v1386
        %v1391 = vunpack.c.l.bf16 %v1387
        %v1392 = vunpack.c.l.bf16 %v1388
        %v1393 = vunpack.c.l.bf16 %v1389
        %1395 = vset.pattern.permute.xlu0 0
        %1396 = vperm.xlu0 %1395, %v1390
        %v1397 = vpop.permute.xlu0 %1396
        %1400 = vset.pattern.permute.xlu0 0
        %1401 = vperm.xlu0 %1400, %v1391
        %v1402 = vpop.permute.xlu0 %1401
        %1405 = vset.pattern.permute.xlu0 0
        %1406 = vperm.xlu0 %1405, %v1392
        %v1407 = vpop.permute.xlu0 %1406
        %v1409 = vperm.slane %v1393, 0
        %v1410 = vmul.f32 %v1397, %v1409
        %v1411 = vmul.f32 %v1402, %v1409
        %v1412 = vmul.f32 %v1407, %v1409
        %v1416 = vrot.slane %v1410, 1
        %v1417 = vrot.slane %v1411, 1
        %v1418 = vsel %vm435, %v1416, %v1417
        %v1419 = vrot.slane %v1412, 1
        %v1420 = vsel %vm435, %v1417, %v1419
        %v1423 = vadd.f32 %v1384, %v1418
        %v1424 = vadd.f32 %v1385, %v1420
        %v1425 = vld [vmem:[%s1364] sm:$0xe]
        %v1426 = vld [vmem:[%s625] sm:$0x1]
        %v1427 = vunpack.c.l.bf16 %v1425
        %v1428 = vunpack.c.l.bf16 %v1426
        %1430 = vset.pattern.permute.xlu0 0
        %1431 = vperm.xlu0 %1430, %v1427
        %v1432 = vpop.permute.xlu0 %1431
        %v1434 = vperm.slane %v1428, 0
        %v1435 = vmul.f32 %v1432, %v1434
        %v1436 = vmul.f32 %v1402, %v1434
        %v1437 = vmul.f32 %v1407, %v1434
        %v1441 = vrot.slane %v1435, 2
        %v1442 = vrot.slane %v1436, 2
        %v1443 = vsel %vm462, %v1441, %v1442
        %v1444 = vrot.slane %v1437, 2
        %v1445 = vsel %vm462, %v1442, %v1444
        %v1448 = vadd.f32 %v1423, %v1443
        %v1449 = vadd.f32 %v1424, %v1445
        %v1450 = vld [vmem:[%s4] sm:$0x1]
        %v1452 = vperm.slane %v1450, 0
        %v1454 = vadd.f32 %v1448, %v1452
        %v1455 = vadd.f32 %v1449, %v1452
        %v1456 = vmax.f32 %v1454, 0.0
        %v1457 = vmax.f32 %v1455, 0.0
        %v1458 = vpack.c.bf16 %v1456, %v1456
        %v1459 = vpack.c.bf16 %v1457, %v1457
        %s1460 = scalar_lea.vmem %s334, 24 [#allocation2]
        %1461 = vst [vmem:[%s1460] sm:$0xf] %v1458
        %1462 = vst [vmem:[%s1460 + $0x4] sm:$0xf] %v1459
        %v1463 = vld [vmem:[%s1097] sm:$0xf]
        %v1464 = vld [vmem:[%s1097 + $0x4] sm:$0xf]
        %v1465 = vld [vmem:[%s3] sm:$0x1]
        %v1466 = vunpack.c.l.bf16 %v1463
        %v1467 = vunpack.c.l.bf16 %v1464
        %v1468 = vunpack.c.l.bf16 %v1465
        %1470 = vset.pattern.permute.xlu0 0
        %1471 = vperm.xlu0 %1470, %v1466
        %v1472 = vpop.permute.xlu0 %1471
        %1475 = vset.pattern.permute.xlu0 0
        %1476 = vperm.xlu0 %1475, %v1467
        %v1477 = vpop.permute.xlu0 %1476
        %v1479 = vperm.slane %v1468, 0
        %v1480 = vmul.f32 %v1472, %v1479
        %v1481 = vmul.f32 %v1477, %v1479
        %v1482 = vld [vmem:[%s1097] sm:$0xf]
        %v1483 = vld [vmem:[%s1097 + $0x4] sm:$0xf]
        %v1484 = vld [vmem:[%s1097 + $0x8] sm:$0x1]
        %v1485 = vld [vmem:[%s407] sm:$0x1]
        %v1486 = vunpack.c.l.bf16 %v1482
        %v1487 = vunpack.c.l.bf16 %v1483
        %v1488 = vunpack.c.l.bf16 %v1484
        %v1489 = vunpack.c.l.bf16 %v1485
        %1491 = vset.pattern.permute.xlu0 0
        %1492 = vperm.xlu0 %1491, %v1486
        %v1493 = vpop.permute.xlu0 %1492
        %1496 = vset.pattern.permute.xlu0 0
        %1497 = vperm.xlu0 %1496, %v1487
        %v1498 = vpop.permute.xlu0 %1497
        %1501 = vset.pattern.permute.xlu0 0
        %1502 = vperm.xlu0 %1501, %v1488
        %v1503 = vpop.permute.xlu0 %1502
        %v1505 = vperm.slane %v1489, 0
        %v1506 = vmul.f32 %v1493, %v1505
        %v1507 = vmul.f32 %v1498, %v1505
        %v1508 = vmul.f32 %v1503, %v1505
        %v1512 = vrot.slane %v1506, 1
        %v1513 = vrot.slane %v1507, 1
        %v1514 = vsel %vm435, %v1512, %v1513
        %v1515 = vrot.slane %v1508, 1
        %v1516 = vsel %vm435, %v1513, %v1515
        %v1519 = vadd.f32 %v1480, %v1514
        %v1520 = vadd.f32 %v1481, %v1516
        %v1521 = vld [vmem:[%s1097] sm:$0xe]
        %v1522 = vld [vmem:[%s446] sm:$0x1]
        %v1523 = vunpack.c.l.bf16 %v1521
        %v1524 = vunpack.c.l.bf16 %v1522
        %1526 = vset.pattern.permute.xlu0 0
        %1527 = vperm.xlu0 %1526, %v1523
        %v1528 = vpop.permute.xlu0 %1527
        %v1530 = vperm.slane %v1524, 0
        %v1531 = vmul.f32 %v1528, %v1530
        %v1532 = vmul.f32 %v1498, %v1530
        %v1533 = vmul.f32 %v1503, %v1530
        %v1537 = vrot.slane %v1531, 2
        %v1538 = vrot.slane %v1532, 2
        %v1539 = vsel %vm462, %v1537, %v1538
        %v1540 = vrot.slane %v1533, 2
        %v1541 = vsel %vm462, %v1538, %v1540
        %v1544 = vadd.f32 %v1519, %v1539
        %v1545 = vadd.f32 %v1520, %v1541
        %v1546 = vld [vmem:[%s1364] sm:$0xf]
        %v1547 = vld [vmem:[%s1364 + $0x4] sm:$0xf]
        %v1548 = vld [vmem:[%s475] sm:$0x1]
        %v1549 = vunpack.c.l.bf16 %v1546
        %v1550 = vunpack.c.l.bf16 %v1547
        %v1551 = vunpack.c.l.bf16 %v1548
        %1553 = vset.pattern.permute.xlu0 0
        %1554 = vperm.xlu0 %1553, %v1549
        %v1555 = vpop.permute.xlu0 %1554
        %1558 = vset.pattern.permute.xlu0 0
        %1559 = vperm.xlu0 %1558, %v1550
        %v1560 = vpop.permute.xlu0 %1559
        %v1562 = vperm.slane %v1551, 0
        %v1563 = vmul.f32 %v1555, %v1562
        %v1564 = vmul.f32 %v1560, %v1562
        %v1565 = vadd.f32 %v1544, %v1563
        %v1566 = vadd.f32 %v1545, %v1564
        %v1567 = vld [vmem:[%s1364] sm:$0xf]
        %v1568 = vld [vmem:[%s1364 + $0x4] sm:$0xf]
        %v1569 = vld [vmem:[%s1364 + $0x8] sm:$0x1]
        %v1570 = vld [vmem:[%s498] sm:$0x1]
        %v1571 = vunpack.c.l.bf16 %v1567
        %v1572 = vunpack.c.l.bf16 %v1568
        %v1573 = vunpack.c.l.bf16 %v1569
        %v1574 = vunpack.c.l.bf16 %v1570
        %1576 = vset.pattern.permute.xlu0 0
        %1577 = vperm.xlu0 %1576, %v1571
        %v1578 = vpop.permute.xlu0 %1577
        %1581 = vset.pattern.permute.xlu0 0
        %1582 = vperm.xlu0 %1581, %v1572
        %v1583 = vpop.permute.xlu0 %1582
        %1586 = vset.pattern.permute.xlu0 0
        %1587 = vperm.xlu0 %1586, %v1573
        %v1588 = vpop.permute.xlu0 %1587
        %v1590 = vperm.slane %v1574, 0
        %v1591 = vmul.f32 %v1578, %v1590
        %v1592 = vmul.f32 %v1583, %v1590
        %v1593 = vmul.f32 %v1588, %v1590
        %v1597 = vrot.slane %v1591, 1
        %v1598 = vrot.slane %v1592, 1
        %v1599 = vsel %vm435, %v1597, %v1598
        %v1600 = vrot.slane %v1593, 1
        %v1601 = vsel %vm435, %v1598, %v1600
        %v1604 = vadd.f32 %v1565, %v1599
        %v1605 = vadd.f32 %v1566, %v1601
        %v1606 = vld [vmem:[%s1364] sm:$0xe]
        %v1607 = vld [vmem:[%s536] sm:$0x1]
        %v1608 = vunpack.c.l.bf16 %v1606
        %v1609 = vunpack.c.l.bf16 %v1607
        %1611 = vset.pattern.permute.xlu0 0
        %1612 = vperm.xlu0 %1611, %v1608
        %v1613 = vpop.permute.xlu0 %1612
        %v1615 = vperm.slane %v1609, 0
        %v1616 = vmul.f32 %v1613, %v1615
        %v1617 = vmul.f32 %v1583, %v1615
        %v1618 = vmul.f32 %v1588, %v1615
        %v1622 = vrot.slane %v1616, 2
        %v1623 = vrot.slane %v1617, 2
        %v1624 = vsel %vm462, %v1622, %v1623
        %v1625 = vrot.slane %v1618, 2
        %v1626 = vsel %vm462, %v1623, %v1625
        %v1629 = vadd.f32 %v1604, %v1624
        %v1630 = vadd.f32 %v1605, %v1626
        %s1631 = scalar_lea.vmem %s349, 72
        %v1632 = vld [vmem:[%s1631] sm:$0xf]
        %v1633 = vld [vmem:[%s1631 + $0x4] sm:$0xf]
        %v1634 = vld [vmem:[%s564] sm:$0x1]
        %v1635 = vunpack.c.l.bf16 %v1632
        %v1636 = vunpack.c.l.bf16 %v1633
        %v1637 = vunpack.c.l.bf16 %v1634
        %1639 = vset.pattern.permute.xlu0 0
        %1640 = vperm.xlu0 %1639, %v1635
        %v1641 = vpop.permute.xlu0 %1640
        %1644 = vset.pattern.permute.xlu0 0
        %1645 = vperm.xlu0 %1644, %v1636
        %v1646 = vpop.permute.xlu0 %1645
        %v1648 = vperm.slane %v1637, 0
        %v1649 = vmul.f32 %v1641, %v1648
        %v1650 = vmul.f32 %v1646, %v1648
        %v1651 = vadd.f32 %v1629, %v1649
        %v1652 = vadd.f32 %v1630, %v1650
        %v1653 = vld [vmem:[%s1631] sm:$0xf]
        %v1654 = vld [vmem:[%s1631 + $0x4] sm:$0xf]
        %v1655 = vld [vmem:[%s1631 + $0x8] sm:$0x1]
        %v1656 = vld [vmem:[%s587] sm:$0x1]
        %v1657 = vunpack.c.l.bf16 %v1653
        %v1658 = vunpack.c.l.bf16 %v1654
        %v1659 = vunpack.c.l.bf16 %v1655
        %v1660 = vunpack.c.l.bf16 %v1656
        %1662 = vset.pattern.permute.xlu0 0
        %1663 = vperm.xlu0 %1662, %v1657
        %v1664 = vpop.permute.xlu0 %1663
        %1667 = vset.pattern.permute.xlu0 0
        %1668 = vperm.xlu0 %1667, %v1658
        %v1669 = vpop.permute.xlu0 %1668
        %1672 = vset.pattern.permute.xlu0 0
        %1673 = vperm.xlu0 %1672, %v1659
        %v1674 = vpop.permute.xlu0 %1673
        %v1676 = vperm.slane %v1660, 0
        %v1677 = vmul.f32 %v1664, %v1676
        %v1678 = vmul.f32 %v1669, %v1676
        %v1679 = vmul.f32 %v1674, %v1676
        %v1683 = vrot.slane %v1677, 1
        %v1684 = vrot.slane %v1678, 1
        %v1685 = vsel %vm435, %v1683, %v1684
        %v1686 = vrot.slane %v1679, 1
        %v1687 = vsel %vm435, %v1684, %v1686
        %v1690 = vadd.f32 %v1651, %v1685
        %v1691 = vadd.f32 %v1652, %v1687
        %v1692 = vld [vmem:[%s1631] sm:$0xe]
        %v1693 = vld [vmem:[%s625] sm:$0x1]
        %v1694 = vunpack.c.l.bf16 %v1692
        %v1695 = vunpack.c.l.bf16 %v1693
        %1697 = vset.pattern.permute.xlu0 0
        %1698 = vperm.xlu0 %1697, %v1694
        %v1699 = vpop.permute.xlu0 %1698
        %v1701 = vperm.slane %v1695, 0
        %v1702 = vmul.f32 %v1699, %v1701
        %v1703 = vmul.f32 %v1669, %v1701
        %v1704 = vmul.f32 %v1674, %v1701
        %v1708 = vrot.slane %v1702, 2
        %v1709 = vrot.slane %v1703, 2
        %v1710 = vsel %vm462, %v1708, %v1709
        %v1711 = vrot.slane %v1704, 2
        %v1712 = vsel %vm462, %v1709, %v1711
        %v1715 = vadd.f32 %v1690, %v1710
        %v1716 = vadd.f32 %v1691, %v1712
        %v1717 = vld [vmem:[%s4] sm:$0x1]
        %v1719 = vperm.slane %v1717, 0
        %v1721 = vadd.f32 %v1715, %v1719
        %v1722 = vadd.f32 %v1716, %v1719
        %v1723 = vmax.f32 %v1721, 0.0
        %v1724 = vmax.f32 %v1722, 0.0
        %v1725 = vpack.c.bf16 %v1723, %v1723
        %v1726 = vpack.c.bf16 %v1724, %v1724
        %s1727 = scalar_lea.vmem %s334, 32 [#allocation2]
        %1728 = vst [vmem:[%s1727] sm:$0xf] %v1725
        %1729 = vst [vmem:[%s1727 + $0x4] sm:$0xf] %v1726
        %v1730 = vld [vmem:[%s1364] sm:$0xf]
        %v1731 = vld [vmem:[%s1364 + $0x4] sm:$0xf]
        %v1732 = vld [vmem:[%s3] sm:$0x1]
        %v1733 = vunpack.c.l.bf16 %v1730
        %v1734 = vunpack.c.l.bf16 %v1731
        %v1735 = vunpack.c.l.bf16 %v1732
        %1737 = vset.pattern.permute.xlu0 0
        %1738 = vperm.xlu0 %1737, %v1733
        %v1739 = vpop.permute.xlu0 %1738
        %1742 = vset.pattern.permute.xlu0 0
        %1743 = vperm.xlu0 %1742, %v1734
        %v1744 = vpop.permute.xlu0 %1743
        %v1746 = vperm.slane %v1735, 0
        %v1747 = vmul.f32 %v1739, %v1746
        %v1748 = vmul.f32 %v1744, %v1746
        %v1749 = vld [vmem:[%s1364] sm:$0xf]
        %v1750 = vld [vmem:[%s1364 + $0x4] sm:$0xf]
        %v1751 = vld [vmem:[%s1364 + $0x8] sm:$0x1]
        %v1752 = vld [vmem:[%s407] sm:$0x1]
        %v1753 = vunpack.c.l.bf16 %v1749
        %v1754 = vunpack.c.l.bf16 %v1750
        %v1755 = vunpack.c.l.bf16 %v1751
        %v1756 = vunpack.c.l.bf16 %v1752
        %1758 = vset.pattern.permute.xlu0 0
        %1759 = vperm.xlu0 %1758, %v1753
        %v1760 = vpop.permute.xlu0 %1759
        %1763 = vset.pattern.permute.xlu0 0
        %1764 = vperm.xlu0 %1763, %v1754
        %v1765 = vpop.permute.xlu0 %1764
        %1768 = vset.pattern.permute.xlu0 0
        %1769 = vperm.xlu0 %1768, %v1755
        %v1770 = vpop.permute.xlu0 %1769
        %v1772 = vperm.slane %v1756, 0
        %v1773 = vmul.f32 %v1760, %v1772
        %v1774 = vmul.f32 %v1765, %v1772
        %v1775 = vmul.f32 %v1770, %v1772
        %v1779 = vrot.slane %v1773, 1
        %v1780 = vrot.slane %v1774, 1
        %v1781 = vsel %vm435, %v1779, %v1780
        %v1782 = vrot.slane %v1775, 1
        %v1783 = vsel %vm435, %v1780, %v1782
        %v1786 = vadd.f32 %v1747, %v1781
        %v1787 = vadd.f32 %v1748, %v1783
        %v1788 = vld [vmem:[%s1364] sm:$0xe]
        %v1789 = vld [vmem:[%s446] sm:$0x1]
        %v1790 = vunpack.c.l.bf16 %v1788
        %v1791 = vunpack.c.l.bf16 %v1789
        %1793 = vset.pattern.permute.xlu0 0
        %1794 = vperm.xlu0 %1793, %v1790
        %v1795 = vpop.permute.xlu0 %1794
        %v1797 = vperm.slane %v1791, 0
        %v1798 = vmul.f32 %v1795, %v1797
        %v1799 = vmul.f32 %v1765, %v1797
        %v1800 = vmul.f32 %v1770, %v1797
        %v1804 = vrot.slane %v1798, 2
        %v1805 = vrot.slane %v1799, 2
        %v1806 = vsel %vm462, %v1804, %v1805
        %v1807 = vrot.slane %v1800, 2
        %v1808 = vsel %vm462, %v1805, %v1807
        %v1811 = vadd.f32 %v1786, %v1806
        %v1812 = vadd.f32 %v1787, %v1808
        %v1813 = vld [vmem:[%s1631] sm:$0xf]
        %v1814 = vld [vmem:[%s1631 + $0x4] sm:$0xf]
        %v1815 = vld [vmem:[%s475] sm:$0x1]
        %v1816 = vunpack.c.l.bf16 %v1813
        %v1817 = vunpack.c.l.bf16 %v1814
        %v1818 = vunpack.c.l.bf16 %v1815
        %1820 = vset.pattern.permute.xlu0 0
        %1821 = vperm.xlu0 %1820, %v1816
        %v1822 = vpop.permute.xlu0 %1821
        %1825 = vset.pattern.permute.xlu0 0
        %1826 = vperm.xlu0 %1825, %v1817
        %v1827 = vpop.permute.xlu0 %1826
        %v1829 = vperm.slane %v1818, 0
        %v1830 = vmul.f32 %v1822, %v1829
        %v1831 = vmul.f32 %v1827, %v1829
        %v1832 = vadd.f32 %v1811, %v1830
        %v1833 = vadd.f32 %v1812, %v1831
        %v1834 = vld [vmem:[%s1631] sm:$0xf]
        %v1835 = vld [vmem:[%s1631 + $0x4] sm:$0xf]
        %v1836 = vld [vmem:[%s1631 + $0x8] sm:$0x1]
        %v1837 = vld [vmem:[%s498] sm:$0x1]
        %v1838 = vunpack.c.l.bf16 %v1834
        %v1839 = vunpack.c.l.bf16 %v1835
        %v1840 = vunpack.c.l.bf16 %v1836
        %v1841 = vunpack.c.l.bf16 %v1837
        %1843 = vset.pattern.permute.xlu0 0
        %1844 = vperm.xlu0 %1843, %v1838
        %v1845 = vpop.permute.xlu0 %1844
        %1848 = vset.pattern.permute.xlu0 0
        %1849 = vperm.xlu0 %1848, %v1839
        %v1850 = vpop.permute.xlu0 %1849
        %1853 = vset.pattern.permute.xlu0 0
        %1854 = vperm.xlu0 %1853, %v1840
        %v1855 = vpop.permute.xlu0 %1854
        %v1857 = vperm.slane %v1841, 0
        %v1858 = vmul.f32 %v1845, %v1857
        %v1859 = vmul.f32 %v1850, %v1857
        %v1860 = vmul.f32 %v1855, %v1857
        %v1864 = vrot.slane %v1858, 1
        %v1865 = vrot.slane %v1859, 1
        %v1866 = vsel %vm435, %v1864, %v1865
        %v1867 = vrot.slane %v1860, 1
        %v1868 = vsel %vm435, %v1865, %v1867
        %v1871 = vadd.f32 %v1832, %v1866
        %v1872 = vadd.f32 %v1833, %v1868
        %v1873 = vld [vmem:[%s1631] sm:$0xe]
        %v1874 = vld [vmem:[%s536] sm:$0x1]
        %v1875 = vunpack.c.l.bf16 %v1873
        %v1876 = vunpack.c.l.bf16 %v1874
        %1878 = vset.pattern.permute.xlu0 0
        %1879 = vperm.xlu0 %1878, %v1875
        %v1880 = vpop.permute.xlu0 %1879
        %v1882 = vperm.slane %v1876, 0
        %v1883 = vmul.f32 %v1880, %v1882
        %v1884 = vmul.f32 %v1850, %v1882
        %v1885 = vmul.f32 %v1855, %v1882
        %v1889 = vrot.slane %v1883, 2
        %v1890 = vrot.slane %v1884, 2
        %v1891 = vsel %vm462, %v1889, %v1890
        %v1892 = vrot.slane %v1885, 2
        %v1893 = vsel %vm462, %v1890, %v1892
        %v1896 = vadd.f32 %v1871, %v1891
        %v1897 = vadd.f32 %v1872, %v1893
        %s1898 = scalar_lea.vmem %s349, 84
        %v1899 = vld [vmem:[%s1898] sm:$0xf]
        %v1900 = vld [vmem:[%s1898 + $0x4] sm:$0xf]
        %v1901 = vld [vmem:[%s564] sm:$0x1]
        %v1902 = vunpack.c.l.bf16 %v1899
        %v1903 = vunpack.c.l.bf16 %v1900
        %v1904 = vunpack.c.l.bf16 %v1901
        %1906 = vset.pattern.permute.xlu0 0
        %1907 = vperm.xlu0 %1906, %v1902
        %v1908 = vpop.permute.xlu0 %1907
        %1911 = vset.pattern.permute.xlu0 0
        %1912 = vperm.xlu0 %1911, %v1903
        %v1913 = vpop.permute.xlu0 %1912
        %v1915 = vperm.slane %v1904, 0
        %v1916 = vmul.f32 %v1908, %v1915
        %v1917 = vmul.f32 %v1913, %v1915
        %v1918 = vadd.f32 %v1896, %v1916
        %v1919 = vadd.f32 %v1897, %v1917
        %v1920 = vld [vmem:[%s1898] sm:$0xf]
        %v1921 = vld [vmem:[%s1898 + $0x4] sm:$0xf]
        %v1922 = vld [vmem:[%s1898 + $0x8] sm:$0x1]
        %v1923 = vld [vmem:[%s587] sm:$0x1]
        %v1924 = vunpack.c.l.bf16 %v1920
        %v1925 = vunpack.c.l.bf16 %v1921
        %v1926 = vunpack.c.l.bf16 %v1922
        %v1927 = vunpack.c.l.bf16 %v1923
        %1929 = vset.pattern.permute.xlu0 0
        %1930 = vperm.xlu0 %1929, %v1924
        %v1931 = vpop.permute.xlu0 %1930
        %1934 = vset.pattern.permute.xlu0 0
        %1935 = vperm.xlu0 %1934, %v1925
        %v1936 = vpop.permute.xlu0 %1935
        %1939 = vset.pattern.permute.xlu0 0
        %1940 = vperm.xlu0 %1939, %v1926
        %v1941 = vpop.permute.xlu0 %1940
        %v1943 = vperm.slane %v1927, 0
        %v1944 = vmul.f32 %v1931, %v1943
        %v1945 = vmul.f32 %v1936, %v1943
        %v1946 = vmul.f32 %v1941, %v1943
        %v1950 = vrot.slane %v1944, 1
        %v1951 = vrot.slane %v1945, 1
        %v1952 = vsel %vm435, %v1950, %v1951
        %v1953 = vrot.slane %v1946, 1
        %v1954 = vsel %vm435, %v1951, %v1953
        %v1957 = vadd.f32 %v1918, %v1952
        %v1958 = vadd.f32 %v1919, %v1954
        %v1959 = vld [vmem:[%s1898] sm:$0xe]
        %v1960 = vld [vmem:[%s625] sm:$0x1]
        %v1961 = vunpack.c.l.bf16 %v1959
        %v1962 = vunpack.c.l.bf16 %v1960
        %1964 = vset.pattern.permute.xlu0 0
        %1965 = vperm.xlu0 %1964, %v1961
        %v1966 = vpop.permute.xlu0 %1965
        %v1968 = vperm.slane %v1962, 0
        %v1969 = vmul.f32 %v1966, %v1968
        %v1970 = vmul.f32 %v1936, %v1968
        %v1971 = vmul.f32 %v1941, %v1968
        %v1975 = vrot.slane %v1969, 2
        %v1976 = vrot.slane %v1970, 2
        %v1977 = vsel %vm462, %v1975, %v1976
        %v1978 = vrot.slane %v1971, 2
        %v1979 = vsel %vm462, %v1976, %v1978
        %v1982 = vadd.f32 %v1957, %v1977
        %v1983 = vadd.f32 %v1958, %v1979
        %v1984 = vld [vmem:[%s4] sm:$0x1]
        %v1986 = vperm.slane %v1984, 0
        %v1988 = vadd.f32 %v1982, %v1986
        %v1989 = vadd.f32 %v1983, %v1986
        %v1990 = vmax.f32 %v1988, 0.0
        %v1991 = vmax.f32 %v1989, 0.0
        %v1992 = vpack.c.bf16 %v1990, %v1990
        %v1993 = vpack.c.bf16 %v1991, %v1991
        %s1994 = scalar_lea.vmem %s334, 40 [#allocation2]
        %1995 = vst [vmem:[%s1994] sm:$0xf] %v1992
        %1996 = vst [vmem:[%s1994 + $0x4] sm:$0xf] %v1993
        %v1997 = vld [vmem:[%s1631] sm:$0xf]
        %v1998 = vld [vmem:[%s1631 + $0x4] sm:$0xf]
        %v1999 = vld [vmem:[%s3] sm:$0x1]
        %v2000 = vunpack.c.l.bf16 %v1997
        %v2001 = vunpack.c.l.bf16 %v1998
        %v2002 = vunpack.c.l.bf16 %v1999
        %2004 = vset.pattern.permute.xlu0 0
        %2005 = vperm.xlu0 %2004, %v2000
        %v2006 = vpop.permute.xlu0 %2005
        %2009 = vset.pattern.permute.xlu0 0
        %2010 = vperm.xlu0 %2009, %v2001
        %v2011 = vpop.permute.xlu0 %2010
        %v2013 = vperm.slane %v2002, 0
        %v2014 = vmul.f32 %v2006, %v2013
        %v2015 = vmul.f32 %v2011, %v2013
        %v2016 = vld [vmem:[%s1631] sm:$0xf]
        %v2017 = vld [vmem:[%s1631 + $0x4] sm:$0xf]
        %v2018 = vld [vmem:[%s1631 + $0x8] sm:$0x1]
        %v2019 = vld [vmem:[%s407] sm:$0x1]
        %v2020 = vunpack.c.l.bf16 %v2016
        %v2021 = vunpack.c.l.bf16 %v2017
        %v2022 = vunpack.c.l.bf16 %v2018
        %v2023 = vunpack.c.l.bf16 %v2019
        %2025 = vset.pattern.permute.xlu0 0
        %2026 = vperm.xlu0 %2025, %v2020
        %v2027 = vpop.permute.xlu0 %2026
        %2030 = vset.pattern.permute.xlu0 0
        %2031 = vperm.xlu0 %2030, %v2021
        %v2032 = vpop.permute.xlu0 %2031
        %2035 = vset.pattern.permute.xlu0 0
        %2036 = vperm.xlu0 %2035, %v2022
        %v2037 = vpop.permute.xlu0 %2036
        %v2039 = vperm.slane %v2023, 0
        %v2040 = vmul.f32 %v2027, %v2039
        %v2041 = vmul.f32 %v2032, %v2039
        %v2042 = vmul.f32 %v2037, %v2039
        %v2046 = vrot.slane %v2040, 1
        %v2047 = vrot.slane %v2041, 1
        %v2048 = vsel %vm435, %v2046, %v2047
        %v2049 = vrot.slane %v2042, 1
        %v2050 = vsel %vm435, %v2047, %v2049
        %v2053 = vadd.f32 %v2014, %v2048
        %v2054 = vadd.f32 %v2015, %v2050
        %v2055 = vld [vmem:[%s1631] sm:$0xe]
        %v2056 = vld [vmem:[%s446] sm:$0x1]
        %v2057 = vunpack.c.l.bf16 %v2055
        %v2058 = vunpack.c.l.bf16 %v2056
        %2060 = vset.pattern.permute.xlu0 0
        %2061 = vperm.xlu0 %2060, %v2057
        %v2062 = vpop.permute.xlu0 %2061
        %v2064 = vperm.slane %v2058, 0
        %v2065 = vmul.f32 %v2062, %v2064
        %v2066 = vmul.f32 %v2032, %v2064
        %v2067 = vmul.f32 %v2037, %v2064
        %v2071 = vrot.slane %v2065, 2
        %v2072 = vrot.slane %v2066, 2
        %v2073 = vsel %vm462, %v2071, %v2072
        %v2074 = vrot.slane %v2067, 2
        %v2075 = vsel %vm462, %v2072, %v2074
        %v2078 = vadd.f32 %v2053, %v2073
        %v2079 = vadd.f32 %v2054, %v2075
        %v2080 = vld [vmem:[%s1898] sm:$0xf]
        %v2081 = vld [vmem:[%s1898 + $0x4] sm:$0xf]
        %v2082 = vld [vmem:[%s475] sm:$0x1]
        %v2083 = vunpack.c.l.bf16 %v2080
        %v2084 = vunpack.c.l.bf16 %v2081
        %v2085 = vunpack.c.l.bf16 %v2082
        %2087 = vset.pattern.permute.xlu0 0
        %2088 = vperm.xlu0 %2087, %v2083
        %v2089 = vpop.permute.xlu0 %2088
        %2092 = vset.pattern.permute.xlu0 0
        %2093 = vperm.xlu0 %2092, %v2084
        %v2094 = vpop.permute.xlu0 %2093
        %v2096 = vperm.slane %v2085, 0
        %v2097 = vmul.f32 %v2089, %v2096
        %v2098 = vmul.f32 %v2094, %v2096
        %v2099 = vadd.f32 %v2078, %v2097
        %v2100 = vadd.f32 %v2079, %v2098
        %v2101 = vld [vmem:[%s1898] sm:$0xf]
        %v2102 = vld [vmem:[%s1898 + $0x4] sm:$0xf]
        %v2103 = vld [vmem:[%s1898 + $0x8] sm:$0x1]
        %v2104 = vld [vmem:[%s498] sm:$0x1]
        %v2105 = vunpack.c.l.bf16 %v2101
        %v2106 = vunpack.c.l.bf16 %v2102
        %v2107 = vunpack.c.l.bf16 %v2103
        %v2108 = vunpack.c.l.bf16 %v2104
        %2110 = vset.pattern.permute.xlu0 0
        %2111 = vperm.xlu0 %2110, %v2105
        %v2112 = vpop.permute.xlu0 %2111
        %2115 = vset.pattern.permute.xlu0 0
        %2116 = vperm.xlu0 %2115, %v2106
        %v2117 = vpop.permute.xlu0 %2116
        %2120 = vset.pattern.permute.xlu0 0
        %2121 = vperm.xlu0 %2120, %v2107
        %v2122 = vpop.permute.xlu0 %2121
        %v2124 = vperm.slane %v2108, 0
        %v2125 = vmul.f32 %v2112, %v2124
        %v2126 = vmul.f32 %v2117, %v2124
        %v2127 = vmul.f32 %v2122, %v2124
        %v2131 = vrot.slane %v2125, 1
        %v2132 = vrot.slane %v2126, 1
        %v2133 = vsel %vm435, %v2131, %v2132
        %v2134 = vrot.slane %v2127, 1
        %v2135 = vsel %vm435, %v2132, %v2134
        %v2138 = vadd.f32 %v2099, %v2133
        %v2139 = vadd.f32 %v2100, %v2135
        %v2140 = vld [vmem:[%s1898] sm:$0xe]
        %v2141 = vld [vmem:[%s536] sm:$0x1]
        %v2142 = vunpack.c.l.bf16 %v2140
        %v2143 = vunpack.c.l.bf16 %v2141
        %2145 = vset.pattern.permute.xlu0 0
        %2146 = vperm.xlu0 %2145, %v2142
        %v2147 = vpop.permute.xlu0 %2146
        %v2149 = vperm.slane %v2143, 0
        %v2150 = vmul.f32 %v2147, %v2149
        %v2151 = vmul.f32 %v2117, %v2149
        %v2152 = vmul.f32 %v2122, %v2149
        %v2156 = vrot.slane %v2150, 2
        %v2157 = vrot.slane %v2151, 2
        %v2158 = vsel %vm462, %v2156, %v2157
        %v2159 = vrot.slane %v2152, 2
        %v2160 = vsel %vm462, %v2157, %v2159
        %v2163 = vadd.f32 %v2138, %v2158
        %v2164 = vadd.f32 %v2139, %v2160
        %v2165 = vld [vmem:[%s366] sm:$0xf]
        %v2166 = vld [vmem:[%s366 + $0x4] sm:$0xf]
        %v2167 = vld [vmem:[%s564] sm:$0x1]
        %v2168 = vunpack.c.l.bf16 %v2165
        %v2169 = vunpack.c.l.bf16 %v2166
        %v2170 = vunpack.c.l.bf16 %v2167
        %2172 = vset.pattern.permute.xlu0 0
        %2173 = vperm.xlu0 %2172, %v2168
        %v2174 = vpop.permute.xlu0 %2173
        %2177 = vset.pattern.permute.xlu0 0
        %2178 = vperm.xlu0 %2177, %v2169
        %v2179 = vpop.permute.xlu0 %2178
        %v2181 = vperm.slane %v2170, 0
        %v2182 = vmul.f32 %v2174, %v2181
        %v2183 = vmul.f32 %v2179, %v2181
        %v2184 = vadd.f32 %v2163, %v2182
        %v2185 = vadd.f32 %v2164, %v2183
        %v2186 = vld [vmem:[%s366] sm:$0xf]
        %v2187 = vld [vmem:[%s366 + $0x4] sm:$0xf]
        %v2188 = vld [vmem:[%s366 + $0x8] sm:$0x1]
        %v2189 = vld [vmem:[%s587] sm:$0x1]
        %v2190 = vunpack.c.l.bf16 %v2186
        %v2191 = vunpack.c.l.bf16 %v2187
        %v2192 = vunpack.c.l.bf16 %v2188
        %v2193 = vunpack.c.l.bf16 %v2189
        %2195 = vset.pattern.permute.xlu0 0
        %2196 = vperm.xlu0 %2195, %v2190
        %v2197 = vpop.permute.xlu0 %2196
        %2200 = vset.pattern.permute.xlu0 0
        %2201 = vperm.xlu0 %2200, %v2191
        %v2202 = vpop.permute.xlu0 %2201
        %2205 = vset.pattern.permute.xlu0 0
        %2206 = vperm.xlu0 %2205, %v2192
        %v2207 = vpop.permute.xlu0 %2206
        %v2209 = vperm.slane %v2193, 0
        %v2210 = vmul.f32 %v2197, %v2209
        %v2211 = vmul.f32 %v2202, %v2209
        %v2212 = vmul.f32 %v2207, %v2209
        %v2216 = vrot.slane %v2210, 1
        %v2217 = vrot.slane %v2211, 1
        %v2218 = vsel %vm435, %v2216, %v2217
        %v2219 = vrot.slane %v2212, 1
        %v2220 = vsel %vm435, %v2217, %v2219
        %v2223 = vadd.f32 %v2184, %v2218
        %v2224 = vadd.f32 %v2185, %v2220
        %v2225 = vld [vmem:[%s366] sm:$0xe]
        %v2226 = vld [vmem:[%s625] sm:$0x1]
        %v2227 = vunpack.c.l.bf16 %v2225
        %v2228 = vunpack.c.l.bf16 %v2226
        %2230 = vset.pattern.permute.xlu0 0
        %2231 = vperm.xlu0 %2230, %v2227
        %v2232 = vpop.permute.xlu0 %2231
        %v2234 = vperm.slane %v2228, 0
        %v2235 = vmul.f32 %v2232, %v2234
        %v2236 = vmul.f32 %v2202, %v2234
        %v2237 = vmul.f32 %v2207, %v2234
        %v2241 = vrot.slane %v2235, 2
        %v2242 = vrot.slane %v2236, 2
        %v2243 = vsel %vm462, %v2241, %v2242
        %v2244 = vrot.slane %v2237, 2
        %v2245 = vsel %vm462, %v2242, %v2244
        %v2248 = vadd.f32 %v2223, %v2243
        %v2249 = vadd.f32 %v2224, %v2245
        %v2250 = vld [vmem:[%s4] sm:$0x1]
        %v2252 = vperm.slane %v2250, 0
        %v2254 = vadd.f32 %v2248, %v2252
        %v2255 = vadd.f32 %v2249, %v2252
        %v2256 = vmax.f32 %v2254, 0.0
        %v2257 = vmax.f32 %v2255, 0.0
        %v2258 = vpack.c.bf16 %v2256, %v2256
        %v2259 = vpack.c.bf16 %v2257, %v2257
        %s2260 = scalar_lea.vmem %s334, 48 [#allocation2]
        %2261 = vst [vmem:[%s2260] sm:$0xf] %v2258
        %2262 = vst [vmem:[%s2260 + $0x4] sm:$0xf] %v2259
        %v2263 = vld [vmem:[%s1898] sm:$0xf]
        %v2264 = vld [vmem:[%s1898 + $0x4] sm:$0xf]
        %v2265 = vld [vmem:[%s3] sm:$0x1]
        %v2266 = vunpack.c.l.bf16 %v2263
        %v2267 = vunpack.c.l.bf16 %v2264
        %v2268 = vunpack.c.l.bf16 %v2265
        %2270 = vset.pattern.permute.xlu0 0
        %2271 = vperm.xlu0 %2270, %v2266
        %v2272 = vpop.permute.xlu0 %2271
        %2275 = vset.pattern.permute.xlu0 0
        %2276 = vperm.xlu0 %2275, %v2267
        %v2277 = vpop.permute.xlu0 %2276
        %v2279 = vperm.slane %v2268, 0
        %v2280 = vmul.f32 %v2272, %v2279
        %v2281 = vmul.f32 %v2277, %v2279
        %v2282 = vld [vmem:[%s1898] sm:$0xf]
        %v2283 = vld [vmem:[%s1898 + $0x4] sm:$0xf]
        %v2284 = vld [vmem:[%s1898 + $0x8] sm:$0x1]
        %v2285 = vld [vmem:[%s407] sm:$0x1]
        %v2286 = vunpack.c.l.bf16 %v2282
        %v2287 = vunpack.c.l.bf16 %v2283
        %v2288 = vunpack.c.l.bf16 %v2284
        %v2289 = vunpack.c.l.bf16 %v2285
        %2291 = vset.pattern.permute.xlu0 0
        %2292 = vperm.xlu0 %2291, %v2286
        %v2293 = vpop.permute.xlu0 %2292
        %2296 = vset.pattern.permute.xlu0 0
        %2297 = vperm.xlu0 %2296, %v2287
        %v2298 = vpop.permute.xlu0 %2297
        %2301 = vset.pattern.permute.xlu0 0
        %2302 = vperm.xlu0 %2301, %v2288
        %v2303 = vpop.permute.xlu0 %2302
        %v2305 = vperm.slane %v2289, 0
        %v2306 = vmul.f32 %v2293, %v2305
        %v2307 = vmul.f32 %v2298, %v2305
        %v2308 = vmul.f32 %v2303, %v2305
        %v2312 = vrot.slane %v2306, 1
        %v2313 = vrot.slane %v2307, 1
        %v2314 = vsel %vm435, %v2312, %v2313
        %v2315 = vrot.slane %v2308, 1
        %v2316 = vsel %vm435, %v2313, %v2315
        %v2319 = vadd.f32 %v2280, %v2314
        %v2320 = vadd.f32 %v2281, %v2316
        %v2321 = vld [vmem:[%s1898] sm:$0xe]
        %v2322 = vld [vmem:[%s446] sm:$0x1]
        %v2323 = vunpack.c.l.bf16 %v2321
        %v2324 = vunpack.c.l.bf16 %v2322
        %2326 = vset.pattern.permute.xlu0 0
        %2327 = vperm.xlu0 %2326, %v2323
        %v2328 = vpop.permute.xlu0 %2327
        %v2330 = vperm.slane %v2324, 0
        %v2331 = vmul.f32 %v2328, %v2330
        %v2332 = vmul.f32 %v2298, %v2330
        %v2333 = vmul.f32 %v2303, %v2330
        %v2337 = vrot.slane %v2331, 2
        %v2338 = vrot.slane %v2332, 2
        %v2339 = vsel %vm462, %v2337, %v2338
        %v2340 = vrot.slane %v2333, 2
        %v2341 = vsel %vm462, %v2338, %v2340
        %v2344 = vadd.f32 %v2319, %v2339
        %v2345 = vadd.f32 %v2320, %v2341
        %v2346 = vld [vmem:[%s366] sm:$0xf]
        %v2347 = vld [vmem:[%s366 + $0x4] sm:$0xf]
        %v2348 = vld [vmem:[%s475] sm:$0x1]
        %v2349 = vunpack.c.l.bf16 %v2346
        %v2350 = vunpack.c.l.bf16 %v2347
        %v2351 = vunpack.c.l.bf16 %v2348
        %2353 = vset.pattern.permute.xlu0 0
        %2354 = vperm.xlu0 %2353, %v2349
        %v2355 = vpop.permute.xlu0 %2354
        %2358 = vset.pattern.permute.xlu0 0
        %2359 = vperm.xlu0 %2358, %v2350
        %v2360 = vpop.permute.xlu0 %2359
        %v2362 = vperm.slane %v2351, 0
        %v2363 = vmul.f32 %v2355, %v2362
        %v2364 = vmul.f32 %v2360, %v2362
        %v2365 = vadd.f32 %v2344, %v2363
        %v2366 = vadd.f32 %v2345, %v2364
        %v2367 = vld [vmem:[%s366] sm:$0xf]
        %v2368 = vld [vmem:[%s366 + $0x4] sm:$0xf]
        %v2369 = vld [vmem:[%s366 + $0x8] sm:$0x1]
        %v2370 = vld [vmem:[%s498] sm:$0x1]
        %v2371 = vunpack.c.l.bf16 %v2367
        %v2372 = vunpack.c.l.bf16 %v2368
        %v2373 = vunpack.c.l.bf16 %v2369
        %v2374 = vunpack.c.l.bf16 %v2370
        %2376 = vset.pattern.permute.xlu0 0
        %2377 = vperm.xlu0 %2376, %v2371
        %v2378 = vpop.permute.xlu0 %2377
        %2381 = vset.pattern.permute.xlu0 0
        %2382 = vperm.xlu0 %2381, %v2372
        %v2383 = vpop.permute.xlu0 %2382
        %2386 = vset.pattern.permute.xlu0 0
        %2387 = vperm.xlu0 %2386, %v2373
        %v2388 = vpop.permute.xlu0 %2387
        %v2390 = vperm.slane %v2374, 0
        %v2391 = vmul.f32 %v2378, %v2390
        %v2392 = vmul.f32 %v2383, %v2390
        %v2393 = vmul.f32 %v2388, %v2390
        %v2397 = vrot.slane %v2391, 1
        %v2398 = vrot.slane %v2392, 1
        %v2399 = vsel %vm435, %v2397, %v2398
        %v2400 = vrot.slane %v2393, 1
        %v2401 = vsel %vm435, %v2398, %v2400
        %v2404 = vadd.f32 %v2365, %v2399
        %v2405 = vadd.f32 %v2366, %v2401
        %v2406 = vld [vmem:[%s366] sm:$0xe]
        %v2407 = vld [vmem:[%s536] sm:$0x1]
        %v2408 = vunpack.c.l.bf16 %v2406
        %v2409 = vunpack.c.l.bf16 %v2407
        %2411 = vset.pattern.permute.xlu0 0
        %2412 = vperm.xlu0 %2411, %v2408
        %v2413 = vpop.permute.xlu0 %2412
        %v2415 = vperm.slane %v2409, 0
        %v2416 = vmul.f32 %v2413, %v2415
        %v2417 = vmul.f32 %v2383, %v2415
        %v2418 = vmul.f32 %v2388, %v2415
        %v2422 = vrot.slane %v2416, 2
        %v2423 = vrot.slane %v2417, 2
        %v2424 = vsel %vm462, %v2422, %v2423
        %v2425 = vrot.slane %v2418, 2
        %v2426 = vsel %vm462, %v2423, %v2425
        %v2429 = vadd.f32 %v2404, %v2424
        %v2430 = vadd.f32 %v2405, %v2426
        %v2431 = vld [vmem:[%s380] sm:$0xf]
        %v2432 = vld [vmem:[%s380 + $0x4] sm:$0xf]
        %v2433 = vld [vmem:[%s564] sm:$0x1]
        %v2434 = vunpack.c.l.bf16 %v2431
        %v2435 = vunpack.c.l.bf16 %v2432
        %v2436 = vunpack.c.l.bf16 %v2433
        %2438 = vset.pattern.permute.xlu0 0
        %2439 = vperm.xlu0 %2438, %v2434
        %v2440 = vpop.permute.xlu0 %2439
        %2443 = vset.pattern.permute.xlu0 0
        %2444 = vperm.xlu0 %2443, %v2435
        %v2445 = vpop.permute.xlu0 %2444
        %v2447 = vperm.slane %v2436, 0
        %v2448 = vmul.f32 %v2440, %v2447
        %v2449 = vmul.f32 %v2445, %v2447
        %v2450 = vadd.f32 %v2429, %v2448
        %v2451 = vadd.f32 %v2430, %v2449
        %v2452 = vld [vmem:[%s380] sm:$0xf]
        %v2453 = vld [vmem:[%s380 + $0x4] sm:$0xf]
        %v2454 = vld [vmem:[%s380 + $0x8] sm:$0x1]
        %v2455 = vld [vmem:[%s587] sm:$0x1]
        %v2456 = vunpack.c.l.bf16 %v2452
        %v2457 = vunpack.c.l.bf16 %v2453
        %v2458 = vunpack.c.l.bf16 %v2454
        %v2459 = vunpack.c.l.bf16 %v2455
        %2461 = vset.pattern.permute.xlu0 0
        %2462 = vperm.xlu0 %2461, %v2456
        %v2463 = vpop.permute.xlu0 %2462
        %2466 = vset.pattern.permute.xlu0 0
        %2467 = vperm.xlu0 %2466, %v2457
        %v2468 = vpop.permute.xlu0 %2467
        %2471 = vset.pattern.permute.xlu0 0
        %2472 = vperm.xlu0 %2471, %v2458
        %v2473 = vpop.permute.xlu0 %2472
        %v2475 = vperm.slane %v2459, 0
        %v2476 = vmul.f32 %v2463, %v2475
        %v2477 = vmul.f32 %v2468, %v2475
        %v2478 = vmul.f32 %v2473, %v2475
        %v2482 = vrot.slane %v2476, 1
        %v2483 = vrot.slane %v2477, 1
        %v2484 = vsel %vm435, %v2482, %v2483
        %v2485 = vrot.slane %v2478, 1
        %v2486 = vsel %vm435, %v2483, %v2485
        %v2489 = vadd.f32 %v2450, %v2484
        %v2490 = vadd.f32 %v2451, %v2486
        %v2491 = vld [vmem:[%s380] sm:$0xe]
        %v2492 = vld [vmem:[%s625] sm:$0x1]
        %v2493 = vunpack.c.l.bf16 %v2491
        %v2494 = vunpack.c.l.bf16 %v2492
        %2496 = vset.pattern.permute.xlu0 0
        %2497 = vperm.xlu0 %2496, %v2493
        %v2498 = vpop.permute.xlu0 %2497
        %v2500 = vperm.slane %v2494, 0
        %v2501 = vmul.f32 %v2498, %v2500
        %v2502 = vmul.f32 %v2468, %v2500
        %v2503 = vmul.f32 %v2473, %v2500
        %v2507 = vrot.slane %v2501, 2
        %v2508 = vrot.slane %v2502, 2
        %v2509 = vsel %vm462, %v2507, %v2508
        %v2510 = vrot.slane %v2503, 2
        %v2511 = vsel %vm462, %v2508, %v2510
        %v2514 = vadd.f32 %v2489, %v2509
        %v2515 = vadd.f32 %v2490, %v2511
        %v2516 = vld [vmem:[%s4] sm:$0x1]
        %v2518 = vperm.slane %v2516, 0
        %v2520 = vadd.f32 %v2514, %v2518
        %v2521 = vadd.f32 %v2515, %v2518
        %v2522 = vmax.f32 %v2520, 0.0
        %v2523 = vmax.f32 %v2521, 0.0
        %v2524 = vpack.c.bf16 %v2522, %v2522
        %v2525 = vpack.c.bf16 %v2523, %v2523
        %s2526 = scalar_lea.vmem %s334, 56 [#allocation2]
        %2527 = vst [vmem:[%s2526] sm:$0xf] %v2524
        %2528 = vst [vmem:[%s2526 + $0x4] sm:$0xf] %v2525
        %s2529 = sand.u32 %s177, 1
        %s2530 = scalar_lea.sflag [#allocation3], %s2529
        %s2531 = sand.u32 %s177, 1
        %s2532 = smul.addr %s2531, 64
        %s2533 = scalar_lea.vmem [#allocation2], %s2532
        // Predicated region
        $region41: #{tpu_custom_call.1} parent=39 // pred_check
          %p2534 = pneg %p187
        $region42: #{tpu_custom_call.1} parent=39 // pred_check_branch
          %2536 = sbr.rel (%p2534) target = $region44
        $region43: #{tpu_custom_call.1} parent=39 // pred_region
          %s2537 = smul.u32 8, %s24
          %2539 = vsyncadd %s2530, 0
          %s2540 = smul.addr %s2537, 2
          %s2541 = smul.addr %s23, 32
          %s2542 = sadd.s32 %s2540, %s2541
          %s2543 = smul.addr %s2542, 4
          %s2544 = scalar_lea.hbm %s5, %s2543
          %s2545 = sshll.u32 %s2533, 4
          %s2546 = int_to_ptr.vmem [resolvable:$true] %s2545
          %s2547 = sshll.u32 %s2544, 4
          %s2548 = int_to_ptr.hbm [resolvable:$true] %s2547
          %2553 = dma.vmem_to_hbm [thread:$0]  %s2546, 1024, %s2548, %s2530, 64, 64, 4
        $region44: #{tpu_custom_call.1} parent=39 // pred_fallthru
          _
      $region40: #{tpu_custom_call.1} parent=5 // pred_fallthru
        _
      %p2554 = scmp.le.s32.totalorder 2, %s14
      // Predicated region
      $region45: #{tpu_custom_call.1} parent=5 // pred_check
        %p2555 = pneg %p2554
      $region46: #{tpu_custom_call.1} parent=5 // pred_check_branch
        %2557 = sbr.rel (%p2555) target = $region48
      $region47: #{tpu_custom_call.1} parent=5 // pred_region
        %s2558 = ssub.s32 %s14, 2
        // Predicated region
        $region49: #{tpu_custom_call.1} parent=47 // pred_check
          %p2559 = pneg %p193
        $region50: #{tpu_custom_call.1} parent=47 // pred_check_branch
          %2561 = sbr.rel (%p2559) target = $region52
        $region51: #{tpu_custom_call.1} parent=47 // pred_region
          %s2562 = sand.u32 %s178, 1
          %s2563 = scalar_lea.sflag [#allocation3], %s2562
          %s2564 = sand.u32 %s178, 1
          %s2565 = smul.addr %s2564, 64
          %s2566 = scalar_lea.vmem [#allocation2], %s2565
          %2568 = dma.done %s2563, 1024
        $region52: #{tpu_custom_call.1} parent=47 // pred_fallthru
          _
      $region48: #{tpu_custom_call.1} parent=5 // pred_fallthru
        _
    $region6: #{tpu_custom_call.1} parent=1 // loop_footer
      %s18 = sadd.s32 1, %s14
    $region7: #{tpu_custom_call.1} parent=1 // loop_footer_branch
      %13 = sbr.rel target = $region3
    $region8: #{tpu_custom_call.1} parent=1 // loop_exit
      _
    %2569 = vsyncpa [#allocation3], 1
    %s2570 = scalar_lea.sflag [#allocation3], 1
    %2571 = vsyncpa %s2570, 1

</llo_original>
